<compile_context>
chip_gen: v5e
topology: v5e:2x2
jax: 0.10.0
libtpu: 0.0.40
codegen_flags: <defaults>
</compile_context>

<pallas_src>
import functools

import jax
import jax.numpy as jnp
import numpy as np
from jax.experimental import pallas as pl
from jax.experimental.pallas import tpu as pltpu

EPS = 1e-5


def _round_up(n, m):
    return ((n + m - 1) // m) * m


def resnet_adailn_kernel(xp_ref, gamma_ref, beta_ref, rho_ref,
                         w1_ref, b1_ref, w2_ref, b2_ref,
                         out_ref, *, H, W, C, Hp, Wp):
    P = Hp * Wp          # flattened padded grid size
    N = H * W            # number of valid (output) spatial positions

    x = xp_ref[0].astype(jnp.float32)          # (P, C) flattened padded input
    gamma = gamma_ref[0].astype(jnp.float32)   # (1, C)
    beta = beta_ref[0].astype(jnp.float32)     # (1, C)
    rho = rho_ref[0].astype(jnp.float32)       # (1, C)
    one_m_rho = 1.0 - rho

    # Padded-grid coordinates + masks generated in-kernel (no index DMAs).
    # Float floor-divide with a +0.5 margin: exact for these small integers
    # and avoids relying on vector int-division lowering.
    pidx = jax.lax.broadcasted_iota(jnp.int32, (P, 1), 0)
    hp = jnp.floor((pidx.astype(jnp.float32) + 0.5) / np.float32(Wp)).astype(jnp.int32)
    wp = pidx - hp * Wp
    maskf = jnp.logical_and(hp < H, wp < W).astype(jnp.float32)   # (P, 1) valid rows

    def shifted(v, s):
        # shifted(v, s)[p] == v[(p + s) % P]; static shift -> XLU rotate.
        r = (-s) % P
        if r == 0:
            return v
        return pltpu.roll(v, r, axis=0)

    def conv3x3(v, w_ref):
        # 9 accumulated (P,C)x(C,C) matmuls over shifted views (no im2col
        # scratch).  Shifts are f32 XLU rotates; operands are cast to bf16
        # just before the MXU dot; accumulation is f32.  Also returns the f32
        # centre shift (dh=dw=1) so conv1 can reuse it as the residual.
        acc = None
        center = None
        for dh in range(3):
            for dw in range(3):
                xs = shifted(v, dh * Wp + dw)
                if dh == 1 and dw == 1:
                    center = xs
                part = jnp.dot(xs.astype(jnp.bfloat16), w_ref[3 * dh + dw],
                               preferred_element_type=jnp.float32)
                acc = part if acc is None else acc + part
        return acc, center

    def fused_adailn_affine(z, bias):
        # Per-channel (a, c) such that adaILN(z + bias) == z * a + c, with the
        # conv bias folded in analytically.  Mean-centred stats (two masked
        # passes over z) avoid E[x^2]-E[x]^2 cancellation.
        mean_z = jnp.sum(z * maskf, axis=0, keepdims=True) * (1.0 / N)   # (1, C)
        d = (z - mean_z) * maskf
        ssd = jnp.sum(d * d, axis=0, keepdims=True)                      # (1, C)
        in_mean = mean_z + bias                                          # (1, C)
        in_var = ssd * (1.0 / (N - 1))                                   # torch.var (unbiased)
        ln_mean = jnp.sum(in_mean, axis=1, keepdims=True) * (1.0 / C)    # (1, 1)
        dm = in_mean - ln_mean
        ln_var = (jnp.sum(ssd, axis=1, keepdims=True)
                  + N * jnp.sum(dm * dm, axis=1, keepdims=True)) * (1.0 / (N * C - 1))
        inv_in = jax.lax.rsqrt(in_var + EPS)                             # EUP rsqrt
        inv_ln = jax.lax.rsqrt(ln_var + EPS)
        a = gamma * (rho * inv_in + one_m_rho * inv_ln)
        c = beta + gamma * (one_m_rho * (bias - ln_mean) * inv_ln
                            - rho * mean_z * inv_in)
        return a, c

    # ---- conv1 -> adaILN -> ReLU (single apply pass) ------------------------
    y, res = conv3x3(x, w1_ref)                  # res = interior of padded input (f32)
    a1, c1 = fused_adailn_affine(y, b1_ref[...].astype(jnp.float32))
    y = jnp.maximum(y * a1 + c1, 0.0)            # (P, C) f32; valid rows correct

    # ---- reflection pad (width 1) of y via rolls + masked selects -----------
    is_top = hp == 0
    is_bot = hp == (H + 1)
    is_left = wp == 0
    is_right = wp == (W + 1)
    ypad = shifted(y, -(Wp + 1))                               # interior
    ypad = jnp.where(is_top, shifted(y, Wp - 1), ypad)         # row 0    <- row 1
    ypad = jnp.where(is_bot, shifted(y, -(3 * Wp + 1)), ypad)  # row H+1  <- row H-2
    ypad = jnp.where(is_left, shifted(ypad, 2), ypad)          # col 0    <- col 2
    ypad = jnp.where(is_right, shifted(ypad, -2), ypad)        # col W+1  <- col W-1

    # ---- conv2 -> adaILN -> +residual -> single lane-dense store ------------
    z, _ = conv3x3(ypad, w2_ref)
    a2, c2 = fused_adailn_affine(z, b2_ref[...].astype(jnp.float32))
    out_ref[0] = (z * a2 + c2 + res).astype(out_ref.dtype)


def resnet_adailn_block(x_nchw, gamma, beta, rho, w1, b1, w2, b2):
    """x_nchw: (B,C,H,W); gamma/beta: (B,C); rho/b1/b2: (C,); w1/w2: (3,3,C,C) HWIO."""
    x = jnp.transpose(x_nchw, (0, 2, 3, 1))                   # NHWC
    B, H, W, C = x.shape
    Hp = H + 2
    Wp = _round_up(W + 2, 8)                                  # sublane-aligned width
    P = Hp * Wp

    # Reflection pad H/W by 1, zero-extend W to Wp, flatten spatial axes.
    xp = jnp.pad(x, ((0, 0), (1, 1), (1, 1), (0, 0)), mode='reflect')
    if Wp > W + 2:
        xp = jnp.pad(xp, ((0, 0), (0, 0), (0, Wp - (W + 2)), (0, 0)))
    xp_flat = xp.reshape(B, P, C)

    gamma3 = gamma.reshape(B, 1, C).astype(jnp.float32)
    beta3 = beta.reshape(B, 1, C).astype(jnp.float32)
    rho3 = rho.reshape(1, 1, C).astype(jnp.float32)
    w1r = w1.reshape(9, C, C).astype(jnp.bfloat16)            # (kh*kw, cin, cout), bf16
    w2r = w2.reshape(9, C, C).astype(jnp.bfloat16)
    b1r = b1.reshape(1, C).astype(jnp.float32)
    b2r = b2.reshape(1, C).astype(jnp.float32)

    kernel = functools.partial(resnet_adailn_kernel, H=H, W=W, C=C, Hp=Hp, Wp=Wp)

    # NOTE: weight/rho/bias blocks use constant index_maps so they are fetched
    # once; single-buffering them (pipeline_mode=pl.Buffered(1)) is a further
    # VMEM saving at large C but negligible at this size.
    out_pad = pl.pallas_call(
        kernel,
        out_shape=jax.ShapeDtypeStruct((B, P, C), x.dtype),
        grid_spec=pltpu.PrefetchScalarGridSpec(
            num_scalar_prefetch=0,
            grid=(B,),
            in_specs=[
                pl.BlockSpec((1, P, C), lambda b: (b, 0, 0)),     # padded input
                pl.BlockSpec((1, 1, C), lambda b: (b, 0, 0)),     # gamma (per sample)
                pl.BlockSpec((1, 1, C), lambda b: (b, 0, 0)),     # beta  (per sample)
                pl.BlockSpec((1, 1, C), lambda b: (0, 0, 0)),     # rho   (shared)
                pl.BlockSpec((9, C, C), lambda b: (0, 0, 0)),     # w1 (bf16)
                pl.BlockSpec((1, C), lambda b: (0, 0)),           # b1
                pl.BlockSpec((9, C, C), lambda b: (0, 0, 0)),     # w2 (bf16)
                pl.BlockSpec((1, C), lambda b: (0, 0)),           # b2
            ],
            out_specs=pl.BlockSpec((1, P, C), lambda b: (b, 0, 0)),
        ),
        compiler_params=pltpu.CompilerParams(
            dimension_semantics=("parallel",)),
    )(xp_flat, gamma3, beta3, rho3, w1r, b1r, w2r, b2r)

    out = out_pad.reshape(B, Hp, Wp, C)[:, :H, :W, :]         # drop pad/alignment rows
    return jnp.transpose(out, (0, 3, 1, 2))                   # back to NCHW


def ref_forward(x_nchw, gamma, beta, rho, w1, b1, w2, b2, eps=EPS):
    """Pure-JAX f32 reference mirroring the PyTorch module semantics."""
    x = jnp.transpose(x_nchw, (0, 2, 3, 1))

    def conv(t, w, bias):
        tp = jnp.pad(t, ((0, 0), (1, 1), (1, 1), (0, 0)), mode='reflect')
        o = jax.lax.conv_general_dilated(tp, w, (1, 1), 'VALID',
                                         dimension_numbers=('NHWC', 'HWIO', 'NHWC'))
        return o + bias.reshape(1, 1, 1, -1)

    def ada(t):
        B, H, W, C = t.shape
        in_mean = jnp.mean(t, axis=(1, 2), keepdims=True)
        in_var = jnp.var(t, axis=(1, 2), keepdims=True, ddof=1)      # torch.var default
        out_in = (t - in_mean) / jnp.sqrt(in_var + eps)
        ln_mean = jnp.mean(t, axis=(1, 2, 3), keepdims=True)
        ln_var = jnp.var(t, axis=(1, 2, 3), keepdims=True, ddof=1)
        out_ln = (t - ln_mean) / jnp.sqrt(ln_var + eps)
        r = rho.reshape(1, 1, 1, -1)
        o = r * out_in + (1 - r) * out_ln
        return o * gamma.reshape(B, 1, 1, C) + beta.reshape(B, 1, 1, C)

    y = jnp.maximum(ada(conv(x, w1, b1)), 0.0)
    z = ada(conv(y, w2, b2))
    return jnp.transpose(z + x, (0, 3, 1, 2))


if __name__ == "__main__":
    B, C, H, W = 2, 128, 8, 8            # dim=128 (lane-aligned), spatial 8x8, batch 2
    key = jax.random.PRNGKey(0)
    ks = jax.random.split(key, 7)
    x = jax.random.normal(ks[0], (B, C, H, W), jnp.float32)        # NCHW, like PyTorch
    gamma = 1.0 + 0.5 * jax.random.normal(ks[1], (B, C), jnp.float32)
    beta = 0.1 * jax.random.normal(ks[2], (B, C), jnp.float32)
    w1 = 0.05 * jax.random.normal(ks[3], (3, 3, C, C), jnp.float32)   # HWIO
    b1 = 0.05 * jax.random.normal(ks[4], (C,), jnp.float32)           # use_bias=True
    w2 = 0.05 * jax.random.normal(ks[5], (3, 3, C, C), jnp.float32)
    b2 = 0.05 * jax.random.normal(ks[6], (C,), jnp.float32)
    rho = jnp.full((C,), 0.9, jnp.float32)                            # adaILN rho init

    out = resnet_adailn_block(x, gamma, beta, rho, w1, b1, w2, b2)
    out = jax.block_until_ready(out)

    ref = ref_forward(x, gamma, beta, rho, w1, b1, w2, b2)
    # bf16 MXU operands (per perf review) give ~0.3-0.4% relative error in the
    # conv outputs, amplified through the adaILN normalization; tolerance is
    # relaxed accordingly (structural/layout bugs would show up as O(1) errors).
    np.testing.assert_allclose(np.asarray(out), np.asarray(ref), rtol=5e-2, atol=5e-2)
    print("KERNEL_OK")
</pallas_src>

<mosaic_0001>
module attributes {stable_mosaic.version = 11 : i64} {
  func.func @resnet_adailn_kernel(%arg0: i32, %arg1: memref<1x160x128xf32, #tpu.memory_space<vmem>>, %arg2: memref<1x1x128xf32, #tpu.memory_space<vmem>>, %arg3: memref<1x1x128xf32, #tpu.memory_space<vmem>>, %arg4: memref<1x1x128xf32, #tpu.memory_space<vmem>>, %arg5: memref<9x128x128xbf16, #tpu.memory_space<vmem>>, %arg6: memref<1x128xf32, #tpu.memory_space<vmem>>, %arg7: memref<9x128x128xbf16, #tpu.memory_space<vmem>>, %arg8: memref<1x128xf32, #tpu.memory_space<vmem>>, %arg9: memref<1x160x128xf32, #tpu.memory_space<vmem>>) attributes {dimension_semantics = [#tpu.dimension_semantics<parallel>], iteration_bounds = array<i64: 2>, scalar_prefetch = 0 : i64, scratch_operands = 0 : i64, tpu.core_type = #tpu.core_type<tc>, window_params = [{transform_indices = @transform_0, window_bounds = array<i64: 1, 160, 128>}, {transform_indices = @transform_1, window_bounds = array<i64: 1, 1, 128>}, {transform_indices = @transform_2, window_bounds = array<i64: 1, 1, 128>}, {pipeline_mode = #tpu.pipeline_mode<synchronous>, transform_indices = @transform_3, window_bounds = array<i64: 1, 1, 128>}, {pipeline_mode = #tpu.pipeline_mode<synchronous>, transform_indices = @transform_4, window_bounds = array<i64: 9, 128, 128>}, {pipeline_mode = #tpu.pipeline_mode<synchronous>, transform_indices = @transform_5, window_bounds = array<i64: 1, 128>}, {pipeline_mode = #tpu.pipeline_mode<synchronous>, transform_indices = @transform_6, window_bounds = array<i64: 9, 128, 128>}, {pipeline_mode = #tpu.pipeline_mode<synchronous>, transform_indices = @transform_7, window_bounds = array<i64: 1, 128>}, {transform_indices = @transform_8, window_bounds = array<i64: 1, 160, 128>}]} {
    %c0 = arith.constant 0 : index
    %c0_0 = arith.constant 0 : index
    %c0_1 = arith.constant 0 : index
    %0 = vector.load %arg1[%c0, %c0_0, %c0_1] : memref<1x160x128xf32, #tpu.memory_space<vmem>>, vector<1x160x128xf32>
    %1 = vector.shape_cast %0 : vector<1x160x128xf32> to vector<160x128xf32>
    %c0_2 = arith.constant 0 : index
    %c0_3 = arith.constant 0 : index
    %c0_4 = arith.constant 0 : index
    %2 = vector.load %arg2[%c0_2, %c0_3, %c0_4] : memref<1x1x128xf32, #tpu.memory_space<vmem>>, vector<1x1x128xf32>
    %3 = vector.shape_cast %2 : vector<1x1x128xf32> to vector<1x128xf32>
    %c0_5 = arith.constant 0 : index
    %c0_6 = arith.constant 0 : index
    %c0_7 = arith.constant 0 : index
    %4 = vector.load %arg3[%c0_5, %c0_6, %c0_7] : memref<1x1x128xf32, #tpu.memory_space<vmem>>, vector<1x1x128xf32>
    %5 = vector.shape_cast %4 : vector<1x1x128xf32> to vector<1x128xf32>
    %c0_8 = arith.constant 0 : index
    %c0_9 = arith.constant 0 : index
    %c0_10 = arith.constant 0 : index
    %6 = vector.load %arg4[%c0_8, %c0_9, %c0_10] : memref<1x1x128xf32, #tpu.memory_space<vmem>>, vector<1x1x128xf32>
    %7 = vector.shape_cast %6 : vector<1x1x128xf32> to vector<1x128xf32>
    %cst = arith.constant 1.000000e+00 : f32
    %8 = vector.broadcast %cst : f32 to vector<1x128xf32>
    %9 = arith.subf %8, %7 : vector<1x128xf32>
    %10 = tpu.iota {dimensions = array<i32: 0>} : vector<160x1xi32>
    %11 = arith.sitofp %10 : vector<160x1xi32> to vector<160x1xf32>
    %cst_11 = arith.constant 5.000000e-01 : f32
    %12 = vector.broadcast %cst_11 : f32 to vector<160x1xf32>
    %13 = arith.addf %11, %12 : vector<160x1xf32>
    %cst_12 = arith.constant 1.600000e+01 : f32
    %14 = vector.broadcast %cst_12 : f32 to vector<160x1xf32>
    %15 = arith.divf %13, %14 : vector<160x1xf32>
    %16 = math.floor %15 : vector<160x1xf32>
    %17 = arith.fptosi %16 : vector<160x1xf32> to vector<160x1xi32>
    %c16_i32 = arith.constant 16 : i32
    %18 = vector.broadcast %c16_i32 : i32 to vector<160x1xi32>
    %19 = arith.muli %17, %18 : vector<160x1xi32>
    %20 = arith.subi %10, %19 : vector<160x1xi32>
    %c8_i32 = arith.constant 8 : i32
    %21 = vector.broadcast %c8_i32 : i32 to vector<160x1xi32>
    %22 = arith.cmpi slt, %17, %21 : vector<160x1xi32>
    %c8_i32_13 = arith.constant 8 : i32
    %23 = vector.broadcast %c8_i32_13 : i32 to vector<160x1xi32>
    %24 = arith.cmpi slt, %20, %23 : vector<160x1xi32>
    %25 = arith.andi %22, %24 : vector<160x1xi1>
    %26 = arith.extui %25 : vector<160x1xi1> to vector<160x1xi32>
    %27 = arith.sitofp %26 : vector<160x1xi32> to vector<160x1xf32>
    %28 = arith.truncf %1 : vector<160x128xf32> to vector<160x128xbf16>
    %c0_14 = arith.constant 0 : index
    %c0_15 = arith.constant 0 : index
    %c0_16 = arith.constant 0 : index
    %29 = vector.load %arg5[%c0_14, %c0_15, %c0_16] : memref<9x128x128xbf16, #tpu.memory_space<vmem>>, vector<1x128x128xbf16>
    %30 = vector.shape_cast %29 : vector<1x128x128xbf16> to vector<128x128xbf16>
    %cst_17 = arith.constant dense<0.000000e+00> : vector<160x128xf32>
    %31 = tpu.matmul %28, %30, %cst_17 {dimension_numbers = #tpu.dot_dimension_numbers<[1], [0], [0], [1], [0, 0, 1, 1], [], []>} : vector<160x128xbf16>, vector<128x128xbf16>, vector<160x128xf32> -> vector<160x128xf32>
    %c159_i32 = arith.constant 159 : i32
    %32 = tpu.dynamic_rotate %1 by %c159_i32 dim 0 : vector<160x128xf32>, i32 -> vector<160x128xf32>
    %33 = arith.truncf %32 : vector<160x128xf32> to vector<160x128xbf16>
    %c1 = arith.constant 1 : index
    %c0_18 = arith.constant 0 : index
    %c0_19 = arith.constant 0 : index
    %34 = vector.load %arg5[%c1, %c0_18, %c0_19] : memref<9x128x128xbf16, #tpu.memory_space<vmem>>, vector<1x128x128xbf16>
    %35 = vector.shape_cast %34 : vector<1x128x128xbf16> to vector<128x128xbf16>
    %cst_20 = arith.constant dense<0.000000e+00> : vector<160x128xf32>
    %36 = tpu.matmul %33, %35, %cst_20 {dimension_numbers = #tpu.dot_dimension_numbers<[1], [0], [0], [1], [0, 0, 1, 1], [], []>} : vector<160x128xbf16>, vector<128x128xbf16>, vector<160x128xf32> -> vector<160x128xf32>
    %37 = arith.addf %31, %36 : vector<160x128xf32>
    %c158_i32 = arith.constant 158 : i32
    %38 = tpu.dynamic_rotate %1 by %c158_i32 dim 0 : vector<160x128xf32>, i32 -> vector<160x128xf32>
    %39 = arith.truncf %38 : vector<160x128xf32> to vector<160x128xbf16>
    %c2 = arith.constant 2 : index
    %c0_21 = arith.constant 0 : index
    %c0_22 = arith.constant 0 : index
    %40 = vector.load %arg5[%c2, %c0_21, %c0_22] : memref<9x128x128xbf16, #tpu.memory_space<vmem>>, vector<1x128x128xbf16>
    %41 = vector.shape_cast %40 : vector<1x128x128xbf16> to vector<128x128xbf16>
    %cst_23 = arith.constant dense<0.000000e+00> : vector<160x128xf32>
    %42 = tpu.matmul %39, %41, %cst_23 {dimension_numbers = #tpu.dot_dimension_numbers<[1], [0], [0], [1], [0, 0, 1, 1], [], []>} : vector<160x128xbf16>, vector<128x128xbf16>, vector<160x128xf32> -> vector<160x128xf32>
    %43 = arith.addf %37, %42 : vector<160x128xf32>
    %c144_i32 = arith.constant 144 : i32
    %44 = tpu.dynamic_rotate %1 by %c144_i32 dim 0 : vector<160x128xf32>, i32 -> vector<160x128xf32>
    %45 = arith.truncf %44 : vector<160x128xf32> to vector<160x128xbf16>
    %c3 = arith.constant 3 : index
    %c0_24 = arith.constant 0 : index
    %c0_25 = arith.constant 0 : index
    %46 = vector.load %arg5[%c3, %c0_24, %c0_25] : memref<9x128x128xbf16, #tpu.memory_space<vmem>>, vector<1x128x128xbf16>
    %47 = vector.shape_cast %46 : vector<1x128x128xbf16> to vector<128x128xbf16>
    %cst_26 = arith.constant dense<0.000000e+00> : vector<160x128xf32>
    %48 = tpu.matmul %45, %47, %cst_26 {dimension_numbers = #tpu.dot_dimension_numbers<[1], [0], [0], [1], [0, 0, 1, 1], [], []>} : vector<160x128xbf16>, vector<128x128xbf16>, vector<160x128xf32> -> vector<160x128xf32>
    %49 = arith.addf %43, %48 : vector<160x128xf32>
    %c143_i32 = arith.constant 143 : i32
    %50 = tpu.dynamic_rotate %1 by %c143_i32 dim 0 : vector<160x128xf32>, i32 -> vector<160x128xf32>
    %51 = arith.truncf %50 : vector<160x128xf32> to vector<160x128xbf16>
    %c4 = arith.constant 4 : index
    %c0_27 = arith.constant 0 : index
    %c0_28 = arith.constant 0 : index
    %52 = vector.load %arg5[%c4, %c0_27, %c0_28] : memref<9x128x128xbf16, #tpu.memory_space<vmem>>, vector<1x128x128xbf16>
    %53 = vector.shape_cast %52 : vector<1x128x128xbf16> to vector<128x128xbf16>
    %cst_29 = arith.constant dense<0.000000e+00> : vector<160x128xf32>
    %54 = tpu.matmul %51, %53, %cst_29 {dimension_numbers = #tpu.dot_dimension_numbers<[1], [0], [0], [1], [0, 0, 1, 1], [], []>} : vector<160x128xbf16>, vector<128x128xbf16>, vector<160x128xf32> -> vector<160x128xf32>
    %55 = arith.addf %49, %54 : vector<160x128xf32>
    %c142_i32 = arith.constant 142 : i32
    %56 = tpu.dynamic_rotate %1 by %c142_i32 dim 0 : vector<160x128xf32>, i32 -> vector<160x128xf32>
    %57 = arith.truncf %56 : vector<160x128xf32> to vector<160x128xbf16>
    %c5 = arith.constant 5 : index
    %c0_30 = arith.constant 0 : index
    %c0_31 = arith.constant 0 : index
    %58 = vector.load %arg5[%c5, %c0_30, %c0_31] : memref<9x128x128xbf16, #tpu.memory_space<vmem>>, vector<1x128x128xbf16>
    %59 = vector.shape_cast %58 : vector<1x128x128xbf16> to vector<128x128xbf16>
    %cst_32 = arith.constant dense<0.000000e+00> : vector<160x128xf32>
    %60 = tpu.matmul %57, %59, %cst_32 {dimension_numbers = #tpu.dot_dimension_numbers<[1], [0], [0], [1], [0, 0, 1, 1], [], []>} : vector<160x128xbf16>, vector<128x128xbf16>, vector<160x128xf32> -> vector<160x128xf32>
    %61 = arith.addf %55, %60 : vector<160x128xf32>
    %c128_i32 = arith.constant 128 : i32
    %62 = tpu.dynamic_rotate %1 by %c128_i32 dim 0 : vector<160x128xf32>, i32 -> vector<160x128xf32>
    %63 = arith.truncf %62 : vector<160x128xf32> to vector<160x128xbf16>
    %c6 = arith.constant 6 : index
    %c0_33 = arith.constant 0 : index
    %c0_34 = arith.constant 0 : index
    %64 = vector.load %arg5[%c6, %c0_33, %c0_34] : memref<9x128x128xbf16, #tpu.memory_space<vmem>>, vector<1x128x128xbf16>
    %65 = vector.shape_cast %64 : vector<1x128x128xbf16> to vector<128x128xbf16>
    %cst_35 = arith.constant dense<0.000000e+00> : vector<160x128xf32>
    %66 = tpu.matmul %63, %65, %cst_35 {dimension_numbers = #tpu.dot_dimension_numbers<[1], [0], [0], [1], [0, 0, 1, 1], [], []>} : vector<160x128xbf16>, vector<128x128xbf16>, vector<160x128xf32> -> vector<160x128xf32>
    %67 = arith.addf %61, %66 : vector<160x128xf32>
    %c127_i32 = arith.constant 127 : i32
    %68 = tpu.dynamic_rotate %1 by %c127_i32 dim 0 : vector<160x128xf32>, i32 -> vector<160x128xf32>
    %69 = arith.truncf %68 : vector<160x128xf32> to vector<160x128xbf16>
    %c7 = arith.constant 7 : index
    %c0_36 = arith.constant 0 : index
    %c0_37 = arith.constant 0 : index
    %70 = vector.load %arg5[%c7, %c0_36, %c0_37] : memref<9x128x128xbf16, #tpu.memory_space<vmem>>, vector<1x128x128xbf16>
    %71 = vector.shape_cast %70 : vector<1x128x128xbf16> to vector<128x128xbf16>
    %cst_38 = arith.constant dense<0.000000e+00> : vector<160x128xf32>
    %72 = tpu.matmul %69, %71, %cst_38 {dimension_numbers = #tpu.dot_dimension_numbers<[1], [0], [0], [1], [0, 0, 1, 1], [], []>} : vector<160x128xbf16>, vector<128x128xbf16>, vector<160x128xf32> -> vector<160x128xf32>
    %73 = arith.addf %67, %72 : vector<160x128xf32>
    %c126_i32 = arith.constant 126 : i32
    %74 = tpu.dynamic_rotate %1 by %c126_i32 dim 0 : vector<160x128xf32>, i32 -> vector<160x128xf32>
    %75 = arith.truncf %74 : vector<160x128xf32> to vector<160x128xbf16>
    %c8 = arith.constant 8 : index
    %c0_39 = arith.constant 0 : index
    %c0_40 = arith.constant 0 : index
    %76 = vector.load %arg5[%c8, %c0_39, %c0_40] : memref<9x128x128xbf16, #tpu.memory_space<vmem>>, vector<1x128x128xbf16>
    %77 = vector.shape_cast %76 : vector<1x128x128xbf16> to vector<128x128xbf16>
    %cst_41 = arith.constant dense<0.000000e+00> : vector<160x128xf32>
    %78 = tpu.matmul %75, %77, %cst_41 {dimension_numbers = #tpu.dot_dimension_numbers<[1], [0], [0], [1], [0, 0, 1, 1], [], []>} : vector<160x128xbf16>, vector<128x128xbf16>, vector<160x128xf32> -> vector<160x128xf32>
    %79 = arith.addf %73, %78 : vector<160x128xf32>
    %c0_42 = arith.constant 0 : index
    %c0_43 = arith.constant 0 : index
    %80 = vector.load %arg6[%c0_42, %c0_43] : memref<1x128xf32, #tpu.memory_space<vmem>>, vector<1x128xf32>
    %81 = vector.broadcast %27 : vector<160x1xf32> to vector<160x128xf32>
    %82 = arith.mulf %79, %81 : vector<160x128xf32>
    %cst_44 = arith.constant dense<0.000000e+00> : vector<128xf32>
    %83 = vector.multi_reduction <add>, %82, %cst_44 [0] : vector<160x128xf32> to vector<128xf32>
    %84 = vector.shape_cast %83 : vector<128xf32> to vector<1x128xf32>
    %cst_45 = arith.constant 1.562500e-02 : f32
    %85 = vector.broadcast %cst_45 : f32 to vector<1x128xf32>
    %86 = arith.mulf %84, %85 : vector<1x128xf32>
    %87 = vector.broadcast %86 : vector<1x128xf32> to vector<160x128xf32>
    %88 = arith.subf %79, %87 : vector<160x128xf32>
    %89 = vector.broadcast %27 : vector<160x1xf32> to vector<160x128xf32>
    %90 = arith.mulf %88, %89 : vector<160x128xf32>
    %91 = arith.mulf %90, %90 : vector<160x128xf32>
    %cst_46 = arith.constant dense<0.000000e+00> : vector<128xf32>
    %92 = vector.multi_reduction <add>, %91, %cst_46 [0] : vector<160x128xf32> to vector<128xf32>
    %93 = vector.shape_cast %92 : vector<128xf32> to vector<1x128xf32>
    %94 = arith.addf %86, %80 : vector<1x128xf32>
    %cst_47 = arith.constant 0.0158730168 : f32
    %95 = vector.broadcast %cst_47 : f32 to vector<1x128xf32>
    %96 = arith.mulf %93, %95 : vector<1x128xf32>
    %cst_48 = arith.constant dense<0.000000e+00> : vector<1xf32>
    %97 = vector.multi_reduction <add>, %94, %cst_48 [1] : vector<1x128xf32> to vector<1xf32>
    %98 = vector.shape_cast %97 : vector<1xf32> to vector<1x1xf32>
    %cst_49 = arith.constant 7.812500e-03 : f32
    %99 = vector.broadcast %cst_49 : f32 to vector<1x1xf32>
    %100 = arith.mulf %98, %99 : vector<1x1xf32>
    %101 = vector.broadcast %100 : vector<1x1xf32> to vector<1x128xf32>
    %102 = arith.subf %94, %101 : vector<1x128xf32>
    %cst_50 = arith.constant dense<0.000000e+00> : vector<1xf32>
    %103 = vector.multi_reduction <add>, %93, %cst_50 [1] : vector<1x128xf32> to vector<1xf32>
    %104 = vector.shape_cast %103 : vector<1xf32> to vector<1x1xf32>
    %105 = arith.mulf %102, %102 : vector<1x128xf32>
    %cst_51 = arith.constant dense<0.000000e+00> : vector<1xf32>
    %106 = vector.multi_reduction <add>, %105, %cst_51 [1] : vector<1x128xf32> to vector<1xf32>
    %107 = vector.shape_cast %106 : vector<1xf32> to vector<1x1xf32>
    %cst_52 = arith.constant 6.400000e+01 : f32
    %108 = vector.broadcast %cst_52 : f32 to vector<1x1xf32>
    %109 = arith.mulf %108, %107 : vector<1x1xf32>
    %110 = arith.addf %104, %109 : vector<1x1xf32>
    %cst_53 = arith.constant 1.22085214E-4 : f32
    %111 = vector.broadcast %cst_53 : f32 to vector<1x1xf32>
    %112 = arith.mulf %110, %111 : vector<1x1xf32>
    %cst_54 = arith.constant 9.99999974E-6 : f32
    %113 = vector.broadcast %cst_54 : f32 to vector<1x128xf32>
    %114 = arith.addf %96, %113 : vector<1x128xf32>
    %115 = math.rsqrt %114 : vector<1x128xf32>
    %cst_55 = arith.constant 9.99999974E-6 : f32
    %116 = vector.broadcast %cst_55 : f32 to vector<1x1xf32>
    %117 = arith.addf %112, %116 : vector<1x1xf32>
    %118 = math.rsqrt %117 : vector<1x1xf32>
    %119 = arith.mulf %7, %115 : vector<1x128xf32>
    %120 = vector.broadcast %118 : vector<1x1xf32> to vector<1x128xf32>
    %121 = arith.mulf %9, %120 : vector<1x128xf32>
    %122 = arith.addf %119, %121 : vector<1x128xf32>
    %123 = arith.mulf %3, %122 : vector<1x128xf32>
    %124 = vector.broadcast %100 : vector<1x1xf32> to vector<1x128xf32>
    %125 = arith.subf %80, %124 : vector<1x128xf32>
    %126 = arith.mulf %9, %125 : vector<1x128xf32>
    %127 = vector.broadcast %118 : vector<1x1xf32> to vector<1x128xf32>
    %128 = arith.mulf %126, %127 : vector<1x128xf32>
    %129 = arith.mulf %7, %86 : vector<1x128xf32>
    %130 = arith.mulf %129, %115 : vector<1x128xf32>
    %131 = arith.subf %128, %130 : vector<1x128xf32>
    %132 = arith.mulf %3, %131 : vector<1x128xf32>
    %133 = arith.addf %5, %132 : vector<1x128xf32>
    %134 = vector.broadcast %123 : vector<1x128xf32> to vector<160x128xf32>
    %135 = arith.mulf %79, %134 : vector<160x128xf32>
    %136 = vector.broadcast %133 : vector<1x128xf32> to vector<160x128xf32>
    %137 = arith.addf %135, %136 : vector<160x128xf32>
    %cst_56 = arith.constant 0.000000e+00 : f32
    %138 = vector.broadcast %cst_56 : f32 to vector<160x128xf32>
    %139 = arith.maximumf %137, %138 : vector<160x128xf32>
    %c0_i32 = arith.constant 0 : i32
    %140 = vector.broadcast %c0_i32 : i32 to vector<160x1xi32>
    %141 = arith.cmpi eq, %17, %140 : vector<160x1xi32>
    %c9_i32 = arith.constant 9 : i32
    %142 = vector.broadcast %c9_i32 : i32 to vector<160x1xi32>
    %143 = arith.cmpi eq, %17, %142 : vector<160x1xi32>
    %c0_i32_57 = arith.constant 0 : i32
    %144 = vector.broadcast %c0_i32_57 : i32 to vector<160x1xi32>
    %145 = arith.cmpi eq, %20, %144 : vector<160x1xi32>
    %c9_i32_58 = arith.constant 9 : i32
    %146 = vector.broadcast %c9_i32_58 : i32 to vector<160x1xi32>
    %147 = arith.cmpi eq, %20, %146 : vector<160x1xi32>
    %c17_i32 = arith.constant 17 : i32
    %148 = tpu.dynamic_rotate %139 by %c17_i32 dim 0 : vector<160x128xf32>, i32 -> vector<160x128xf32>
    %c145_i32 = arith.constant 145 : i32
    %149 = tpu.dynamic_rotate %139 by %c145_i32 dim 0 : vector<160x128xf32>, i32 -> vector<160x128xf32>
    %150 = vector.shape_cast %141 : vector<160x1xi1> to vector<160x1xi1>
    %151 = vector.broadcast %150 : vector<160x1xi1> to vector<160x128xi1>
    %152 = arith.select %151, %149, %148 : vector<160x128xi1>, vector<160x128xf32>
    %c49_i32 = arith.constant 49 : i32
    %153 = tpu.dynamic_rotate %139 by %c49_i32 dim 0 : vector<160x128xf32>, i32 -> vector<160x128xf32>
    %154 = vector.shape_cast %143 : vector<160x1xi1> to vector<160x1xi1>
    %155 = vector.broadcast %154 : vector<160x1xi1> to vector<160x128xi1>
    %156 = arith.select %155, %153, %152 : vector<160x128xi1>, vector<160x128xf32>
    %c158_i32_59 = arith.constant 158 : i32
    %157 = tpu.dynamic_rotate %156 by %c158_i32_59 dim 0 : vector<160x128xf32>, i32 -> vector<160x128xf32>
    %158 = vector.shape_cast %145 : vector<160x1xi1> to vector<160x1xi1>
    %159 = vector.broadcast %158 : vector<160x1xi1> to vector<160x128xi1>
    %160 = arith.select %159, %157, %156 : vector<160x128xi1>, vector<160x128xf32>
    %c2_i32 = arith.constant 2 : i32
    %161 = tpu.dynamic_rotate %160 by %c2_i32 dim 0 : vector<160x128xf32>, i32 -> vector<160x128xf32>
    %162 = vector.shape_cast %147 : vector<160x1xi1> to vector<160x1xi1>
    %163 = vector.broadcast %162 : vector<160x1xi1> to vector<160x128xi1>
    %164 = arith.select %163, %161, %160 : vector<160x128xi1>, vector<160x128xf32>
    %165 = arith.truncf %164 : vector<160x128xf32> to vector<160x128xbf16>
    %c0_60 = arith.constant 0 : index
    %c0_61 = arith.constant 0 : index
    %c0_62 = arith.constant 0 : index
    %166 = vector.load %arg7[%c0_60, %c0_61, %c0_62] : memref<9x128x128xbf16, #tpu.memory_space<vmem>>, vector<1x128x128xbf16>
    %167 = vector.shape_cast %166 : vector<1x128x128xbf16> to vector<128x128xbf16>
    %cst_63 = arith.constant dense<0.000000e+00> : vector<160x128xf32>
    %168 = tpu.matmul %165, %167, %cst_63 {dimension_numbers = #tpu.dot_dimension_numbers<[1], [0], [0], [1], [0, 0, 1, 1], [], []>} : vector<160x128xbf16>, vector<128x128xbf16>, vector<160x128xf32> -> vector<160x128xf32>
    %c159_i32_64 = arith.constant 159 : i32
    %169 = tpu.dynamic_rotate %164 by %c159_i32_64 dim 0 : vector<160x128xf32>, i32 -> vector<160x128xf32>
    %170 = arith.truncf %169 : vector<160x128xf32> to vector<160x128xbf16>
    %c1_65 = arith.constant 1 : index
    %c0_66 = arith.constant 0 : index
    %c0_67 = arith.constant 0 : index
    %171 = vector.load %arg7[%c1_65, %c0_66, %c0_67] : memref<9x128x128xbf16, #tpu.memory_space<vmem>>, vector<1x128x128xbf16>
    %172 = vector.shape_cast %171 : vector<1x128x128xbf16> to vector<128x128xbf16>
    %cst_68 = arith.constant dense<0.000000e+00> : vector<160x128xf32>
    %173 = tpu.matmul %170, %172, %cst_68 {dimension_numbers = #tpu.dot_dimension_numbers<[1], [0], [0], [1], [0, 0, 1, 1], [], []>} : vector<160x128xbf16>, vector<128x128xbf16>, vector<160x128xf32> -> vector<160x128xf32>
    %174 = arith.addf %168, %173 : vector<160x128xf32>
    %c158_i32_69 = arith.constant 158 : i32
    %175 = tpu.dynamic_rotate %164 by %c158_i32_69 dim 0 : vector<160x128xf32>, i32 -> vector<160x128xf32>
    %176 = arith.truncf %175 : vector<160x128xf32> to vector<160x128xbf16>
    %c2_70 = arith.constant 2 : index
    %c0_71 = arith.constant 0 : index
    %c0_72 = arith.constant 0 : index
    %177 = vector.load %arg7[%c2_70, %c0_71, %c0_72] : memref<9x128x128xbf16, #tpu.memory_space<vmem>>, vector<1x128x128xbf16>
    %178 = vector.shape_cast %177 : vector<1x128x128xbf16> to vector<128x128xbf16>
    %cst_73 = arith.constant dense<0.000000e+00> : vector<160x128xf32>
    %179 = tpu.matmul %176, %178, %cst_73 {dimension_numbers = #tpu.dot_dimension_numbers<[1], [0], [0], [1], [0, 0, 1, 1], [], []>} : vector<160x128xbf16>, vector<128x128xbf16>, vector<160x128xf32> -> vector<160x128xf32>
    %180 = arith.addf %174, %179 : vector<160x128xf32>
    %c144_i32_74 = arith.constant 144 : i32
    %181 = tpu.dynamic_rotate %164 by %c144_i32_74 dim 0 : vector<160x128xf32>, i32 -> vector<160x128xf32>
    %182 = arith.truncf %181 : vector<160x128xf32> to vector<160x128xbf16>
    %c3_75 = arith.constant 3 : index
    %c0_76 = arith.constant 0 : index
    %c0_77 = arith.constant 0 : index
    %183 = vector.load %arg7[%c3_75, %c0_76, %c0_77] : memref<9x128x128xbf16, #tpu.memory_space<vmem>>, vector<1x128x128xbf16>
    %184 = vector.shape_cast %183 : vector<1x128x128xbf16> to vector<128x128xbf16>
    %cst_78 = arith.constant dense<0.000000e+00> : vector<160x128xf32>
    %185 = tpu.matmul %182, %184, %cst_78 {dimension_numbers = #tpu.dot_dimension_numbers<[1], [0], [0], [1], [0, 0, 1, 1], [], []>} : vector<160x128xbf16>, vector<128x128xbf16>, vector<160x128xf32> -> vector<160x128xf32>
    %186 = arith.addf %180, %185 : vector<160x128xf32>
    %c143_i32_79 = arith.constant 143 : i32
    %187 = tpu.dynamic_rotate %164 by %c143_i32_79 dim 0 : vector<160x128xf32>, i32 -> vector<160x128xf32>
    %188 = arith.truncf %187 : vector<160x128xf32> to vector<160x128xbf16>
    %c4_80 = arith.constant 4 : index
    %c0_81 = arith.constant 0 : index
    %c0_82 = arith.constant 0 : index
    %189 = vector.load %arg7[%c4_80, %c0_81, %c0_82] : memref<9x128x128xbf16, #tpu.memory_space<vmem>>, vector<1x128x128xbf16>
    %190 = vector.shape_cast %189 : vector<1x128x128xbf16> to vector<128x128xbf16>
    %cst_83 = arith.constant dense<0.000000e+00> : vector<160x128xf32>
    %191 = tpu.matmul %188, %190, %cst_83 {dimension_numbers = #tpu.dot_dimension_numbers<[1], [0], [0], [1], [0, 0, 1, 1], [], []>} : vector<160x128xbf16>, vector<128x128xbf16>, vector<160x128xf32> -> vector<160x128xf32>
    %192 = arith.addf %186, %191 : vector<160x128xf32>
    %c142_i32_84 = arith.constant 142 : i32
    %193 = tpu.dynamic_rotate %164 by %c142_i32_84 dim 0 : vector<160x128xf32>, i32 -> vector<160x128xf32>
    %194 = arith.truncf %193 : vector<160x128xf32> to vector<160x128xbf16>
    %c5_85 = arith.constant 5 : index
    %c0_86 = arith.constant 0 : index
    %c0_87 = arith.constant 0 : index
    %195 = vector.load %arg7[%c5_85, %c0_86, %c0_87] : memref<9x128x128xbf16, #tpu.memory_space<vmem>>, vector<1x128x128xbf16>
    %196 = vector.shape_cast %195 : vector<1x128x128xbf16> to vector<128x128xbf16>
    %cst_88 = arith.constant dense<0.000000e+00> : vector<160x128xf32>
    %197 = tpu.matmul %194, %196, %cst_88 {dimension_numbers = #tpu.dot_dimension_numbers<[1], [0], [0], [1], [0, 0, 1, 1], [], []>} : vector<160x128xbf16>, vector<128x128xbf16>, vector<160x128xf32> -> vector<160x128xf32>
    %198 = arith.addf %192, %197 : vector<160x128xf32>
    %c128_i32_89 = arith.constant 128 : i32
    %199 = tpu.dynamic_rotate %164 by %c128_i32_89 dim 0 : vector<160x128xf32>, i32 -> vector<160x128xf32>
    %200 = arith.truncf %199 : vector<160x128xf32> to vector<160x128xbf16>
    %c6_90 = arith.constant 6 : index
    %c0_91 = arith.constant 0 : index
    %c0_92 = arith.constant 0 : index
    %201 = vector.load %arg7[%c6_90, %c0_91, %c0_92] : memref<9x128x128xbf16, #tpu.memory_space<vmem>>, vector<1x128x128xbf16>
    %202 = vector.shape_cast %201 : vector<1x128x128xbf16> to vector<128x128xbf16>
    %cst_93 = arith.constant dense<0.000000e+00> : vector<160x128xf32>
    %203 = tpu.matmul %200, %202, %cst_93 {dimension_numbers = #tpu.dot_dimension_numbers<[1], [0], [0], [1], [0, 0, 1, 1], [], []>} : vector<160x128xbf16>, vector<128x128xbf16>, vector<160x128xf32> -> vector<160x128xf32>
    %204 = arith.addf %198, %203 : vector<160x128xf32>
    %c127_i32_94 = arith.constant 127 : i32
    %205 = tpu.dynamic_rotate %164 by %c127_i32_94 dim 0 : vector<160x128xf32>, i32 -> vector<160x128xf32>
    %206 = arith.truncf %205 : vector<160x128xf32> to vector<160x128xbf16>
    %c7_95 = arith.constant 7 : index
    %c0_96 = arith.constant 0 : index
    %c0_97 = arith.constant 0 : index
    %207 = vector.load %arg7[%c7_95, %c0_96, %c0_97] : memref<9x128x128xbf16, #tpu.memory_space<vmem>>, vector<1x128x128xbf16>
    %208 = vector.shape_cast %207 : vector<1x128x128xbf16> to vector<128x128xbf16>
    %cst_98 = arith.constant dense<0.000000e+00> : vector<160x128xf32>
    %209 = tpu.matmul %206, %208, %cst_98 {dimension_numbers = #tpu.dot_dimension_numbers<[1], [0], [0], [1], [0, 0, 1, 1], [], []>} : vector<160x128xbf16>, vector<128x128xbf16>, vector<160x128xf32> -> vector<160x128xf32>
    %210 = arith.addf %204, %209 : vector<160x128xf32>
    %c126_i32_99 = arith.constant 126 : i32
    %211 = tpu.dynamic_rotate %164 by %c126_i32_99 dim 0 : vector<160x128xf32>, i32 -> vector<160x128xf32>
    %212 = arith.truncf %211 : vector<160x128xf32> to vector<160x128xbf16>
    %c8_100 = arith.constant 8 : index
    %c0_101 = arith.constant 0 : index
    %c0_102 = arith.constant 0 : index
    %213 = vector.load %arg7[%c8_100, %c0_101, %c0_102] : memref<9x128x128xbf16, #tpu.memory_space<vmem>>, vector<1x128x128xbf16>
    %214 = vector.shape_cast %213 : vector<1x128x128xbf16> to vector<128x128xbf16>
    %cst_103 = arith.constant dense<0.000000e+00> : vector<160x128xf32>
    %215 = tpu.matmul %212, %214, %cst_103 {dimension_numbers = #tpu.dot_dimension_numbers<[1], [0], [0], [1], [0, 0, 1, 1], [], []>} : vector<160x128xbf16>, vector<128x128xbf16>, vector<160x128xf32> -> vector<160x128xf32>
    %216 = arith.addf %210, %215 : vector<160x128xf32>
    %c0_104 = arith.constant 0 : index
    %c0_105 = arith.constant 0 : index
    %217 = vector.load %arg8[%c0_104, %c0_105] : memref<1x128xf32, #tpu.memory_space<vmem>>, vector<1x128xf32>
    %218 = vector.broadcast %27 : vector<160x1xf32> to vector<160x128xf32>
    %219 = arith.mulf %216, %218 : vector<160x128xf32>
    %cst_106 = arith.constant dense<0.000000e+00> : vector<128xf32>
    %220 = vector.multi_reduction <add>, %219, %cst_106 [0] : vector<160x128xf32> to vector<128xf32>
    %221 = vector.shape_cast %220 : vector<128xf32> to vector<1x128xf32>
    %cst_107 = arith.constant 1.562500e-02 : f32
    %222 = vector.broadcast %cst_107 : f32 to vector<1x128xf32>
    %223 = arith.mulf %221, %222 : vector<1x128xf32>
    %224 = vector.broadcast %223 : vector<1x128xf32> to vector<160x128xf32>
    %225 = arith.subf %216, %224 : vector<160x128xf32>
    %226 = vector.broadcast %27 : vector<160x1xf32> to vector<160x128xf32>
    %227 = arith.mulf %225, %226 : vector<160x128xf32>
    %228 = arith.mulf %227, %227 : vector<160x128xf32>
    %cst_108 = arith.constant dense<0.000000e+00> : vector<128xf32>
    %229 = vector.multi_reduction <add>, %228, %cst_108 [0] : vector<160x128xf32> to vector<128xf32>
    %230 = vector.shape_cast %229 : vector<128xf32> to vector<1x128xf32>
    %231 = arith.addf %223, %217 : vector<1x128xf32>
    %cst_109 = arith.constant 0.0158730168 : f32
    %232 = vector.broadcast %cst_109 : f32 to vector<1x128xf32>
    %233 = arith.mulf %230, %232 : vector<1x128xf32>
    %cst_110 = arith.constant dense<0.000000e+00> : vector<1xf32>
    %234 = vector.multi_reduction <add>, %231, %cst_110 [1] : vector<1x128xf32> to vector<1xf32>
    %235 = vector.shape_cast %234 : vector<1xf32> to vector<1x1xf32>
    %cst_111 = arith.constant 7.812500e-03 : f32
    %236 = vector.broadcast %cst_111 : f32 to vector<1x1xf32>
    %237 = arith.mulf %235, %236 : vector<1x1xf32>
    %238 = vector.broadcast %237 : vector<1x1xf32> to vector<1x128xf32>
    %239 = arith.subf %231, %238 : vector<1x128xf32>
    %cst_112 = arith.constant dense<0.000000e+00> : vector<1xf32>
    %240 = vector.multi_reduction <add>, %230, %cst_112 [1] : vector<1x128xf32> to vector<1xf32>
    %241 = vector.shape_cast %240 : vector<1xf32> to vector<1x1xf32>
    %242 = arith.mulf %239, %239 : vector<1x128xf32>
    %cst_113 = arith.constant dense<0.000000e+00> : vector<1xf32>
    %243 = vector.multi_reduction <add>, %242, %cst_113 [1] : vector<1x128xf32> to vector<1xf32>
    %244 = vector.shape_cast %243 : vector<1xf32> to vector<1x1xf32>
    %cst_114 = arith.constant 6.400000e+01 : f32
    %245 = vector.broadcast %cst_114 : f32 to vector<1x1xf32>
    %246 = arith.mulf %245, %244 : vector<1x1xf32>
    %247 = arith.addf %241, %246 : vector<1x1xf32>
    %cst_115 = arith.constant 1.22085214E-4 : f32
    %248 = vector.broadcast %cst_115 : f32 to vector<1x1xf32>
    %249 = arith.mulf %247, %248 : vector<1x1xf32>
    %cst_116 = arith.constant 9.99999974E-6 : f32
    %250 = vector.broadcast %cst_116 : f32 to vector<1x128xf32>
    %251 = arith.addf %233, %250 : vector<1x128xf32>
    %252 = math.rsqrt %251 : vector<1x128xf32>
    %cst_117 = arith.constant 9.99999974E-6 : f32
    %253 = vector.broadcast %cst_117 : f32 to vector<1x1xf32>
    %254 = arith.addf %249, %253 : vector<1x1xf32>
    %255 = math.rsqrt %254 : vector<1x1xf32>
    %256 = arith.mulf %7, %252 : vector<1x128xf32>
    %257 = vector.broadcast %255 : vector<1x1xf32> to vector<1x128xf32>
    %258 = arith.mulf %9, %257 : vector<1x128xf32>
    %259 = arith.addf %256, %258 : vector<1x128xf32>
    %260 = arith.mulf %3, %259 : vector<1x128xf32>
    %261 = vector.broadcast %237 : vector<1x1xf32> to vector<1x128xf32>
    %262 = arith.subf %217, %261 : vector<1x128xf32>
    %263 = arith.mulf %9, %262 : vector<1x128xf32>
    %264 = vector.broadcast %255 : vector<1x1xf32> to vector<1x128xf32>
    %265 = arith.mulf %263, %264 : vector<1x128xf32>
    %266 = arith.mulf %7, %223 : vector<1x128xf32>
    %267 = arith.mulf %266, %252 : vector<1x128xf32>
    %268 = arith.subf %265, %267 : vector<1x128xf32>
    %269 = arith.mulf %3, %268 : vector<1x128xf32>
    %270 = arith.addf %5, %269 : vector<1x128xf32>
    %271 = vector.broadcast %260 : vector<1x128xf32> to vector<160x128xf32>
    %272 = arith.mulf %216, %271 : vector<160x128xf32>
    %273 = vector.broadcast %270 : vector<1x128xf32> to vector<160x128xf32>
    %274 = arith.addf %272, %273 : vector<160x128xf32>
    %275 = arith.addf %274, %50 : vector<160x128xf32>
    %c0_118 = arith.constant 0 : index
    %c0_119 = arith.constant 0 : index
    %c0_120 = arith.constant 0 : index
    %276 = vector.load %arg9[%c0_118, %c0_119, %c0_120] : memref<1x160x128xf32, #tpu.memory_space<vmem>>, vector<1x160x128xf32>
    %277 = vector.shape_cast %276 : vector<1x160x128xf32> to vector<160x128xf32>
    %278 = vector.shape_cast %275 : vector<160x128xf32> to vector<1x160x128xf32>
    tpu.vector_store %arg9[%c0_118, %c0_119, %c0_120], %278 {strides = array<i32>} : memref<1x160x128xf32, #tpu.memory_space<vmem>>, vector<1x160x128xf32>,
    return
  }
  func.func @transform_0(%arg0: i32) -> (i32, i32, i32) {
    %c0_i32 = arith.constant 0 : i32
    %c0_i32_0 = arith.constant 0 : i32
    %c0_i32_1 = arith.constant 0 : i32
    return %arg0, %c0_i32, %c0_i32_0 : i32, i32, i32
  }
  func.func @transform_1(%arg0: i32) -> (i32, i32, i32) {
    %c0_i32 = arith.constant 0 : i32
    %c0_i32_0 = arith.constant 0 : i32
    %c0_i32_1 = arith.constant 0 : i32
    return %arg0, %c0_i32, %c0_i32_0 : i32, i32, i32
  }
  func.func @transform_2(%arg0: i32) -> (i32, i32, i32) {
    %c0_i32 = arith.constant 0 : i32
    %c0_i32_0 = arith.constant 0 : i32
    %c0_i32_1 = arith.constant 0 : i32
    return %arg0, %c0_i32, %c0_i32_0 : i32, i32, i32
  }
  func.func @transform_3(%arg0: i32) -> (i32, i32, i32) {
    %c0_i32 = arith.constant 0 : i32
    %c0_i32_0 = arith.constant 0 : i32
    %c0_i32_1 = arith.constant 0 : i32
    %c0_i32_2 = arith.constant 0 : i32
    return %c0_i32, %c0_i32_0, %c0_i32_1 : i32, i32, i32
  }
  func.func @transform_4(%arg0: i32) -> (i32, i32, i32) {
    %c0_i32 = arith.constant 0 : i32
    %c0_i32_0 = arith.constant 0 : i32
    %c0_i32_1 = arith.constant 0 : i32
    %c0_i32_2 = arith.constant 0 : i32
    return %c0_i32, %c0_i32_0, %c0_i32_1 : i32, i32, i32
  }
  func.func @transform_5(%arg0: i32) -> (i32, i32) {
    %c0_i32 = arith.constant 0 : i32
    %c0_i32_0 = arith.constant 0 : i32
    %c0_i32_1 = arith.constant 0 : i32
    return %c0_i32, %c0_i32_0 : i32, i32
  }
  func.func @transform_6(%arg0: i32) -> (i32, i32, i32) {
    %c0_i32 = arith.constant 0 : i32
    %c0_i32_0 = arith.constant 0 : i32
    %c0_i32_1 = arith.constant 0 : i32
    %c0_i32_2 = arith.constant 0 : i32
    return %c0_i32, %c0_i32_0, %c0_i32_1 : i32, i32, i32
  }
  func.func @transform_7(%arg0: i32) -> (i32, i32) {
    %c0_i32 = arith.constant 0 : i32
    %c0_i32_0 = arith.constant 0 : i32
    %c0_i32_1 = arith.constant 0 : i32
    return %c0_i32, %c0_i32_0 : i32, i32
  }
  func.func @transform_8(%arg0: i32) -> (i32, i32, i32) {
    %c0_i32 = arith.constant 0 : i32
    %c0_i32_0 = arith.constant 0 : i32
    %c0_i32_1 = arith.constant 0 : i32
    return %arg0, %c0_i32, %c0_i32_0 : i32, i32, i32
  }
}

</mosaic_0001>

<llo_original>
// kernel: tpu_custom_call.1
$region0: #{tpu_custom_call.1}
  #allocation0 [shape = 'u32[]', space=smem, size = 0x4, offset = 0x4, fixed_abs, tag = 'smem constant byte address 0x4 - core index']
  #allocation1 [shape = 'u32[72,128]{1,0:T(1,128)}', space=vmem, size = 0x9000, scoped, tag = 'internal scratch']
  %s0 = inlined_call_operand.hbm [shape: f32[2,160,128], index: 0, kind: input, shape index: {}]
  %s1 = inlined_call_operand.hbm [shape: f32[2,1,128], index: 1, kind: input, shape index: {}]
  %s2 = inlined_call_operand.hbm [shape: f32[2,1,128], index: 2, kind: input, shape index: {}]
  %s3 = inlined_call_operand.vmem [shape: f32[1,1,128], index: 3, kind: input, shape index: {}]
  %s4 = inlined_call_operand.hbm [shape: bf16[9,128,128], index: 4, kind: input, shape index: {}]
  %s5 = inlined_call_operand.vmem [shape: f32[1,128], index: 5, kind: input, shape index: {}]
  %s6 = inlined_call_operand.hbm [shape: bf16[9,128,128], index: 6, kind: input, shape index: {}]
  %s7 = inlined_call_operand.vmem [shape: f32[1,128], index: 7, kind: input, shape index: {}]
  %s8 = inlined_call_operand.hbm [shape: f32[2,160,128], index: 8, kind: output, shape index: {}]
  %s9 = sld [smem:[#allocation0]]
  $region85: #{tpu_custom_call.1} parent=0
    _
  %s11 = ssub.s32 1, %s9
  %s12 = scalar_select 0, %s11, %s9
  $region1: #{tpu_custom_call.1} parent=0
    #allocation2 [shape = 'u8[163840]{0}', space=vmem, size = 0x28000, scoped, tag = 'input window, operand 0']
    #allocation3 [shape = 's32[2]{0}', space=sflag, size = 0x8, scoped, tag = 'scoped memory for tpu_custom_call.1']
    #allocation4 [shape = 's32[2]{0}', space=sflag, size = 0x8, scoped, tag = 'scoped memory for tpu_custom_call.1']
    #allocation5 [shape = 'u8[1024]{0}', space=vmem, size = 0x400, scoped, tag = 'input window, operand 1']
    #allocation6 [shape = 's32[2]{0}', space=sflag, size = 0x8, scoped, tag = 'scoped memory for tpu_custom_call.1']
    #allocation7 [shape = 'u8[1024]{0}', space=vmem, size = 0x400, scoped, tag = 'input window, operand 2']
    #allocation8 [shape = 'u8[294912]{0}', space=vmem, size = 0x48000, scoped, tag = 'input window, operand 4, single buffered']
    #allocation9 [shape = 's32[1]{0}', space=sflag, size = 0x4, scoped, tag = 'scoped memory for tpu_custom_call.1']
    #allocation10 [shape = 'u8[294912]{0}', space=vmem, size = 0x48000, scoped, tag = 'input window, operand 6, single buffered']
    #allocation11 [shape = 'u8[163840]{0}', space=vmem, size = 0x28000, scoped, tag = 'output window, operand 0']
    %13 = vsyncpa [#allocation3], 0
    %s14 = scalar_lea.sflag [#allocation3], 1
    %15 = vsyncpa %s14, 0
    %16 = vsyncpa [#allocation6], 0
    %s17 = scalar_lea.sflag [#allocation6], 1
    %18 = vsyncpa %s17, 0
    %19 = vsyncpa [#allocation9], 0
    %20 = vsyncpa [#allocation4], 0
    %s21 = scalar_lea.sflag [#allocation4], 1
    %22 = vsyncpa %s21, 0
    loop: start=0, step=1, limit=4
    $region2: #{tpu_custom_call.1} parent=1 // loop_pre_header
      _
    $region3: #{tpu_custom_call.1} parent=1 // loop_header
      %s24 = sphi 0, %s28
      %p25 = scmp.ge.s32.totalorder %s24, 4
      %s34 = sphi 0, %s36
      %s37 = sphi 0, %s34
      %s38 = sphi 0, %s37
      %s54 = sphi 0, %s38
      %s60 = sphi 0, %s62
      %s63 = sphi 0, %s60
      %s64 = sphi 0, %s63
      %s80 = sphi 0, %s64
      %s86 = sphi 0, %s88
      %s89 = sphi 0, %s86
      %s90 = sphi 0, %s89
      %s106 = sphi 0, %s90
      %s110 = sphi 0, %s110
      %s112 = sphi 0, %s110
      %s113 = sphi 0, %s112
      %s127 = sphi 0, %s113
      %s131 = sphi 0, %s131
      %s133 = sphi 0, %s131
      %s134 = sphi 0, %s133
      %s148 = sphi 0, %s134
      %s152 = sphi 0, %s152
      %s154 = sphi 0, %s152
      %s155 = sphi 0, %s154
      %s169 = sphi 0, %s155
      %s173 = sphi 0, %s173
      %s175 = sphi 0, %s173
      %s176 = sphi 0, %s175
      %s190 = sphi 0, %s176
      %s194 = sphi 0, %s194
      %s196 = sphi 0, %s194
      %s197 = sphi 0, %s196
      %s211 = sphi 0, %s197
      %s217 = sphi 0, %s219
      %s220 = sphi 0, %s217
      %s221 = sphi 0, %s220
      %s237 = sphi 0, %s221
    $region4: #{tpu_custom_call.1} parent=1 // loop_header_branch
      %27 = sbr.rel (%p25) target = $region8
    $region5: #{tpu_custom_call.1} parent=1 // loop_body
      %s29 = ssub.s32 %s24, 1
      %s30 = ssub.s32 %s24, 2
      %s31 = sadd.s32 %s24, 1
      %s32 = ssub.s32 %s24, %s31
      %p33 = scmp.eq.s32.totalorder %s32, 0
      %s35 = sadd.s32 %s34, 1
      %s36 = scalar_select %p33, %s34, %s35
      %p39 = pneg %p33
      %p40 = scmp.eq.s32.totalorder %s24, 1
      %p41 = por %p39, %p40
      %p42 = scmp.ne.s32.totalorder %s34, %s37
      %p43 = scmp.eq.s32.totalorder %s24, 0
      %p44 = por %p42, %p43
      %p45 = scmp.ne.s32.totalorder %s34, %s37
      %p46 = scmp.eq.s32.totalorder %s29, 1
      %p47 = por %p45, %p46
      %p48 = scmp.ne.s32.totalorder %s37, %s38
      %p49 = scmp.eq.s32.totalorder %s29, 0
      %p50 = por %p48, %p49
      %p51 = scmp.ne.s32.totalorder %s37, %s38
      %p52 = scmp.eq.s32.totalorder %s30, 1
      %p53 = por %p51, %p52
      %p55 = scmp.ne.s32.totalorder %s38, %s54
      %p56 = scmp.eq.s32.totalorder %s30, 0
      %p57 = por %p55, %p56
      %s58 = ssub.s32 %s24, %s31
      %p59 = scmp.eq.s32.totalorder %s58, 0
      %s61 = sadd.s32 %s60, 1
      %s62 = scalar_select %p59, %s60, %s61
      %p65 = pneg %p59
      %p66 = scmp.eq.s32.totalorder %s24, 1
      %p67 = por %p65, %p66
      %p68 = scmp.ne.s32.totalorder %s60, %s63
      %p69 = scmp.eq.s32.totalorder %s24, 0
      %p70 = por %p68, %p69
      %p71 = scmp.ne.s32.totalorder %s60, %s63
      %p72 = scmp.eq.s32.totalorder %s29, 1
      %p73 = por %p71, %p72
      %p74 = scmp.ne.s32.totalorder %s63, %s64
      %p75 = scmp.eq.s32.totalorder %s29, 0
      %p76 = por %p74, %p75
      %p77 = scmp.ne.s32.totalorder %s63, %s64
      %p78 = scmp.eq.s32.totalorder %s30, 1
      %p79 = por %p77, %p78
      %p81 = scmp.ne.s32.totalorder %s64, %s80
      %p82 = scmp.eq.s32.totalorder %s30, 0
      %p83 = por %p81, %p82
      %s84 = ssub.s32 %s24, %s31
      %p85 = scmp.eq.s32.totalorder %s84, 0
      %s87 = sadd.s32 %s86, 1
      %s88 = scalar_select %p85, %s86, %s87
      %p91 = pneg %p85
      %p92 = scmp.eq.s32.totalorder %s24, 1
      %p93 = por %p91, %p92
      %p94 = scmp.ne.s32.totalorder %s86, %s89
      %p95 = scmp.eq.s32.totalorder %s24, 0
      %p96 = por %p94, %p95
      %p97 = scmp.ne.s32.totalorder %s86, %s89
      %p98 = scmp.eq.s32.totalorder %s29, 1
      %p99 = por %p97, %p98
      %p100 = scmp.ne.s32.totalorder %s89, %s90
      %p101 = scmp.eq.s32.totalorder %s29, 0
      %p102 = por %p100, %p101
      %p103 = scmp.ne.s32.totalorder %s89, %s90
      %p104 = scmp.eq.s32.totalorder %s30, 1
      %p105 = por %p103, %p104
      %p107 = scmp.ne.s32.totalorder %s90, %s106
      %p108 = scmp.eq.s32.totalorder %s30, 0
      %p109 = por %p107, %p108
      %s111 = sadd.s32 %s110, 1
      %p114 = scmp.eq.s32.totalorder %s24, 1
      %p115 = scmp.ne.s32.totalorder %s110, %s112
      %p116 = scmp.eq.s32.totalorder %s24, 0
      %p117 = por %p115, %p116
      %p118 = scmp.ne.s32.totalorder %s110, %s112
      %p119 = scmp.eq.s32.totalorder %s29, 1
      %p120 = por %p118, %p119
      %p121 = scmp.ne.s32.totalorder %s112, %s113
      %p122 = scmp.eq.s32.totalorder %s29, 0
      %p123 = por %p121, %p122
      %p124 = scmp.ne.s32.totalorder %s112, %s113
      %p125 = scmp.eq.s32.totalorder %s30, 1
      %p126 = por %p124, %p125
      %p128 = scmp.ne.s32.totalorder %s113, %s127
      %p129 = scmp.eq.s32.totalorder %s30, 0
      %p130 = por %p128, %p129
      %s132 = sadd.s32 %s131, 1
      %p135 = scmp.eq.s32.totalorder %s24, 1
      %p136 = scmp.ne.s32.totalorder %s131, %s133
      %p137 = scmp.eq.s32.totalorder %s24, 0
      %p138 = por %p136, %p137
      %p139 = scmp.ne.s32.totalorder %s131, %s133
      %p140 = scmp.eq.s32.totalorder %s29, 1
      %p141 = por %p139, %p140
      %p142 = scmp.ne.s32.totalorder %s133, %s134
      %p143 = scmp.eq.s32.totalorder %s29, 0
      %p144 = por %p142, %p143
      %p145 = scmp.ne.s32.totalorder %s133, %s134
      %p146 = scmp.eq.s32.totalorder %s30, 1
      %p147 = por %p145, %p146
      %p149 = scmp.ne.s32.totalorder %s134, %s148
      %p150 = scmp.eq.s32.totalorder %s30, 0
      %p151 = por %p149, %p150
      %s153 = sadd.s32 %s152, 1
      %p156 = scmp.eq.s32.totalorder %s24, 1
      %p157 = scmp.ne.s32.totalorder %s152, %s154
      %p158 = scmp.eq.s32.totalorder %s24, 0
      %p159 = por %p157, %p158
      %p160 = scmp.ne.s32.totalorder %s152, %s154
      %p161 = scmp.eq.s32.totalorder %s29, 1
      %p162 = por %p160, %p161
      %p163 = scmp.ne.s32.totalorder %s154, %s155
      %p164 = scmp.eq.s32.totalorder %s29, 0
      %p165 = por %p163, %p164
      %p166 = scmp.ne.s32.totalorder %s154, %s155
      %p167 = scmp.eq.s32.totalorder %s30, 1
      %p168 = por %p166, %p167
      %p170 = scmp.ne.s32.totalorder %s155, %s169
      %p171 = scmp.eq.s32.totalorder %s30, 0
      %p172 = por %p170, %p171
      %s174 = sadd.s32 %s173, 1
      %p177 = scmp.eq.s32.totalorder %s24, 1
      %p178 = scmp.ne.s32.totalorder %s173, %s175
      %p179 = scmp.eq.s32.totalorder %s24, 0
      %p180 = por %p178, %p179
      %p181 = scmp.ne.s32.totalorder %s173, %s175
      %p182 = scmp.eq.s32.totalorder %s29, 1
      %p183 = por %p181, %p182
      %p184 = scmp.ne.s32.totalorder %s175, %s176
      %p185 = scmp.eq.s32.totalorder %s29, 0
      %p186 = por %p184, %p185
      %p187 = scmp.ne.s32.totalorder %s175, %s176
      %p188 = scmp.eq.s32.totalorder %s30, 1
      %p189 = por %p187, %p188
      %p191 = scmp.ne.s32.totalorder %s176, %s190
      %p192 = scmp.eq.s32.totalorder %s30, 0
      %p193 = por %p191, %p192
      %s195 = sadd.s32 %s194, 1
      %p198 = scmp.eq.s32.totalorder %s24, 1
      %p199 = scmp.ne.s32.totalorder %s194, %s196
      %p200 = scmp.eq.s32.totalorder %s24, 0
      %p201 = por %p199, %p200
      %p202 = scmp.ne.s32.totalorder %s194, %s196
      %p203 = scmp.eq.s32.totalorder %s29, 1
      %p204 = por %p202, %p203
      %p205 = scmp.ne.s32.totalorder %s196, %s197
      %p206 = scmp.eq.s32.totalorder %s29, 0
      %p207 = por %p205, %p206
      %p208 = scmp.ne.s32.totalorder %s196, %s197
      %p209 = scmp.eq.s32.totalorder %s30, 1
      %p210 = por %p208, %p209
      %p212 = scmp.ne.s32.totalorder %s197, %s211
      %p213 = scmp.eq.s32.totalorder %s30, 0
      %p214 = por %p212, %p213
      %s215 = ssub.s32 %s24, %s31
      %p216 = scmp.eq.s32.totalorder %s215, 0
      %s218 = sadd.s32 %s217, 1
      %s219 = scalar_select %p216, %s217, %s218
      %p222 = pneg %p216
      %p223 = scmp.eq.s32.totalorder %s24, 1
      %p224 = por %p222, %p223
      %p225 = scmp.ne.s32.totalorder %s217, %s220
      %p226 = scmp.eq.s32.totalorder %s24, 0
      %p227 = por %p225, %p226
      %p228 = scmp.ne.s32.totalorder %s217, %s220
      %p229 = scmp.eq.s32.totalorder %s29, 1
      %p230 = por %p228, %p229
      %p231 = scmp.ne.s32.totalorder %s220, %s221
      %p232 = scmp.eq.s32.totalorder %s29, 0
      %p233 = por %p231, %p232
      %p234 = scmp.ne.s32.totalorder %s220, %s221
      %p235 = scmp.eq.s32.totalorder %s30, 1
      %p236 = por %p234, %p235
      %p238 = scmp.ne.s32.totalorder %s221, %s237
      %p239 = scmp.eq.s32.totalorder %s30, 0
      %p240 = por %p238, %p239
      %p241 = scmp.le.s32.totalorder 1, %s24
      %p242 = scmp.lt.s32.totalorder %s24, 3
      %p243 = pnand %p241, %p242
      %p244 = pneg %p243
      // Predicated region
      $region9: #{tpu_custom_call.1} parent=5 // pred_check
        _
      $region10: #{tpu_custom_call.1} parent=5 // pred_check_branch
        %246 = sbr.rel (%p243) target = $region12
      $region11: #{tpu_custom_call.1} parent=5 // pred_region
        %s247 = ssub.s32 %s24, 1
        // Predicated region
        $region13: #{tpu_custom_call.1} parent=11 // pred_check
          %p248 = pneg %p123
        $region14: #{tpu_custom_call.1} parent=11 // pred_check_branch
          %250 = sbr.rel (%p248) target = $region16
        $region15: #{tpu_custom_call.1} parent=11 // pred_region
          _
        $region16: #{tpu_custom_call.1} parent=11 // pred_fallthru
          _
        // Predicated region
        $region17: #{tpu_custom_call.1} parent=11 // pred_check
          %p251 = pneg %p144
        $region18: #{tpu_custom_call.1} parent=11 // pred_check_branch
          %253 = sbr.rel (%p251) target = $region20
        $region19: #{tpu_custom_call.1} parent=11 // pred_region
          %255 = vsyncadd [#allocation9], 0
          %s256 = sshll.u32 %s4, 4
          %s257 = int_to_ptr.hbm [resolvable:$true] %s256
          %s258 = sshll.u32 [#allocation8], 4
          %s259 = int_to_ptr.vmem [resolvable:$true] %s258
          %264 = dma.hbm_to_vmem [thread:$0]  %s257, 9216, %s259, [#allocation9], 64, 64, 4
        $region20: #{tpu_custom_call.1} parent=11 // pred_fallthru
          _
        // Predicated region
        $region21: #{tpu_custom_call.1} parent=11 // pred_check
          %p265 = pneg %p165
        $region22: #{tpu_custom_call.1} parent=11 // pred_check_branch
          %267 = sbr.rel (%p265) target = $region24
        $region23: #{tpu_custom_call.1} parent=11 // pred_region
          _
        $region24: #{tpu_custom_call.1} parent=11 // pred_fallthru
          _
        // Predicated region
        $region25: #{tpu_custom_call.1} parent=11 // pred_check
          %p268 = pneg %p186
        $region26: #{tpu_custom_call.1} parent=11 // pred_check_branch
          %270 = sbr.rel (%p268) target = $region28
        $region27: #{tpu_custom_call.1} parent=11 // pred_region
          %272 = vsyncadd [#allocation9], 0
          %s273 = sshll.u32 %s6, 4
          %s274 = int_to_ptr.hbm [resolvable:$true] %s273
          %s275 = sshll.u32 [#allocation10], 4
          %s276 = int_to_ptr.vmem [resolvable:$true] %s275
          %281 = dma.hbm_to_vmem [thread:$0]  %s274, 9216, %s276, [#allocation9], 64, 64, 4
        $region28: #{tpu_custom_call.1} parent=11 // pred_fallthru
          _
        // Predicated region
        $region29: #{tpu_custom_call.1} parent=11 // pred_check
          %p282 = pneg %p207
        $region30: #{tpu_custom_call.1} parent=11 // pred_check_branch
          %284 = sbr.rel (%p282) target = $region32
        $region31: #{tpu_custom_call.1} parent=11 // pred_region
          _
        $region32: #{tpu_custom_call.1} parent=11 // pred_fallthru
          _
      $region12: #{tpu_custom_call.1} parent=5 // pred_fallthru
        _
      %p285 = scmp.lt.s32.totalorder %s24, 2
      // Predicated region
      $region33: #{tpu_custom_call.1} parent=5 // pred_check
        %p286 = pneg %p285
      $region34: #{tpu_custom_call.1} parent=5 // pred_check_branch
        %288 = sbr.rel (%p286) target = $region36
      $region35: #{tpu_custom_call.1} parent=5 // pred_region
        // Predicated region
        $region37: #{tpu_custom_call.1} parent=35 // pred_check
          %p289 = pneg %p44
        $region38: #{tpu_custom_call.1} parent=35 // pred_check_branch
          %291 = sbr.rel (%p289) target = $region40
        $region39: #{tpu_custom_call.1} parent=35 // pred_region
          %s292 = sand.u32 %s34, 1
          %s293 = scalar_lea.sflag [#allocation3], %s292
          %s294 = sand.u32 %s34, 1
          %s295 = smul.addr %s294, 160
          %s296 = scalar_lea.vmem [#allocation2], %s295
          %298 = vsyncadd %s293, 0
          %s299 = smul.addr %s24, 20
          %s300 = smul.addr %s299, 8
          %s301 = scalar_lea.hbm %s0, %s300
          %s302 = sshll.u32 %s301, 4
          %s303 = int_to_ptr.hbm [resolvable:$true] %s302
          %s304 = sshll.u32 %s296, 4
          %s305 = int_to_ptr.vmem [resolvable:$true] %s304
          %310 = dma.hbm_to_vmem [thread:$0]  %s303, 2560, %s305, %s293, 128, 128, 8
        $region40: #{tpu_custom_call.1} parent=35 // pred_fallthru
          _
        // Predicated region
        $region41: #{tpu_custom_call.1} parent=35 // pred_check
          %p311 = pneg %p70
        $region42: #{tpu_custom_call.1} parent=35 // pred_check_branch
          %313 = sbr.rel (%p311) target = $region44
        $region43: #{tpu_custom_call.1} parent=35 // pred_region
          %s314 = sand.u32 %s24, 1
          %s315 = scalar_lea.sflag [#allocation6], %s314
          %s316 = sand.u32 %s60, 1
          %s317 = scalar_lea.vmem [#allocation5], %s316
          %319 = vsyncadd %s315, 0
          %s320 = scalar_lea.hbm %s1, %s24
          %s322 = sshll.u32 %s320, 4
          %s323 = int_to_ptr.hbm [resolvable:$true] %s322
          %s324 = sshll.u32 %s317, 4
          %s325 = int_to_ptr.vmem [resolvable:$true] %s324
          %327 = dma.hbm_to_vmem [thread:$0]  %s323, 16, %s325, %s315
        $region44: #{tpu_custom_call.1} parent=35 // pred_fallthru
          _
        // Predicated region
        $region45: #{tpu_custom_call.1} parent=35 // pred_check
          %p328 = pneg %p96
        $region46: #{tpu_custom_call.1} parent=35 // pred_check_branch
          %330 = sbr.rel (%p328) target = $region48
        $region47: #{tpu_custom_call.1} parent=35 // pred_region
          %s331 = sand.u32 %s24, 1
          %s332 = scalar_lea.sflag [#allocation6], %s331
          %s333 = sand.u32 %s86, 1
          %s334 = scalar_lea.vmem [#allocation7], %s333
          %336 = vsyncadd %s332, 0
          %s337 = scalar_lea.hbm %s2, %s24
          %s339 = sshll.u32 %s337, 4
          %s340 = int_to_ptr.hbm [resolvable:$true] %s339
          %s341 = sshll.u32 %s334, 4
          %s342 = int_to_ptr.vmem [resolvable:$true] %s341
          %344 = dma.hbm_to_vmem [thread:$0]  %s340, 16, %s342, %s332
        $region48: #{tpu_custom_call.1} parent=35 // pred_fallthru
          _
      $region36: #{tpu_custom_call.1} parent=5 // pred_fallthru
        _
      %p345 = scmp.le.s32.totalorder 1, %s24
      %p346 = scmp.lt.s32.totalorder %s24, 3
      %p347 = pnand %p345, %p346
      %p348 = pneg %p347
      // Predicated region
      $region49: #{tpu_custom_call.1} parent=5 // pred_check
        _
      $region50: #{tpu_custom_call.1} parent=5 // pred_check_branch
        %350 = sbr.rel (%p347) target = $region52
      $region51: #{tpu_custom_call.1} parent=5 // pred_region
        %s351 = ssub.s32 %s24, 1
        %s352 = sand.u32 %s37, 1
        %s353 = scalar_lea.sflag [#allocation3], %s352
        %s354 = sand.u32 %s37, 1
        %s355 = smul.addr %s354, 160
        %s356 = scalar_lea.vmem [#allocation2], %s355
        // Predicated region
        $region53: #{tpu_custom_call.1} parent=51 // pred_check
          %p357 = pneg %p50
        $region54: #{tpu_custom_call.1} parent=51 // pred_check_branch
          %359 = sbr.rel (%p357) target = $region56
        $region55: #{tpu_custom_call.1} parent=51 // pred_region
          %361 = dma.done %s353, 2560
        $region56: #{tpu_custom_call.1} parent=51 // pred_fallthru
          _
        %s362 = sand.u32 %s29, 1
        %s363 = scalar_lea.sflag [#allocation6], %s362
        %s364 = sand.u32 %s63, 1
        %s365 = scalar_lea.vmem [#allocation5], %s364
        // Predicated region
        $region57: #{tpu_custom_call.1} parent=51 // pred_check
          %p366 = pneg %p76
        $region58: #{tpu_custom_call.1} parent=51 // pred_check_branch
          %368 = sbr.rel (%p366) target = $region60
        $region59: #{tpu_custom_call.1} parent=51 // pred_region
          %370 = dma.done %s363, 16
        $region60: #{tpu_custom_call.1} parent=51 // pred_fallthru
          _
        %s371 = sand.u32 %s29, 1
        %s372 = scalar_lea.sflag [#allocation6], %s371
        %s373 = sand.u32 %s89, 1
        %s374 = scalar_lea.vmem [#allocation7], %s373
        // Predicated region
        $region61: #{tpu_custom_call.1} parent=51 // pred_check
          %p375 = pneg %p102
        $region62: #{tpu_custom_call.1} parent=51 // pred_check_branch
          %377 = sbr.rel (%p375) target = $region64
        $region63: #{tpu_custom_call.1} parent=51 // pred_region
          %379 = dma.done %s372, 16
        $region64: #{tpu_custom_call.1} parent=51 // pred_fallthru
          _
        // Predicated region
        $region65: #{tpu_custom_call.1} parent=51 // pred_check
          %p380 = pneg %p144
        $region66: #{tpu_custom_call.1} parent=51 // pred_check_branch
          %382 = sbr.rel (%p380) target = $region68
        $region67: #{tpu_custom_call.1} parent=51 // pred_region
          %384 = dma.done [#allocation9], 9216
        $region68: #{tpu_custom_call.1} parent=51 // pred_fallthru
          _
        // Predicated region
        $region69: #{tpu_custom_call.1} parent=51 // pred_check
          %p385 = pneg %p186
        $region70: #{tpu_custom_call.1} parent=51 // pred_check_branch
          %387 = sbr.rel (%p385) target = $region72
        $region71: #{tpu_custom_call.1} parent=51 // pred_region
          %389 = dma.done [#allocation9], 9216
        $region72: #{tpu_custom_call.1} parent=51 // pred_fallthru
          _
        %s390 = sand.u32 %s37, 1
        %s391 = scalar_lea.sflag [#allocation3], %s390
        %s392 = sand.u32 %s37, 1
        %s393 = smul.addr %s392, 160
        %s394 = scalar_lea.vmem [#allocation2], %s393
        %p395 = pneg %p50
        %p396 = pneg %p47
        %s397 = sand.u32 %s29, 1
        %s398 = scalar_lea.sflag [#allocation6], %s397
        %s399 = sand.u32 %s63, 1
        %s400 = scalar_lea.vmem [#allocation5], %s399
        %p401 = pneg %p76
        %p402 = pneg %p73
        %s403 = sand.u32 %s29, 1
        %s404 = scalar_lea.sflag [#allocation6], %s403
        %s405 = sand.u32 %s89, 1
        %s406 = scalar_lea.vmem [#allocation7], %s405
        %p407 = pneg %p102
        %p408 = pneg %p99
        %p409 = pneg %p123
        %p410 = pneg %p120
        %p411 = pneg %p144
        %p412 = pneg %p141
        %p413 = pneg %p165
        %p414 = pneg %p162
        %p415 = pneg %p186
        %p416 = pneg %p183
        %p417 = pneg %p207
        %p418 = pneg %p204
        %p419 = pneg %p233
        %p420 = pneg %p230
        %s421 = sand.u32 %s220, 1
        %s422 = scalar_lea.sflag [#allocation4], %s421
        %s423 = sand.u32 %s220, 1
        %s424 = smul.addr %s423, 160
        %s425 = scalar_lea.vmem [#allocation11], %s424
        %v426 = vld [vmem:[%s356] sm:$0xff]
        %v427 = vld [vmem:[%s356 + $0x8] sm:$0xff]
        %v428 = vld [vmem:[%s356 + $0x10] sm:$0xff]
        %v429 = vld [vmem:[%s356 + $0x18] sm:$0xff]
        %v430 = vld [vmem:[%s356 + $0x20] sm:$0xff]
        %v431 = vld [vmem:[%s356 + $0x28] sm:$0xff]
        %v432 = vld [vmem:[%s356 + $0x30] sm:$0xff]
        %v433 = vld [vmem:[%s356 + $0x38] sm:$0xff]
        %v434 = vld [vmem:[%s356 + $0x40] sm:$0xff]
        %v435 = vld [vmem:[%s356 + $0x48] sm:$0xff]
        %v436 = vld [vmem:[%s356 + $0x50] sm:$0xff]
        %v437 = vld [vmem:[%s356 + $0x58] sm:$0xff]
        %v438 = vld [vmem:[%s356 + $0x60] sm:$0xff]
        %v439 = vld [vmem:[%s356 + $0x68] sm:$0xff]
        %v440 = vld [vmem:[%s356 + $0x70] sm:$0xff]
        %v441 = vld [vmem:[%s356 + $0x78] sm:$0xff]
        %v442 = vld [vmem:[%s356 + $0x80] sm:$0xff]
        %v443 = vld [vmem:[%s356 + $0x88] sm:$0xff]
        %v444 = vld [vmem:[%s356 + $0x90] sm:$0xff]
        %v445 = vld [vmem:[%s356 + $0x98] sm:$0xff]
        %v446 = vld [vmem:[%s365] sm:$0x1]
        %v447 = vld [vmem:[%s374] sm:$0x1]
        %v448 = vld [vmem:[%s3] sm:$0x1]
        %v449 = vsub.f32 1.0, %v448
        %v450 = vlaneseq
        %v451 = vshrl.u32 %v450, 7
        %v452 = vadd.s32 %v451, 8
        %v453 = vadd.s32 %v451, 16
        %v454 = vadd.s32 %v451, 24
        %v455 = vadd.s32 %v451, 32
        %v456 = vadd.s32 %v451, 40
        %v457 = vadd.s32 %v451, 48
        %v458 = vadd.s32 %v451, 56
        %v459 = vadd.s32 %v451, 64
        %v460 = vadd.s32 %v451, 72
        %v461 = vadd.s32 %v451, 80
        %v462 = vadd.s32 %v451, 88
        %v463 = vadd.s32 %v451, 96
        %v464 = vadd.s32 %v451, 104
        %v465 = vadd.s32 %v451, 112
        %v466 = vadd.s32 %v451, 120
        %v467 = vadd.s32 %v451, 128
        %v468 = vadd.s32 %v451, 136
        %v469 = vadd.s32 %v451, 144
        %v470 = vadd.s32 %v451, 152
        %v471 = vcvt.s32.f32 %v451
        %v472 = vcvt.s32.f32 %v452
        %v473 = vcvt.s32.f32 %v453
        %v474 = vcvt.s32.f32 %v454
        %v475 = vcvt.s32.f32 %v455
        %v476 = vcvt.s32.f32 %v456
        %v477 = vcvt.s32.f32 %v457
        %v478 = vcvt.s32.f32 %v458
        %v479 = vcvt.s32.f32 %v459
        %v480 = vcvt.s32.f32 %v460
        %v481 = vcvt.s32.f32 %v461
        %v482 = vcvt.s32.f32 %v462
        %v483 = vcvt.s32.f32 %v463
        %v484 = vcvt.s32.f32 %v464
        %v485 = vcvt.s32.f32 %v465
        %v486 = vcvt.s32.f32 %v466
        %v487 = vcvt.s32.f32 %v467
        %v488 = vcvt.s32.f32 %v468
        %v489 = vcvt.s32.f32 %v469
        %v490 = vcvt.s32.f32 %v470
        %v491 = vadd.f32 %v471, 0.5
        %v492 = vadd.f32 %v472, 0.5
        %v493 = vadd.f32 %v473, 0.5
        %v494 = vadd.f32 %v474, 0.5
        %v495 = vadd.f32 %v475, 0.5
        %v496 = vadd.f32 %v476, 0.5
        %v497 = vadd.f32 %v477, 0.5
        %v498 = vadd.f32 %v478, 0.5
        %v499 = vadd.f32 %v479, 0.5
        %v500 = vadd.f32 %v480, 0.5
        %v501 = vadd.f32 %v481, 0.5
        %v502 = vadd.f32 %v482, 0.5
        %v503 = vadd.f32 %v483, 0.5
        %v504 = vadd.f32 %v484, 0.5
        %v505 = vadd.f32 %v485, 0.5
        %v506 = vadd.f32 %v486, 0.5
        %v507 = vadd.f32 %v487, 0.5
        %v508 = vadd.f32 %v488, 0.5
        %v509 = vadd.f32 %v489, 0.5
        %v510 = vadd.f32 %v490, 0.5
        %v511 = vrcp.pop 16.0
        %v512 = vmul.f32 16.0, %v511
        %v513 = vsub.f32 1.0, %v512
        %v514 = vmul.f32 %v511, %v513
        %v515 = vadd.f32 %v511, %v514
        %vm516 = vweird.f32 %v511
        %v517 = vsel %vm516, %v511, %v515
        %v518 = vmul.f32 %v491, %v517
        %v519 = vmul.f32 %v492, %v517
        %v520 = vmul.f32 %v493, %v517
        %v521 = vmul.f32 %v494, %v517
        %v522 = vmul.f32 %v495, %v517
        %v523 = vmul.f32 %v496, %v517
        %v524 = vmul.f32 %v497, %v517
        %v525 = vmul.f32 %v498, %v517
        %v526 = vmul.f32 %v499, %v517
        %v527 = vmul.f32 %v500, %v517
        %v528 = vmul.f32 %v501, %v517
        %v529 = vmul.f32 %v502, %v517
        %v530 = vmul.f32 %v503, %v517
        %v531 = vmul.f32 %v504, %v517
        %v532 = vmul.f32 %v505, %v517
        %v533 = vmul.f32 %v506, %v517
        %v534 = vmul.f32 %v507, %v517
        %v535 = vmul.f32 %v508, %v517
        %v536 = vmul.f32 %v509, %v517
        %v537 = vmul.f32 %v510, %v517
        %v538 = vfloor.f32 %v518
        %v539 = vfloor.f32 %v519
        %v540 = vfloor.f32 %v520
        %v541 = vfloor.f32 %v521
        %v542 = vfloor.f32 %v522
        %v543 = vfloor.f32 %v523
        %v544 = vfloor.f32 %v524
        %v545 = vfloor.f32 %v525
        %v546 = vfloor.f32 %v526
        %v547 = vfloor.f32 %v527
        %v548 = vfloor.f32 %v528
        %v549 = vfloor.f32 %v529
        %v550 = vfloor.f32 %v530
        %v551 = vfloor.f32 %v531
        %v552 = vfloor.f32 %v532
        %v553 = vfloor.f32 %v533
        %v554 = vfloor.f32 %v534
        %v555 = vfloor.f32 %v535
        %v556 = vfloor.f32 %v536
        %v557 = vfloor.f32 %v537
        %v558 = vcvt.f32.s32.to.zero.pseudo %v538
        %v559 = vcvt.f32.s32.to.zero.pseudo %v539
        %v560 = vcvt.f32.s32.to.zero.pseudo %v540
        %v561 = vcvt.f32.s32.to.zero.pseudo %v541
        %v562 = vcvt.f32.s32.to.zero.pseudo %v542
        %v563 = vcvt.f32.s32.to.zero.pseudo %v543
        %v564 = vcvt.f32.s32.to.zero.pseudo %v544
        %v565 = vcvt.f32.s32.to.zero.pseudo %v545
        %v566 = vcvt.f32.s32.to.zero.pseudo %v546
        %v567 = vcvt.f32.s32.to.zero.pseudo %v547
        %v568 = vcvt.f32.s32.to.zero.pseudo %v548
        %v569 = vcvt.f32.s32.to.zero.pseudo %v549
        %v570 = vcvt.f32.s32.to.zero.pseudo %v550
        %v571 = vcvt.f32.s32.to.zero.pseudo %v551
        %v572 = vcvt.f32.s32.to.zero.pseudo %v552
        %v573 = vcvt.f32.s32.to.zero.pseudo %v553
        %v574 = vcvt.f32.s32.to.zero.pseudo %v554
        %v575 = vcvt.f32.s32.to.zero.pseudo %v555
        %v576 = vcvt.f32.s32.to.zero.pseudo %v556
        %v577 = vcvt.f32.s32.to.zero.pseudo %v557
        %v578 = vmul.u32 %v558, 16
        %v579 = vmul.u32 %v559, 16
        %v580 = vmul.u32 %v560, 16
        %v581 = vmul.u32 %v561, 16
        %v582 = vmul.u32 %v562, 16
        %v583 = vmul.u32 %v563, 16
        %v584 = vmul.u32 %v564, 16
        %v585 = vmul.u32 %v565, 16
        %v586 = vmul.u32 %v566, 16
        %v587 = vmul.u32 %v567, 16
        %v588 = vmul.u32 %v568, 16
        %v589 = vmul.u32 %v569, 16
        %v590 = vmul.u32 %v570, 16
        %v591 = vmul.u32 %v571, 16
        %v592 = vmul.u32 %v572, 16
        %v593 = vmul.u32 %v573, 16
        %v594 = vmul.u32 %v574, 16
        %v595 = vmul.u32 %v575, 16
        %v596 = vmul.u32 %v576, 16
        %v597 = vmul.u32 %v577, 16
        %v598 = vsub.s32 %v451, %v578
        %v599 = vsub.s32 %v452, %v579
        %v600 = vsub.s32 %v453, %v580
        %v601 = vsub.s32 %v454, %v581
        %v602 = vsub.s32 %v455, %v582
        %v603 = vsub.s32 %v456, %v583
        %v604 = vsub.s32 %v457, %v584
        %v605 = vsub.s32 %v458, %v585
        %v606 = vsub.s32 %v459, %v586
        %v607 = vsub.s32 %v460, %v587
        %v608 = vsub.s32 %v461, %v588
        %v609 = vsub.s32 %v462, %v589
        %v610 = vsub.s32 %v463, %v590
        %v611 = vsub.s32 %v464, %v591
        %v612 = vsub.s32 %v465, %v592
        %v613 = vsub.s32 %v466, %v593
        %v614 = vsub.s32 %v467, %v594
        %v615 = vsub.s32 %v468, %v595
        %v616 = vsub.s32 %v469, %v596
        %v617 = vsub.s32 %v470, %v597
        %vm618 = vcmp.lt.s32.totalorder %v558, 8
        %vm619 = vcmp.lt.s32.totalorder %v559, 8
        %vm620 = vcmp.lt.s32.totalorder %v560, 8
        %vm621 = vcmp.lt.s32.totalorder %v561, 8
        %vm622 = vcmp.lt.s32.totalorder %v562, 8
        %vm623 = vcmp.lt.s32.totalorder %v563, 8
        %vm624 = vcmp.lt.s32.totalorder %v564, 8
        %vm625 = vcmp.lt.s32.totalorder %v565, 8
        %vm626 = vcmp.lt.s32.totalorder %v566, 8
        %vm627 = vcmp.lt.s32.totalorder %v567, 8
        %vm628 = vcmp.lt.s32.totalorder %v568, 8
        %vm629 = vcmp.lt.s32.totalorder %v569, 8
        %vm630 = vcmp.lt.s32.totalorder %v570, 8
        %vm631 = vcmp.lt.s32.totalorder %v571, 8
        %vm632 = vcmp.lt.s32.totalorder %v572, 8
        %vm633 = vcmp.lt.s32.totalorder %v573, 8
        %vm634 = vcmp.lt.s32.totalorder %v574, 8
        %vm635 = vcmp.lt.s32.totalorder %v575, 8
        %vm636 = vcmp.lt.s32.totalorder %v576, 8
        %vm637 = vcmp.lt.s32.totalorder %v577, 8
        %vm638 = vcmp.lt.s32.totalorder %v598, 8
        %vm639 = vcmp.lt.s32.totalorder %v599, 8
        %vm640 = vcmp.lt.s32.totalorder %v600, 8
        %vm641 = vcmp.lt.s32.totalorder %v601, 8
        %vm642 = vcmp.lt.s32.totalorder %v602, 8
        %vm643 = vcmp.lt.s32.totalorder %v603, 8
        %vm644 = vcmp.lt.s32.totalorder %v604, 8
        %vm645 = vcmp.lt.s32.totalorder %v605, 8
        %vm646 = vcmp.lt.s32.totalorder %v606, 8
        %vm647 = vcmp.lt.s32.totalorder %v607, 8
        %vm648 = vcmp.lt.s32.totalorder %v608, 8
        %vm649 = vcmp.lt.s32.totalorder %v609, 8
        %vm650 = vcmp.lt.s32.totalorder %v610, 8
        %vm651 = vcmp.lt.s32.totalorder %v611, 8
        %vm652 = vcmp.lt.s32.totalorder %v612, 8
        %vm653 = vcmp.lt.s32.totalorder %v613, 8
        %vm654 = vcmp.lt.s32.totalorder %v614, 8
        %vm655 = vcmp.lt.s32.totalorder %v615, 8
        %vm656 = vcmp.lt.s32.totalorder %v616, 8
        %vm657 = vcmp.lt.s32.totalorder %v617, 8
        %vm658 = vmand %vm618, %vm638
        %vm659 = vmand %vm619, %vm639
        %vm660 = vmand %vm620, %vm640
        %vm661 = vmand %vm621, %vm641
        %vm662 = vmand %vm622, %vm642
        %vm663 = vmand %vm623, %vm643
        %vm664 = vmand %vm624, %vm644
        %vm665 = vmand %vm625, %vm645
        %vm666 = vmand %vm626, %vm646
        %vm667 = vmand %vm627, %vm647
        %vm668 = vmand %vm628, %vm648
        %vm669 = vmand %vm629, %vm649
        %vm670 = vmand %vm630, %vm650
        %vm671 = vmand %vm631, %vm651
        %vm672 = vmand %vm632, %vm652
        %vm673 = vmand %vm633, %vm653
        %vm674 = vmand %vm634, %vm654
        %vm675 = vmand %vm635, %vm655
        %vm676 = vmand %vm636, %vm656
        %vm677 = vmand %vm637, %vm657
        %v678 = vsel %vm658, 1, 0
        %v679 = vsel %vm659, 1, 0
        %v680 = vsel %vm660, 1, 0
        %v681 = vsel %vm661, 1, 0
        %v682 = vsel %vm662, 1, 0
        %v683 = vsel %vm663, 1, 0
        %v684 = vsel %vm664, 1, 0
        %v685 = vsel %vm665, 1, 0
        %v686 = vsel %vm666, 1, 0
        %v687 = vsel %vm667, 1, 0
        %v688 = vsel %vm668, 1, 0
        %v689 = vsel %vm669, 1, 0
        %v690 = vsel %vm670, 1, 0
        %v691 = vsel %vm671, 1, 0
        %v692 = vsel %vm672, 1, 0
        %v693 = vsel %vm673, 1, 0
        %v694 = vsel %vm674, 1, 0
        %v695 = vsel %vm675, 1, 0
        %v696 = vsel %vm676, 1, 0
        %v697 = vsel %vm677, 1, 0
        %v698 = vcvt.s32.f32 %v678
        %v699 = vcvt.s32.f32 %v679
        %v700 = vcvt.s32.f32 %v680
        %v701 = vcvt.s32.f32 %v681
        %v702 = vcvt.s32.f32 %v682
        %v703 = vcvt.s32.f32 %v683
        %v704 = vcvt.s32.f32 %v684
        %v705 = vcvt.s32.f32 %v685
        %v706 = vcvt.s32.f32 %v686
        %v707 = vcvt.s32.f32 %v687
        %v708 = vcvt.s32.f32 %v688
        %v709 = vcvt.s32.f32 %v689
        %v710 = vcvt.s32.f32 %v690
        %v711 = vcvt.s32.f32 %v691
        %v712 = vcvt.s32.f32 %v692
        %v713 = vcvt.s32.f32 %v693
        %v714 = vcvt.s32.f32 %v694
        %v715 = vcvt.s32.f32 %v695
        %v716 = vcvt.s32.f32 %v696
        %v717 = vcvt.s32.f32 %v697
        %v718 = vpack.c.bf16 %v427, %v426
        %v719 = vpack.c.bf16 %v429, %v428
        %v720 = vpack.c.bf16 %v431, %v430
        %v721 = vpack.c.bf16 %v433, %v432
        %v722 = vpack.c.bf16 %v435, %v434
        %v723 = vpack.c.bf16 %v437, %v436
        %v724 = vpack.c.bf16 %v439, %v438
        %v725 = vpack.c.bf16 %v441, %v440
        %v726 = vpack.c.bf16 %v443, %v442
        %v727 = vpack.c.bf16 %v445, %v444
        %v728 = vld [vmem:[#allocation8] sm:$0xf]
        %v729 = vld [vmem:[#allocation8 + $0x4] sm:$0xf]
        %v730 = vld [vmem:[#allocation8 + $0x8] sm:$0xf]
        %v731 = vld [vmem:[#allocation8 + $0xc] sm:$0xf]
        %v732 = vld [vmem:[#allocation8 + $0x10] sm:$0xf]
        %v733 = vld [vmem:[#allocation8 + $0x14] sm:$0xf]
        %v734 = vld [vmem:[#allocation8 + $0x18] sm:$0xf]
        %v735 = vld [vmem:[#allocation8 + $0x1c] sm:$0xf]
        %v736 = vld [vmem:[#allocation8 + $0x20] sm:$0xf]
        %v737 = vld [vmem:[#allocation8 + $0x24] sm:$0xf]
        %v738 = vld [vmem:[#allocation8 + $0x28] sm:$0xf]
        %v739 = vld [vmem:[#allocation8 + $0x2c] sm:$0xf]
        %v740 = vld [vmem:[#allocation8 + $0x30] sm:$0xf]
        %v741 = vld [vmem:[#allocation8 + $0x34] sm:$0xf]
        %v742 = vld [vmem:[#allocation8 + $0x38] sm:$0xf]
        %v743 = vld [vmem:[#allocation8 + $0x3c] sm:$0xf]
        %v744 = vrot.slane %v426, 1
        %v745 = vrot.slane %v427, 1
        %v746 = vrot.slane %v428, 1
        %v747 = vrot.slane %v429, 1
        %v748 = vrot.slane %v430, 1
        %v749 = vrot.slane %v431, 1
        %v750 = vrot.slane %v432, 1
        %v751 = vrot.slane %v433, 1
        %v752 = vrot.slane %v434, 1
        %v753 = vrot.slane %v435, 1
        %v754 = vrot.slane %v436, 1
        %v755 = vrot.slane %v437, 1
        %v756 = vrot.slane %v438, 1
        %v757 = vrot.slane %v439, 1
        %v758 = vrot.slane %v440, 1
        %v759 = vrot.slane %v441, 1
        %v760 = vrot.slane %v442, 1
        %v761 = vrot.slane %v443, 1
        %v762 = vrot.slane %v444, 1
        %v763 = vrot.slane %v445, 1
        %vm764 = vcmp.lt.s32.totalorder %v451, 7
        %v765 = vsel %vm764, %v762, %v763
        %v766 = vsel %vm764, %v761, %v762
        %v767 = vsel %vm764, %v760, %v761
        %v768 = vsel %vm764, %v759, %v760
        %v769 = vsel %vm764, %v758, %v759
        %v770 = vsel %vm764, %v757, %v758
        %v771 = vsel %vm764, %v756, %v757
        %v772 = vsel %vm764, %v755, %v756
        %v773 = vsel %vm764, %v754, %v755
        %v774 = vsel %vm764, %v753, %v754
        %v775 = vsel %vm764, %v752, %v753
        %v776 = vsel %vm764, %v751, %v752
        %v777 = vsel %vm764, %v750, %v751
        %v778 = vsel %vm764, %v749, %v750
        %v779 = vsel %vm764, %v748, %v749
        %v780 = vsel %vm764, %v747, %v748
        %v781 = vsel %vm764, %v746, %v747
        %v782 = vsel %vm764, %v745, %v746
        %v783 = vsel %vm764, %v744, %v745
        %v784 = vsel %vm764, %v763, %v744
        %v785 = vpack.c.bf16 %v782, %v783
        %v786 = vpack.c.bf16 %v780, %v781
        %v787 = vpack.c.bf16 %v778, %v779
        %v788 = vpack.c.bf16 %v776, %v777
        %v789 = vpack.c.bf16 %v774, %v775
        %v790 = vpack.c.bf16 %v772, %v773
        %v791 = vpack.c.bf16 %v770, %v771
        %v792 = vpack.c.bf16 %v768, %v769
        %v793 = vpack.c.bf16 %v766, %v767
        %v794 = vpack.c.bf16 %v784, %v765
        %s795 = scalar_lea.vmem [#allocation8], 64
        %v796 = vld [vmem:[%s795] sm:$0xf]
        %v797 = vld [vmem:[%s795 + $0x4] sm:$0xf]
        %v798 = vld [vmem:[%s795 + $0x8] sm:$0xf]
        %v799 = vld [vmem:[%s795 + $0xc] sm:$0xf]
        %v800 = vld [vmem:[%s795 + $0x10] sm:$0xf]
        %v801 = vld [vmem:[%s795 + $0x14] sm:$0xf]
        %v802 = vld [vmem:[%s795 + $0x18] sm:$0xf]
        %v803 = vld [vmem:[%s795 + $0x1c] sm:$0xf]
        %v804 = vld [vmem:[%s795 + $0x20] sm:$0xf]
        %v805 = vld [vmem:[%s795 + $0x24] sm:$0xf]
        %v806 = vld [vmem:[%s795 + $0x28] sm:$0xf]
        %v807 = vld [vmem:[%s795 + $0x2c] sm:$0xf]
        %v808 = vld [vmem:[%s795 + $0x30] sm:$0xf]
        %v809 = vld [vmem:[%s795 + $0x34] sm:$0xf]
        %v810 = vld [vmem:[%s795 + $0x38] sm:$0xf]
        %v811 = vld [vmem:[%s795 + $0x3c] sm:$0xf]
        %v828 = vunpack.c.l.b16 %v796
        %v829 = vunpack.c.l.b16 %v797
        %v830 = vunpack.c.l.b16 %v798
        %v831 = vunpack.c.l.b16 %v799
        %v832 = vunpack.c.l.b16 %v800
        %v833 = vunpack.c.l.b16 %v801
        %v834 = vunpack.c.l.b16 %v802
        %v835 = vunpack.c.l.b16 %v803
        %v836 = vunpack.c.l.b16 %v804
        %v837 = vunpack.c.l.b16 %v805
        %v838 = vunpack.c.l.b16 %v806
        %v839 = vunpack.c.l.b16 %v807
        %v840 = vunpack.c.l.b16 %v808
        %v841 = vunpack.c.l.b16 %v809
        %v842 = vunpack.c.l.b16 %v810
        %v843 = vunpack.c.l.b16 %v811
        %v844 = vpack.c.b16 %v829, %v828
        %v845 = vpack.c.b16 %v831, %v830
        %v846 = vpack.c.b16 %v833, %v832
        %v847 = vpack.c.b16 %v835, %v834
        %v848 = vpack.c.b16 %v837, %v836
        %v849 = vpack.c.b16 %v839, %v838
        %v850 = vpack.c.b16 %v841, %v840
        %v851 = vpack.c.b16 %v843, %v842
        %860 = vmatpush.bf16.msra.mxu0 %v851
        %861 = vmatpush.bf16.msra.mxu0 %v850
        %862 = vmatpush.bf16.msra.mxu0 %v849
        %863 = vmatpush.bf16.msra.mxu0 %v848
        %864 = vmatpush.bf16.msra.mxu0 %v847
        %865 = vmatpush.bf16.msra.mxu0 %v846
        %866 = vmatpush.bf16.msra.mxu0 %v845
        %867 = vmatpush.bf16.msra.mxu0 %v844
        %868 = vmatmul.bf16.gmra.mxu0 %v785
        %v869 = vpop.f32.mrf.mxu0
        %v870 = vadd.f32 0.0, %v869
        %v871 = vpop.f32.mrf.mxu0
        %v872 = vadd.f32 0.0, %v871
        %873 = vmatmul.bf16.gmra.mxu0 %v786
        %v874 = vpop.f32.mrf.mxu0
        %v875 = vadd.f32 0.0, %v874
        %v876 = vpop.f32.mrf.mxu0
        %v877 = vadd.f32 0.0, %v876
        %878 = vmatmul.bf16.gmra.mxu0 %v787
        %v879 = vpop.f32.mrf.mxu0
        %v880 = vadd.f32 0.0, %v879
        %v881 = vpop.f32.mrf.mxu0
        %v882 = vadd.f32 0.0, %v881
        %883 = vmatmul.bf16.gmra.mxu0 %v788
        %v884 = vpop.f32.mrf.mxu0
        %v885 = vadd.f32 0.0, %v884
        %v886 = vpop.f32.mrf.mxu0
        %v887 = vadd.f32 0.0, %v886
        %888 = vmatmul.bf16.gmra.mxu0 %v789
        %v889 = vpop.f32.mrf.mxu0
        %v890 = vadd.f32 0.0, %v889
        %v891 = vpop.f32.mrf.mxu0
        %v892 = vadd.f32 0.0, %v891
        %893 = vmatmul.bf16.gmra.mxu0 %v790
        %v894 = vpop.f32.mrf.mxu0
        %v895 = vadd.f32 0.0, %v894
        %v896 = vpop.f32.mrf.mxu0
        %v897 = vadd.f32 0.0, %v896
        %898 = vmatmul.bf16.gmra.mxu0 %v791
        %v899 = vpop.f32.mrf.mxu0
        %v900 = vadd.f32 0.0, %v899
        %v901 = vpop.f32.mrf.mxu0
        %v902 = vadd.f32 0.0, %v901
        %903 = vmatmul.bf16.gmra.mxu0 %v792
        %v904 = vpop.f32.mrf.mxu0
        %v905 = vadd.f32 0.0, %v904
        %v906 = vpop.f32.mrf.mxu0
        %v907 = vadd.f32 0.0, %v906
        %908 = vmatmul.bf16.gmra.mxu0 %v793
        %v909 = vpop.f32.mrf.mxu0
        %v910 = vadd.f32 0.0, %v909
        %v911 = vpop.f32.mrf.mxu0
        %v912 = vadd.f32 0.0, %v911
        %913 = vmatmul.bf16.gmra.mxu0 %v794
        %v914 = vpop.f32.mrf.mxu0
        %v915 = vadd.f32 0.0, %v914
        %v916 = vpop.f32.mrf.mxu0
        %v917 = vadd.f32 0.0, %v916
        %918 = vdwg.mxu0
        %v935 = vunpack.c.l.b16 %v728
        %v936 = vunpack.c.l.b16 %v729
        %v937 = vunpack.c.l.b16 %v730
        %v938 = vunpack.c.l.b16 %v731
        %v939 = vunpack.c.l.b16 %v732
        %v940 = vunpack.c.l.b16 %v733
        %v941 = vunpack.c.l.b16 %v734
        %v942 = vunpack.c.l.b16 %v735
        %v943 = vunpack.c.l.b16 %v736
        %v944 = vunpack.c.l.b16 %v737
        %v945 = vunpack.c.l.b16 %v738
        %v946 = vunpack.c.l.b16 %v739
        %v947 = vunpack.c.l.b16 %v740
        %v948 = vunpack.c.l.b16 %v741
        %v949 = vunpack.c.l.b16 %v742
        %v950 = vunpack.c.l.b16 %v743
        %v951 = vpack.c.b16 %v936, %v935
        %v952 = vpack.c.b16 %v938, %v937
        %v953 = vpack.c.b16 %v940, %v939
        %v954 = vpack.c.b16 %v942, %v941
        %v955 = vpack.c.b16 %v944, %v943
        %v956 = vpack.c.b16 %v946, %v945
        %v957 = vpack.c.b16 %v948, %v947
        %v958 = vpack.c.b16 %v950, %v949
        %967 = vmatpush.bf16.msra.mxu0 %v958
        %968 = vmatpush.bf16.msra.mxu0 %v957
        %969 = vmatpush.bf16.msra.mxu0 %v956
        %970 = vmatpush.bf16.msra.mxu0 %v955
        %971 = vmatpush.bf16.msra.mxu0 %v954
        %972 = vmatpush.bf16.msra.mxu0 %v953
        %973 = vmatpush.bf16.msra.mxu0 %v952
        %974 = vmatpush.bf16.msra.mxu0 %v951
        %975 = vmatmul.bf16.gmra.mxu0 %v718
        %v976 = vpop.f32.mrf.mxu0
        %v977 = vadd.f32 %v870, %v976
        %v978 = vpop.f32.mrf.mxu0
        %v979 = vadd.f32 %v872, %v978
        %980 = vmatmul.bf16.gmra.mxu0 %v719
        %v981 = vpop.f32.mrf.mxu0
        %v982 = vadd.f32 %v875, %v981
        %v983 = vpop.f32.mrf.mxu0
        %v984 = vadd.f32 %v877, %v983
        %985 = vmatmul.bf16.gmra.mxu0 %v720
        %v986 = vpop.f32.mrf.mxu0
        %v987 = vadd.f32 %v880, %v986
        %v988 = vpop.f32.mrf.mxu0
        %v989 = vadd.f32 %v882, %v988
        %990 = vmatmul.bf16.gmra.mxu0 %v721
        %v991 = vpop.f32.mrf.mxu0
        %v992 = vadd.f32 %v885, %v991
        %v993 = vpop.f32.mrf.mxu0
        %v994 = vadd.f32 %v887, %v993
        %995 = vmatmul.bf16.gmra.mxu0 %v722
        %v996 = vpop.f32.mrf.mxu0
        %v997 = vadd.f32 %v890, %v996
        %v998 = vpop.f32.mrf.mxu0
        %v999 = vadd.f32 %v892, %v998
        %1000 = vmatmul.bf16.gmra.mxu0 %v723
        %v1001 = vpop.f32.mrf.mxu0
        %v1002 = vadd.f32 %v895, %v1001
        %v1003 = vpop.f32.mrf.mxu0
        %v1004 = vadd.f32 %v897, %v1003
        %1005 = vmatmul.bf16.gmra.mxu0 %v724
        %v1006 = vpop.f32.mrf.mxu0
        %v1007 = vadd.f32 %v900, %v1006
        %v1008 = vpop.f32.mrf.mxu0
        %v1009 = vadd.f32 %v902, %v1008
        %1010 = vmatmul.bf16.gmra.mxu0 %v725
        %v1011 = vpop.f32.mrf.mxu0
        %v1012 = vadd.f32 %v905, %v1011
        %v1013 = vpop.f32.mrf.mxu0
        %v1014 = vadd.f32 %v907, %v1013
        %1015 = vmatmul.bf16.gmra.mxu0 %v726
        %v1016 = vpop.f32.mrf.mxu0
        %v1017 = vadd.f32 %v910, %v1016
        %v1018 = vpop.f32.mrf.mxu0
        %v1019 = vadd.f32 %v912, %v1018
        %1020 = vmatmul.bf16.gmra.mxu0 %v727
        %v1021 = vpop.f32.mrf.mxu0
        %v1022 = vadd.f32 %v915, %v1021
        %v1023 = vpop.f32.mrf.mxu0
        %v1024 = vadd.f32 %v917, %v1023
        %1025 = vdwg.mxu0
        %v1026 = vrot.slane %v426, 2
        %v1027 = vrot.slane %v427, 2
        %v1028 = vrot.slane %v428, 2
        %v1029 = vrot.slane %v429, 2
        %v1030 = vrot.slane %v430, 2
        %v1031 = vrot.slane %v431, 2
        %v1032 = vrot.slane %v432, 2
        %v1033 = vrot.slane %v433, 2
        %v1034 = vrot.slane %v434, 2
        %v1035 = vrot.slane %v435, 2
        %v1036 = vrot.slane %v436, 2
        %v1037 = vrot.slane %v437, 2
        %v1038 = vrot.slane %v438, 2
        %v1039 = vrot.slane %v439, 2
        %v1040 = vrot.slane %v440, 2
        %v1041 = vrot.slane %v441, 2
        %v1042 = vrot.slane %v442, 2
        %v1043 = vrot.slane %v443, 2
        %v1044 = vrot.slane %v444, 2
        %v1045 = vrot.slane %v445, 2
        %vm1046 = vcmp.lt.s32.totalorder %v451, 6
        %v1047 = vsel %vm1046, %v1044, %v1045
        %v1048 = vsel %vm1046, %v1043, %v1044
        %v1049 = vsel %vm1046, %v1042, %v1043
        %v1050 = vsel %vm1046, %v1041, %v1042
        %v1051 = vsel %vm1046, %v1040, %v1041
        %v1052 = vsel %vm1046, %v1039, %v1040
        %v1053 = vsel %vm1046, %v1038, %v1039
        %v1054 = vsel %vm1046, %v1037, %v1038
        %v1055 = vsel %vm1046, %v1036, %v1037
        %v1056 = vsel %vm1046, %v1035, %v1036
        %v1057 = vsel %vm1046, %v1034, %v1035
        %v1058 = vsel %vm1046, %v1033, %v1034
        %v1059 = vsel %vm1046, %v1032, %v1033
        %v1060 = vsel %vm1046, %v1031, %v1032
        %v1061 = vsel %vm1046, %v1030, %v1031
        %v1062 = vsel %vm1046, %v1029, %v1030
        %v1063 = vsel %vm1046, %v1028, %v1029
        %v1064 = vsel %vm1046, %v1027, %v1028
        %v1065 = vsel %vm1046, %v1026, %v1027
        %v1066 = vsel %vm1046, %v1045, %v1026
        %v1067 = vpack.c.bf16 %v1064, %v1065
        %v1068 = vpack.c.bf16 %v1062, %v1063
        %v1069 = vpack.c.bf16 %v1060, %v1061
        %v1070 = vpack.c.bf16 %v1058, %v1059
        %v1071 = vpack.c.bf16 %v1056, %v1057
        %v1072 = vpack.c.bf16 %v1054, %v1055
        %v1073 = vpack.c.bf16 %v1052, %v1053
        %v1074 = vpack.c.bf16 %v1050, %v1051
        %v1075 = vpack.c.bf16 %v1048, %v1049
        %v1076 = vpack.c.bf16 %v1066, %v1047
        %s1077 = scalar_lea.vmem [#allocation8], 128
        %v1078 = vld [vmem:[%s1077] sm:$0xf]
        %v1079 = vld [vmem:[%s1077 + $0x4] sm:$0xf]
        %v1080 = vld [vmem:[%s1077 + $0x8] sm:$0xf]
        %v1081 = vld [vmem:[%s1077 + $0xc] sm:$0xf]
        %v1082 = vld [vmem:[%s1077 + $0x10] sm:$0xf]
        %v1083 = vld [vmem:[%s1077 + $0x14] sm:$0xf]
        %v1084 = vld [vmem:[%s1077 + $0x18] sm:$0xf]
        %v1085 = vld [vmem:[%s1077 + $0x1c] sm:$0xf]
        %v1086 = vld [vmem:[%s1077 + $0x20] sm:$0xf]
        %v1087 = vld [vmem:[%s1077 + $0x24] sm:$0xf]
        %v1088 = vld [vmem:[%s1077 + $0x28] sm:$0xf]
        %v1089 = vld [vmem:[%s1077 + $0x2c] sm:$0xf]
        %v1090 = vld [vmem:[%s1077 + $0x30] sm:$0xf]
        %v1091 = vld [vmem:[%s1077 + $0x34] sm:$0xf]
        %v1092 = vld [vmem:[%s1077 + $0x38] sm:$0xf]
        %v1093 = vld [vmem:[%s1077 + $0x3c] sm:$0xf]
        %v1110 = vunpack.c.l.b16 %v1078
        %v1111 = vunpack.c.l.b16 %v1079
        %v1112 = vunpack.c.l.b16 %v1080
        %v1113 = vunpack.c.l.b16 %v1081
        %v1114 = vunpack.c.l.b16 %v1082
        %v1115 = vunpack.c.l.b16 %v1083
        %v1116 = vunpack.c.l.b16 %v1084
        %v1117 = vunpack.c.l.b16 %v1085
        %v1118 = vunpack.c.l.b16 %v1086
        %v1119 = vunpack.c.l.b16 %v1087
        %v1120 = vunpack.c.l.b16 %v1088
        %v1121 = vunpack.c.l.b16 %v1089
        %v1122 = vunpack.c.l.b16 %v1090
        %v1123 = vunpack.c.l.b16 %v1091
        %v1124 = vunpack.c.l.b16 %v1092
        %v1125 = vunpack.c.l.b16 %v1093
        %v1126 = vpack.c.b16 %v1111, %v1110
        %v1127 = vpack.c.b16 %v1113, %v1112
        %v1128 = vpack.c.b16 %v1115, %v1114
        %v1129 = vpack.c.b16 %v1117, %v1116
        %v1130 = vpack.c.b16 %v1119, %v1118
        %v1131 = vpack.c.b16 %v1121, %v1120
        %v1132 = vpack.c.b16 %v1123, %v1122
        %v1133 = vpack.c.b16 %v1125, %v1124
        %1142 = vmatpush.bf16.msra.mxu0 %v1133
        %1143 = vmatpush.bf16.msra.mxu0 %v1132
        %1144 = vmatpush.bf16.msra.mxu0 %v1131
        %1145 = vmatpush.bf16.msra.mxu0 %v1130
        %1146 = vmatpush.bf16.msra.mxu0 %v1129
        %1147 = vmatpush.bf16.msra.mxu0 %v1128
        %1148 = vmatpush.bf16.msra.mxu0 %v1127
        %1149 = vmatpush.bf16.msra.mxu0 %v1126
        %1150 = vmatmul.bf16.gmra.mxu0 %v1067
        %v1151 = vpop.f32.mrf.mxu0
        %v1152 = vadd.f32 0.0, %v1151
        %v1153 = vpop.f32.mrf.mxu0
        %v1154 = vadd.f32 0.0, %v1153
        %1155 = vmatmul.bf16.gmra.mxu0 %v1068
        %v1156 = vpop.f32.mrf.mxu0
        %v1157 = vadd.f32 0.0, %v1156
        %v1158 = vpop.f32.mrf.mxu0
        %v1159 = vadd.f32 0.0, %v1158
        %1160 = vmatmul.bf16.gmra.mxu0 %v1069
        %v1161 = vpop.f32.mrf.mxu0
        %v1162 = vadd.f32 0.0, %v1161
        %v1163 = vpop.f32.mrf.mxu0
        %v1164 = vadd.f32 0.0, %v1163
        %1165 = vmatmul.bf16.gmra.mxu0 %v1070
        %v1166 = vpop.f32.mrf.mxu0
        %v1167 = vadd.f32 0.0, %v1166
        %v1168 = vpop.f32.mrf.mxu0
        %v1169 = vadd.f32 0.0, %v1168
        %1170 = vmatmul.bf16.gmra.mxu0 %v1071
        %v1171 = vpop.f32.mrf.mxu0
        %v1172 = vadd.f32 0.0, %v1171
        %v1173 = vpop.f32.mrf.mxu0
        %v1174 = vadd.f32 0.0, %v1173
        %1175 = vmatmul.bf16.gmra.mxu0 %v1072
        %v1176 = vpop.f32.mrf.mxu0
        %v1177 = vadd.f32 0.0, %v1176
        %v1178 = vpop.f32.mrf.mxu0
        %v1179 = vadd.f32 0.0, %v1178
        %1180 = vmatmul.bf16.gmra.mxu0 %v1073
        %v1181 = vpop.f32.mrf.mxu0
        %v1182 = vadd.f32 0.0, %v1181
        %v1183 = vpop.f32.mrf.mxu0
        %v1184 = vadd.f32 0.0, %v1183
        %1185 = vmatmul.bf16.gmra.mxu0 %v1074
        %v1186 = vpop.f32.mrf.mxu0
        %v1187 = vadd.f32 0.0, %v1186
        %v1188 = vpop.f32.mrf.mxu0
        %v1189 = vadd.f32 0.0, %v1188
        %1190 = vmatmul.bf16.gmra.mxu0 %v1075
        %v1191 = vpop.f32.mrf.mxu0
        %v1192 = vadd.f32 0.0, %v1191
        %v1193 = vpop.f32.mrf.mxu0
        %v1194 = vadd.f32 0.0, %v1193
        %1195 = vmatmul.bf16.gmra.mxu0 %v1076
        %v1196 = vpop.f32.mrf.mxu0
        %v1197 = vadd.f32 0.0, %v1196
        %v1198 = vpop.f32.mrf.mxu0
        %v1199 = vadd.f32 0.0, %v1198
        %1200 = vdwg.mxu0
        %v1201 = vadd.f32 %v977, %v1152
        %v1202 = vadd.f32 %v979, %v1154
        %v1203 = vadd.f32 %v982, %v1157
        %v1204 = vadd.f32 %v984, %v1159
        %v1205 = vadd.f32 %v987, %v1162
        %v1206 = vadd.f32 %v989, %v1164
        %v1207 = vadd.f32 %v992, %v1167
        %v1208 = vadd.f32 %v994, %v1169
        %v1209 = vadd.f32 %v997, %v1172
        %v1210 = vadd.f32 %v999, %v1174
        %v1211 = vadd.f32 %v1002, %v1177
        %v1212 = vadd.f32 %v1004, %v1179
        %v1213 = vadd.f32 %v1007, %v1182
        %v1214 = vadd.f32 %v1009, %v1184
        %v1215 = vadd.f32 %v1012, %v1187
        %v1216 = vadd.f32 %v1014, %v1189
        %v1217 = vadd.f32 %v1017, %v1192
        %v1218 = vadd.f32 %v1019, %v1194
        %v1219 = vadd.f32 %v1022, %v1197
        %v1220 = vadd.f32 %v1024, %v1199
        %s1221 = scalar_lea.vmem [#allocation8], 192
        %v1222 = vld [vmem:[%s1221] sm:$0xf]
        %v1223 = vld [vmem:[%s1221 + $0x4] sm:$0xf]
        %v1224 = vld [vmem:[%s1221 + $0x8] sm:$0xf]
        %v1225 = vld [vmem:[%s1221 + $0xc] sm:$0xf]
        %v1226 = vld [vmem:[%s1221 + $0x10] sm:$0xf]
        %v1227 = vld [vmem:[%s1221 + $0x14] sm:$0xf]
        %v1228 = vld [vmem:[%s1221 + $0x18] sm:$0xf]
        %v1229 = vld [vmem:[%s1221 + $0x1c] sm:$0xf]
        %v1230 = vld [vmem:[%s1221 + $0x20] sm:$0xf]
        %v1231 = vld [vmem:[%s1221 + $0x24] sm:$0xf]
        %v1232 = vld [vmem:[%s1221 + $0x28] sm:$0xf]
        %v1233 = vld [vmem:[%s1221 + $0x2c] sm:$0xf]
        %v1234 = vld [vmem:[%s1221 + $0x30] sm:$0xf]
        %v1235 = vld [vmem:[%s1221 + $0x34] sm:$0xf]
        %v1236 = vld [vmem:[%s1221 + $0x38] sm:$0xf]
        %v1237 = vld [vmem:[%s1221 + $0x3c] sm:$0xf]
        %v1254 = vunpack.c.l.b16 %v1222
        %v1255 = vunpack.c.l.b16 %v1223
        %v1256 = vunpack.c.l.b16 %v1224
        %v1257 = vunpack.c.l.b16 %v1225
        %v1258 = vunpack.c.l.b16 %v1226
        %v1259 = vunpack.c.l.b16 %v1227
        %v1260 = vunpack.c.l.b16 %v1228
        %v1261 = vunpack.c.l.b16 %v1229
        %v1262 = vunpack.c.l.b16 %v1230
        %v1263 = vunpack.c.l.b16 %v1231
        %v1264 = vunpack.c.l.b16 %v1232
        %v1265 = vunpack.c.l.b16 %v1233
        %v1266 = vunpack.c.l.b16 %v1234
        %v1267 = vunpack.c.l.b16 %v1235
        %v1268 = vunpack.c.l.b16 %v1236
        %v1269 = vunpack.c.l.b16 %v1237
        %v1270 = vpack.c.b16 %v1255, %v1254
        %v1271 = vpack.c.b16 %v1257, %v1256
        %v1272 = vpack.c.b16 %v1259, %v1258
        %v1273 = vpack.c.b16 %v1261, %v1260
        %v1274 = vpack.c.b16 %v1263, %v1262
        %v1275 = vpack.c.b16 %v1265, %v1264
        %v1276 = vpack.c.b16 %v1267, %v1266
        %v1277 = vpack.c.b16 %v1269, %v1268
        %1286 = vmatpush.bf16.msra.mxu0 %v1277
        %1287 = vmatpush.bf16.msra.mxu0 %v1276
        %1288 = vmatpush.bf16.msra.mxu0 %v1275
        %1289 = vmatpush.bf16.msra.mxu0 %v1274
        %1290 = vmatpush.bf16.msra.mxu0 %v1273
        %1291 = vmatpush.bf16.msra.mxu0 %v1272
        %1292 = vmatpush.bf16.msra.mxu0 %v1271
        %1293 = vmatpush.bf16.msra.mxu0 %v1270
        %1294 = vmatmul.bf16.gmra.mxu0 %v719
        %v1295 = vpop.f32.mrf.mxu0
        %v1296 = vadd.f32 0.0, %v1295
        %v1297 = vpop.f32.mrf.mxu0
        %v1298 = vadd.f32 0.0, %v1297
        %1299 = vmatmul.bf16.gmra.mxu0 %v720
        %v1300 = vpop.f32.mrf.mxu0
        %v1301 = vadd.f32 0.0, %v1300
        %v1302 = vpop.f32.mrf.mxu0
        %v1303 = vadd.f32 0.0, %v1302
        %1304 = vmatmul.bf16.gmra.mxu0 %v721
        %v1305 = vpop.f32.mrf.mxu0
        %v1306 = vadd.f32 0.0, %v1305
        %v1307 = vpop.f32.mrf.mxu0
        %v1308 = vadd.f32 0.0, %v1307
        %1309 = vmatmul.bf16.gmra.mxu0 %v722
        %v1310 = vpop.f32.mrf.mxu0
        %v1311 = vadd.f32 0.0, %v1310
        %v1312 = vpop.f32.mrf.mxu0
        %v1313 = vadd.f32 0.0, %v1312
        %1314 = vmatmul.bf16.gmra.mxu0 %v723
        %v1315 = vpop.f32.mrf.mxu0
        %v1316 = vadd.f32 0.0, %v1315
        %v1317 = vpop.f32.mrf.mxu0
        %v1318 = vadd.f32 0.0, %v1317
        %1319 = vmatmul.bf16.gmra.mxu0 %v724
        %v1320 = vpop.f32.mrf.mxu0
        %v1321 = vadd.f32 0.0, %v1320
        %v1322 = vpop.f32.mrf.mxu0
        %v1323 = vadd.f32 0.0, %v1322
        %1324 = vmatmul.bf16.gmra.mxu0 %v725
        %v1325 = vpop.f32.mrf.mxu0
        %v1326 = vadd.f32 0.0, %v1325
        %v1327 = vpop.f32.mrf.mxu0
        %v1328 = vadd.f32 0.0, %v1327
        %1329 = vmatmul.bf16.gmra.mxu0 %v726
        %v1330 = vpop.f32.mrf.mxu0
        %v1331 = vadd.f32 0.0, %v1330
        %v1332 = vpop.f32.mrf.mxu0
        %v1333 = vadd.f32 0.0, %v1332
        %1334 = vmatmul.bf16.gmra.mxu0 %v727
        %v1335 = vpop.f32.mrf.mxu0
        %v1336 = vadd.f32 0.0, %v1335
        %v1337 = vpop.f32.mrf.mxu0
        %v1338 = vadd.f32 0.0, %v1337
        %1339 = vmatmul.bf16.gmra.mxu0 %v718
        %v1340 = vpop.f32.mrf.mxu0
        %v1341 = vadd.f32 0.0, %v1340
        %v1342 = vpop.f32.mrf.mxu0
        %v1343 = vadd.f32 0.0, %v1342
        %1344 = vdwg.mxu0
        %v1345 = vadd.f32 %v1201, %v1296
        %v1346 = vadd.f32 %v1202, %v1298
        %v1347 = vadd.f32 %v1203, %v1301
        %v1348 = vadd.f32 %v1204, %v1303
        %v1349 = vadd.f32 %v1205, %v1306
        %v1350 = vadd.f32 %v1206, %v1308
        %v1351 = vadd.f32 %v1207, %v1311
        %v1352 = vadd.f32 %v1208, %v1313
        %v1353 = vadd.f32 %v1209, %v1316
        %v1354 = vadd.f32 %v1210, %v1318
        %v1355 = vadd.f32 %v1211, %v1321
        %v1356 = vadd.f32 %v1212, %v1323
        %v1357 = vadd.f32 %v1213, %v1326
        %v1358 = vadd.f32 %v1214, %v1328
        %v1359 = vadd.f32 %v1215, %v1331
        %v1360 = vadd.f32 %v1216, %v1333
        %v1361 = vadd.f32 %v1217, %v1336
        %v1362 = vadd.f32 %v1218, %v1338
        %v1363 = vadd.f32 %v1219, %v1341
        %v1364 = vadd.f32 %v1220, %v1343
        %s1365 = scalar_lea.vmem [#allocation8], 256
        %v1366 = vld [vmem:[%s1365] sm:$0xf]
        %v1367 = vld [vmem:[%s1365 + $0x4] sm:$0xf]
        %v1368 = vld [vmem:[%s1365 + $0x8] sm:$0xf]
        %v1369 = vld [vmem:[%s1365 + $0xc] sm:$0xf]
        %v1370 = vld [vmem:[%s1365 + $0x10] sm:$0xf]
        %v1371 = vld [vmem:[%s1365 + $0x14] sm:$0xf]
        %v1372 = vld [vmem:[%s1365 + $0x18] sm:$0xf]
        %v1373 = vld [vmem:[%s1365 + $0x1c] sm:$0xf]
        %v1374 = vld [vmem:[%s1365 + $0x20] sm:$0xf]
        %v1375 = vld [vmem:[%s1365 + $0x24] sm:$0xf]
        %v1376 = vld [vmem:[%s1365 + $0x28] sm:$0xf]
        %v1377 = vld [vmem:[%s1365 + $0x2c] sm:$0xf]
        %v1378 = vld [vmem:[%s1365 + $0x30] sm:$0xf]
        %v1379 = vld [vmem:[%s1365 + $0x34] sm:$0xf]
        %v1380 = vld [vmem:[%s1365 + $0x38] sm:$0xf]
        %v1381 = vld [vmem:[%s1365 + $0x3c] sm:$0xf]
        %v1398 = vunpack.c.l.b16 %v1366
        %v1399 = vunpack.c.l.b16 %v1367
        %v1400 = vunpack.c.l.b16 %v1368
        %v1401 = vunpack.c.l.b16 %v1369
        %v1402 = vunpack.c.l.b16 %v1370
        %v1403 = vunpack.c.l.b16 %v1371
        %v1404 = vunpack.c.l.b16 %v1372
        %v1405 = vunpack.c.l.b16 %v1373
        %v1406 = vunpack.c.l.b16 %v1374
        %v1407 = vunpack.c.l.b16 %v1375
        %v1408 = vunpack.c.l.b16 %v1376
        %v1409 = vunpack.c.l.b16 %v1377
        %v1410 = vunpack.c.l.b16 %v1378
        %v1411 = vunpack.c.l.b16 %v1379
        %v1412 = vunpack.c.l.b16 %v1380
        %v1413 = vunpack.c.l.b16 %v1381
        %v1414 = vpack.c.b16 %v1399, %v1398
        %v1415 = vpack.c.b16 %v1401, %v1400
        %v1416 = vpack.c.b16 %v1403, %v1402
        %v1417 = vpack.c.b16 %v1405, %v1404
        %v1418 = vpack.c.b16 %v1407, %v1406
        %v1419 = vpack.c.b16 %v1409, %v1408
        %v1420 = vpack.c.b16 %v1411, %v1410
        %v1421 = vpack.c.b16 %v1413, %v1412
        %1430 = vmatpush.bf16.msra.mxu0 %v1421
        %1431 = vmatpush.bf16.msra.mxu0 %v1420
        %1432 = vmatpush.bf16.msra.mxu0 %v1419
        %1433 = vmatpush.bf16.msra.mxu0 %v1418
        %1434 = vmatpush.bf16.msra.mxu0 %v1417
        %1435 = vmatpush.bf16.msra.mxu0 %v1416
        %1436 = vmatpush.bf16.msra.mxu0 %v1415
        %1437 = vmatpush.bf16.msra.mxu0 %v1414
        %1438 = vmatmul.bf16.gmra.mxu0 %v786
        %v1439 = vpop.f32.mrf.mxu0
        %v1440 = vadd.f32 0.0, %v1439
        %v1441 = vpop.f32.mrf.mxu0
        %v1442 = vadd.f32 0.0, %v1441
        %1443 = vmatmul.bf16.gmra.mxu0 %v787
        %v1444 = vpop.f32.mrf.mxu0
        %v1445 = vadd.f32 0.0, %v1444
        %v1446 = vpop.f32.mrf.mxu0
        %v1447 = vadd.f32 0.0, %v1446
        %1448 = vmatmul.bf16.gmra.mxu0 %v788
        %v1449 = vpop.f32.mrf.mxu0
        %v1450 = vadd.f32 0.0, %v1449
        %v1451 = vpop.f32.mrf.mxu0
        %v1452 = vadd.f32 0.0, %v1451
        %1453 = vmatmul.bf16.gmra.mxu0 %v789
        %v1454 = vpop.f32.mrf.mxu0
        %v1455 = vadd.f32 0.0, %v1454
        %v1456 = vpop.f32.mrf.mxu0
        %v1457 = vadd.f32 0.0, %v1456
        %1458 = vmatmul.bf16.gmra.mxu0 %v790
        %v1459 = vpop.f32.mrf.mxu0
        %v1460 = vadd.f32 0.0, %v1459
        %v1461 = vpop.f32.mrf.mxu0
        %v1462 = vadd.f32 0.0, %v1461
        %1463 = vmatmul.bf16.gmra.mxu0 %v791
        %v1464 = vpop.f32.mrf.mxu0
        %v1465 = vadd.f32 0.0, %v1464
        %v1466 = vpop.f32.mrf.mxu0
        %v1467 = vadd.f32 0.0, %v1466
        %1468 = vmatmul.bf16.gmra.mxu0 %v792
        %v1469 = vpop.f32.mrf.mxu0
        %v1470 = vadd.f32 0.0, %v1469
        %v1471 = vpop.f32.mrf.mxu0
        %v1472 = vadd.f32 0.0, %v1471
        %1473 = vmatmul.bf16.gmra.mxu0 %v793
        %v1474 = vpop.f32.mrf.mxu0
        %v1475 = vadd.f32 0.0, %v1474
        %v1476 = vpop.f32.mrf.mxu0
        %v1477 = vadd.f32 0.0, %v1476
        %1478 = vmatmul.bf16.gmra.mxu0 %v794
        %v1479 = vpop.f32.mrf.mxu0
        %v1480 = vadd.f32 0.0, %v1479
        %v1481 = vpop.f32.mrf.mxu0
        %v1482 = vadd.f32 0.0, %v1481
        %1483 = vmatmul.bf16.gmra.mxu0 %v785
        %v1484 = vpop.f32.mrf.mxu0
        %v1485 = vadd.f32 0.0, %v1484
        %v1486 = vpop.f32.mrf.mxu0
        %v1487 = vadd.f32 0.0, %v1486
        %1488 = vdwg.mxu0
        %v1489 = vadd.f32 %v1345, %v1440
        %v1490 = vadd.f32 %v1346, %v1442
        %v1491 = vadd.f32 %v1347, %v1445
        %v1492 = vadd.f32 %v1348, %v1447
        %v1493 = vadd.f32 %v1349, %v1450
        %v1494 = vadd.f32 %v1350, %v1452
        %v1495 = vadd.f32 %v1351, %v1455
        %v1496 = vadd.f32 %v1352, %v1457
        %v1497 = vadd.f32 %v1353, %v1460
        %v1498 = vadd.f32 %v1354, %v1462
        %v1499 = vadd.f32 %v1355, %v1465
        %v1500 = vadd.f32 %v1356, %v1467
        %v1501 = vadd.f32 %v1357, %v1470
        %v1502 = vadd.f32 %v1358, %v1472
        %v1503 = vadd.f32 %v1359, %v1475
        %v1504 = vadd.f32 %v1360, %v1477
        %v1505 = vadd.f32 %v1361, %v1480
        %v1506 = vadd.f32 %v1362, %v1482
        %v1507 = vadd.f32 %v1363, %v1485
        %v1508 = vadd.f32 %v1364, %v1487
        %s1509 = scalar_lea.vmem [#allocation8], 320
        %v1510 = vld [vmem:[%s1509] sm:$0xf]
        %v1511 = vld [vmem:[%s1509 + $0x4] sm:$0xf]
        %v1512 = vld [vmem:[%s1509 + $0x8] sm:$0xf]
        %v1513 = vld [vmem:[%s1509 + $0xc] sm:$0xf]
        %v1514 = vld [vmem:[%s1509 + $0x10] sm:$0xf]
        %v1515 = vld [vmem:[%s1509 + $0x14] sm:$0xf]
        %v1516 = vld [vmem:[%s1509 + $0x18] sm:$0xf]
        %v1517 = vld [vmem:[%s1509 + $0x1c] sm:$0xf]
        %v1518 = vld [vmem:[%s1509 + $0x20] sm:$0xf]
        %v1519 = vld [vmem:[%s1509 + $0x24] sm:$0xf]
        %v1520 = vld [vmem:[%s1509 + $0x28] sm:$0xf]
        %v1521 = vld [vmem:[%s1509 + $0x2c] sm:$0xf]
        %v1522 = vld [vmem:[%s1509 + $0x30] sm:$0xf]
        %v1523 = vld [vmem:[%s1509 + $0x34] sm:$0xf]
        %v1524 = vld [vmem:[%s1509 + $0x38] sm:$0xf]
        %v1525 = vld [vmem:[%s1509 + $0x3c] sm:$0xf]
        %v1542 = vunpack.c.l.b16 %v1510
        %v1543 = vunpack.c.l.b16 %v1511
        %v1544 = vunpack.c.l.b16 %v1512
        %v1545 = vunpack.c.l.b16 %v1513
        %v1546 = vunpack.c.l.b16 %v1514
        %v1547 = vunpack.c.l.b16 %v1515
        %v1548 = vunpack.c.l.b16 %v1516
        %v1549 = vunpack.c.l.b16 %v1517
        %v1550 = vunpack.c.l.b16 %v1518
        %v1551 = vunpack.c.l.b16 %v1519
        %v1552 = vunpack.c.l.b16 %v1520
        %v1553 = vunpack.c.l.b16 %v1521
        %v1554 = vunpack.c.l.b16 %v1522
        %v1555 = vunpack.c.l.b16 %v1523
        %v1556 = vunpack.c.l.b16 %v1524
        %v1557 = vunpack.c.l.b16 %v1525
        %v1558 = vpack.c.b16 %v1543, %v1542
        %v1559 = vpack.c.b16 %v1545, %v1544
        %v1560 = vpack.c.b16 %v1547, %v1546
        %v1561 = vpack.c.b16 %v1549, %v1548
        %v1562 = vpack.c.b16 %v1551, %v1550
        %v1563 = vpack.c.b16 %v1553, %v1552
        %v1564 = vpack.c.b16 %v1555, %v1554
        %v1565 = vpack.c.b16 %v1557, %v1556
        %1574 = vmatpush.bf16.msra.mxu0 %v1565
        %1575 = vmatpush.bf16.msra.mxu0 %v1564
        %1576 = vmatpush.bf16.msra.mxu0 %v1563
        %1577 = vmatpush.bf16.msra.mxu0 %v1562
        %1578 = vmatpush.bf16.msra.mxu0 %v1561
        %1579 = vmatpush.bf16.msra.mxu0 %v1560
        %1580 = vmatpush.bf16.msra.mxu0 %v1559
        %1581 = vmatpush.bf16.msra.mxu0 %v1558
        %1582 = vmatmul.bf16.gmra.mxu0 %v1068
        %v1583 = vpop.f32.mrf.mxu0
        %v1584 = vadd.f32 0.0, %v1583
        %v1585 = vpop.f32.mrf.mxu0
        %v1586 = vadd.f32 0.0, %v1585
        %1587 = vmatmul.bf16.gmra.mxu0 %v1069
        %v1588 = vpop.f32.mrf.mxu0
        %v1589 = vadd.f32 0.0, %v1588
        %v1590 = vpop.f32.mrf.mxu0
        %v1591 = vadd.f32 0.0, %v1590
        %1592 = vmatmul.bf16.gmra.mxu0 %v1070
        %v1593 = vpop.f32.mrf.mxu0
        %v1594 = vadd.f32 0.0, %v1593
        %v1595 = vpop.f32.mrf.mxu0
        %v1596 = vadd.f32 0.0, %v1595
        %1597 = vmatmul.bf16.gmra.mxu0 %v1071
        %v1598 = vpop.f32.mrf.mxu0
        %v1599 = vadd.f32 0.0, %v1598
        %v1600 = vpop.f32.mrf.mxu0
        %v1601 = vadd.f32 0.0, %v1600
        %1602 = vmatmul.bf16.gmra.mxu0 %v1072
        %v1603 = vpop.f32.mrf.mxu0
        %v1604 = vadd.f32 0.0, %v1603
        %v1605 = vpop.f32.mrf.mxu0
        %v1606 = vadd.f32 0.0, %v1605
        %1607 = vmatmul.bf16.gmra.mxu0 %v1073
        %v1608 = vpop.f32.mrf.mxu0
        %v1609 = vadd.f32 0.0, %v1608
        %v1610 = vpop.f32.mrf.mxu0
        %v1611 = vadd.f32 0.0, %v1610
        %1612 = vmatmul.bf16.gmra.mxu0 %v1074
        %v1613 = vpop.f32.mrf.mxu0
        %v1614 = vadd.f32 0.0, %v1613
        %v1615 = vpop.f32.mrf.mxu0
        %v1616 = vadd.f32 0.0, %v1615
        %1617 = vmatmul.bf16.gmra.mxu0 %v1075
        %v1618 = vpop.f32.mrf.mxu0
        %v1619 = vadd.f32 0.0, %v1618
        %v1620 = vpop.f32.mrf.mxu0
        %v1621 = vadd.f32 0.0, %v1620
        %1622 = vmatmul.bf16.gmra.mxu0 %v1076
        %v1623 = vpop.f32.mrf.mxu0
        %v1624 = vadd.f32 0.0, %v1623
        %v1625 = vpop.f32.mrf.mxu0
        %v1626 = vadd.f32 0.0, %v1625
        %1627 = vmatmul.bf16.gmra.mxu0 %v1067
        %v1628 = vpop.f32.mrf.mxu0
        %v1629 = vadd.f32 0.0, %v1628
        %v1630 = vpop.f32.mrf.mxu0
        %v1631 = vadd.f32 0.0, %v1630
        %1632 = vdwg.mxu0
        %v1633 = vadd.f32 %v1489, %v1584
        %v1634 = vadd.f32 %v1490, %v1586
        %v1635 = vadd.f32 %v1491, %v1589
        %v1636 = vadd.f32 %v1492, %v1591
        %v1637 = vadd.f32 %v1493, %v1594
        %v1638 = vadd.f32 %v1494, %v1596
        %v1639 = vadd.f32 %v1495, %v1599
        %v1640 = vadd.f32 %v1496, %v1601
        %v1641 = vadd.f32 %v1497, %v1604
        %v1642 = vadd.f32 %v1498, %v1606
        %v1643 = vadd.f32 %v1499, %v1609
        %v1644 = vadd.f32 %v1500, %v1611
        %v1645 = vadd.f32 %v1501, %v1614
        %v1646 = vadd.f32 %v1502, %v1616
        %v1647 = vadd.f32 %v1503, %v1619
        %v1648 = vadd.f32 %v1504, %v1621
        %v1649 = vadd.f32 %v1505, %v1624
        %v1650 = vadd.f32 %v1506, %v1626
        %v1651 = vadd.f32 %v1507, %v1629
        %v1652 = vadd.f32 %v1508, %v1631
        %s1653 = scalar_lea.vmem [#allocation8], 384
        %v1654 = vld [vmem:[%s1653] sm:$0xf]
        %v1655 = vld [vmem:[%s1653 + $0x4] sm:$0xf]
        %v1656 = vld [vmem:[%s1653 + $0x8] sm:$0xf]
        %v1657 = vld [vmem:[%s1653 + $0xc] sm:$0xf]
        %v1658 = vld [vmem:[%s1653 + $0x10] sm:$0xf]
        %v1659 = vld [vmem:[%s1653 + $0x14] sm:$0xf]
        %v1660 = vld [vmem:[%s1653 + $0x18] sm:$0xf]
        %v1661 = vld [vmem:[%s1653 + $0x1c] sm:$0xf]
        %v1662 = vld [vmem:[%s1653 + $0x20] sm:$0xf]
        %v1663 = vld [vmem:[%s1653 + $0x24] sm:$0xf]
        %v1664 = vld [vmem:[%s1653 + $0x28] sm:$0xf]
        %v1665 = vld [vmem:[%s1653 + $0x2c] sm:$0xf]
        %v1666 = vld [vmem:[%s1653 + $0x30] sm:$0xf]
        %v1667 = vld [vmem:[%s1653 + $0x34] sm:$0xf]
        %v1668 = vld [vmem:[%s1653 + $0x38] sm:$0xf]
        %v1669 = vld [vmem:[%s1653 + $0x3c] sm:$0xf]
        %v1686 = vunpack.c.l.b16 %v1654
        %v1687 = vunpack.c.l.b16 %v1655
        %v1688 = vunpack.c.l.b16 %v1656
        %v1689 = vunpack.c.l.b16 %v1657
        %v1690 = vunpack.c.l.b16 %v1658
        %v1691 = vunpack.c.l.b16 %v1659
        %v1692 = vunpack.c.l.b16 %v1660
        %v1693 = vunpack.c.l.b16 %v1661
        %v1694 = vunpack.c.l.b16 %v1662
        %v1695 = vunpack.c.l.b16 %v1663
        %v1696 = vunpack.c.l.b16 %v1664
        %v1697 = vunpack.c.l.b16 %v1665
        %v1698 = vunpack.c.l.b16 %v1666
        %v1699 = vunpack.c.l.b16 %v1667
        %v1700 = vunpack.c.l.b16 %v1668
        %v1701 = vunpack.c.l.b16 %v1669
        %v1702 = vpack.c.b16 %v1687, %v1686
        %v1703 = vpack.c.b16 %v1689, %v1688
        %v1704 = vpack.c.b16 %v1691, %v1690
        %v1705 = vpack.c.b16 %v1693, %v1692
        %v1706 = vpack.c.b16 %v1695, %v1694
        %v1707 = vpack.c.b16 %v1697, %v1696
        %v1708 = vpack.c.b16 %v1699, %v1698
        %v1709 = vpack.c.b16 %v1701, %v1700
        %1718 = vmatpush.bf16.msra.mxu0 %v1709
        %1719 = vmatpush.bf16.msra.mxu0 %v1708
        %1720 = vmatpush.bf16.msra.mxu0 %v1707
        %1721 = vmatpush.bf16.msra.mxu0 %v1706
        %1722 = vmatpush.bf16.msra.mxu0 %v1705
        %1723 = vmatpush.bf16.msra.mxu0 %v1704
        %1724 = vmatpush.bf16.msra.mxu0 %v1703
        %1725 = vmatpush.bf16.msra.mxu0 %v1702
        %1726 = vmatmul.bf16.gmra.mxu0 %v720
        %v1727 = vpop.f32.mrf.mxu0
        %v1728 = vadd.f32 0.0, %v1727
        %v1729 = vpop.f32.mrf.mxu0
        %v1730 = vadd.f32 0.0, %v1729
        %1731 = vmatmul.bf16.gmra.mxu0 %v721
        %v1732 = vpop.f32.mrf.mxu0
        %v1733 = vadd.f32 0.0, %v1732
        %v1734 = vpop.f32.mrf.mxu0
        %v1735 = vadd.f32 0.0, %v1734
        %1736 = vmatmul.bf16.gmra.mxu0 %v722
        %v1737 = vpop.f32.mrf.mxu0
        %v1738 = vadd.f32 0.0, %v1737
        %v1739 = vpop.f32.mrf.mxu0
        %v1740 = vadd.f32 0.0, %v1739
        %1741 = vmatmul.bf16.gmra.mxu0 %v723
        %v1742 = vpop.f32.mrf.mxu0
        %v1743 = vadd.f32 0.0, %v1742
        %v1744 = vpop.f32.mrf.mxu0
        %v1745 = vadd.f32 0.0, %v1744
        %1746 = vmatmul.bf16.gmra.mxu0 %v724
        %v1747 = vpop.f32.mrf.mxu0
        %v1748 = vadd.f32 0.0, %v1747
        %v1749 = vpop.f32.mrf.mxu0
        %v1750 = vadd.f32 0.0, %v1749
        %1751 = vmatmul.bf16.gmra.mxu0 %v725
        %v1752 = vpop.f32.mrf.mxu0
        %v1753 = vadd.f32 0.0, %v1752
        %v1754 = vpop.f32.mrf.mxu0
        %v1755 = vadd.f32 0.0, %v1754
        %1756 = vmatmul.bf16.gmra.mxu0 %v726
        %v1757 = vpop.f32.mrf.mxu0
        %v1758 = vadd.f32 0.0, %v1757
        %v1759 = vpop.f32.mrf.mxu0
        %v1760 = vadd.f32 0.0, %v1759
        %1761 = vmatmul.bf16.gmra.mxu0 %v727
        %v1762 = vpop.f32.mrf.mxu0
        %v1763 = vadd.f32 0.0, %v1762
        %v1764 = vpop.f32.mrf.mxu0
        %v1765 = vadd.f32 0.0, %v1764
        %1766 = vmatmul.bf16.gmra.mxu0 %v718
        %v1767 = vpop.f32.mrf.mxu0
        %v1768 = vadd.f32 0.0, %v1767
        %v1769 = vpop.f32.mrf.mxu0
        %v1770 = vadd.f32 0.0, %v1769
        %1771 = vmatmul.bf16.gmra.mxu0 %v719
        %v1772 = vpop.f32.mrf.mxu0
        %v1773 = vadd.f32 0.0, %v1772
        %v1774 = vpop.f32.mrf.mxu0
        %v1775 = vadd.f32 0.0, %v1774
        %1776 = vdwg.mxu0
        %v1777 = vadd.f32 %v1633, %v1728
        %v1778 = vadd.f32 %v1634, %v1730
        %v1779 = vadd.f32 %v1635, %v1733
        %v1780 = vadd.f32 %v1636, %v1735
        %v1781 = vadd.f32 %v1637, %v1738
        %v1782 = vadd.f32 %v1638, %v1740
        %v1783 = vadd.f32 %v1639, %v1743
        %v1784 = vadd.f32 %v1640, %v1745
        %v1785 = vadd.f32 %v1641, %v1748
        %v1786 = vadd.f32 %v1642, %v1750
        %v1787 = vadd.f32 %v1643, %v1753
        %v1788 = vadd.f32 %v1644, %v1755
        %v1789 = vadd.f32 %v1645, %v1758
        %v1790 = vadd.f32 %v1646, %v1760
        %v1791 = vadd.f32 %v1647, %v1763
        %v1792 = vadd.f32 %v1648, %v1765
        %v1793 = vadd.f32 %v1649, %v1768
        %v1794 = vadd.f32 %v1650, %v1770
        %v1795 = vadd.f32 %v1651, %v1773
        %v1796 = vadd.f32 %v1652, %v1775
        %s1797 = scalar_lea.vmem [#allocation8], 448
        %v1798 = vld [vmem:[%s1797] sm:$0xf]
        %v1799 = vld [vmem:[%s1797 + $0x4] sm:$0xf]
        %v1800 = vld [vmem:[%s1797 + $0x8] sm:$0xf]
        %v1801 = vld [vmem:[%s1797 + $0xc] sm:$0xf]
        %v1802 = vld [vmem:[%s1797 + $0x10] sm:$0xf]
        %v1803 = vld [vmem:[%s1797 + $0x14] sm:$0xf]
        %v1804 = vld [vmem:[%s1797 + $0x18] sm:$0xf]
        %v1805 = vld [vmem:[%s1797 + $0x1c] sm:$0xf]
        %v1806 = vld [vmem:[%s1797 + $0x20] sm:$0xf]
        %v1807 = vld [vmem:[%s1797 + $0x24] sm:$0xf]
        %v1808 = vld [vmem:[%s1797 + $0x28] sm:$0xf]
        %v1809 = vld [vmem:[%s1797 + $0x2c] sm:$0xf]
        %v1810 = vld [vmem:[%s1797 + $0x30] sm:$0xf]
        %v1811 = vld [vmem:[%s1797 + $0x34] sm:$0xf]
        %v1812 = vld [vmem:[%s1797 + $0x38] sm:$0xf]
        %v1813 = vld [vmem:[%s1797 + $0x3c] sm:$0xf]
        %v1830 = vunpack.c.l.b16 %v1798
        %v1831 = vunpack.c.l.b16 %v1799
        %v1832 = vunpack.c.l.b16 %v1800
        %v1833 = vunpack.c.l.b16 %v1801
        %v1834 = vunpack.c.l.b16 %v1802
        %v1835 = vunpack.c.l.b16 %v1803
        %v1836 = vunpack.c.l.b16 %v1804
        %v1837 = vunpack.c.l.b16 %v1805
        %v1838 = vunpack.c.l.b16 %v1806
        %v1839 = vunpack.c.l.b16 %v1807
        %v1840 = vunpack.c.l.b16 %v1808
        %v1841 = vunpack.c.l.b16 %v1809
        %v1842 = vunpack.c.l.b16 %v1810
        %v1843 = vunpack.c.l.b16 %v1811
        %v1844 = vunpack.c.l.b16 %v1812
        %v1845 = vunpack.c.l.b16 %v1813
        %v1846 = vpack.c.b16 %v1831, %v1830
        %v1847 = vpack.c.b16 %v1833, %v1832
        %v1848 = vpack.c.b16 %v1835, %v1834
        %v1849 = vpack.c.b16 %v1837, %v1836
        %v1850 = vpack.c.b16 %v1839, %v1838
        %v1851 = vpack.c.b16 %v1841, %v1840
        %v1852 = vpack.c.b16 %v1843, %v1842
        %v1853 = vpack.c.b16 %v1845, %v1844
        %1862 = vmatpush.bf16.msra.mxu0 %v1853
        %1863 = vmatpush.bf16.msra.mxu0 %v1852
        %1864 = vmatpush.bf16.msra.mxu0 %v1851
        %1865 = vmatpush.bf16.msra.mxu0 %v1850
        %1866 = vmatpush.bf16.msra.mxu0 %v1849
        %1867 = vmatpush.bf16.msra.mxu0 %v1848
        %1868 = vmatpush.bf16.msra.mxu0 %v1847
        %1869 = vmatpush.bf16.msra.mxu0 %v1846
        %1870 = vmatmul.bf16.gmra.mxu0 %v787
        %v1871 = vpop.f32.mrf.mxu0
        %v1872 = vadd.f32 0.0, %v1871
        %v1873 = vpop.f32.mrf.mxu0
        %v1874 = vadd.f32 0.0, %v1873
        %1875 = vmatmul.bf16.gmra.mxu0 %v788
        %v1876 = vpop.f32.mrf.mxu0
        %v1877 = vadd.f32 0.0, %v1876
        %v1878 = vpop.f32.mrf.mxu0
        %v1879 = vadd.f32 0.0, %v1878
        %1880 = vmatmul.bf16.gmra.mxu0 %v789
        %v1881 = vpop.f32.mrf.mxu0
        %v1882 = vadd.f32 0.0, %v1881
        %v1883 = vpop.f32.mrf.mxu0
        %v1884 = vadd.f32 0.0, %v1883
        %1885 = vmatmul.bf16.gmra.mxu0 %v790
        %v1886 = vpop.f32.mrf.mxu0
        %v1887 = vadd.f32 0.0, %v1886
        %v1888 = vpop.f32.mrf.mxu0
        %v1889 = vadd.f32 0.0, %v1888
        %1890 = vmatmul.bf16.gmra.mxu0 %v791
        %v1891 = vpop.f32.mrf.mxu0
        %v1892 = vadd.f32 0.0, %v1891
        %v1893 = vpop.f32.mrf.mxu0
        %v1894 = vadd.f32 0.0, %v1893
        %1895 = vmatmul.bf16.gmra.mxu0 %v792
        %v1896 = vpop.f32.mrf.mxu0
        %v1897 = vadd.f32 0.0, %v1896
        %v1898 = vpop.f32.mrf.mxu0
        %v1899 = vadd.f32 0.0, %v1898
        %1900 = vmatmul.bf16.gmra.mxu0 %v793
        %v1901 = vpop.f32.mrf.mxu0
        %v1902 = vadd.f32 0.0, %v1901
        %v1903 = vpop.f32.mrf.mxu0
        %v1904 = vadd.f32 0.0, %v1903
        %1905 = vmatmul.bf16.gmra.mxu0 %v794
        %v1906 = vpop.f32.mrf.mxu0
        %v1907 = vadd.f32 0.0, %v1906
        %v1908 = vpop.f32.mrf.mxu0
        %v1909 = vadd.f32 0.0, %v1908
        %1910 = vmatmul.bf16.gmra.mxu0 %v785
        %v1911 = vpop.f32.mrf.mxu0
        %v1912 = vadd.f32 0.0, %v1911
        %v1913 = vpop.f32.mrf.mxu0
        %v1914 = vadd.f32 0.0, %v1913
        %1915 = vmatmul.bf16.gmra.mxu0 %v786
        %v1916 = vpop.f32.mrf.mxu0
        %v1917 = vadd.f32 0.0, %v1916
        %v1918 = vpop.f32.mrf.mxu0
        %v1919 = vadd.f32 0.0, %v1918
        %1920 = vdwg.mxu0
        %v1921 = vadd.f32 %v1777, %v1872
        %v1922 = vadd.f32 %v1778, %v1874
        %v1923 = vadd.f32 %v1779, %v1877
        %v1924 = vadd.f32 %v1780, %v1879
        %v1925 = vadd.f32 %v1781, %v1882
        %v1926 = vadd.f32 %v1782, %v1884
        %v1927 = vadd.f32 %v1783, %v1887
        %v1928 = vadd.f32 %v1784, %v1889
        %v1929 = vadd.f32 %v1785, %v1892
        %v1930 = vadd.f32 %v1786, %v1894
        %v1931 = vadd.f32 %v1787, %v1897
        %v1932 = vadd.f32 %v1788, %v1899
        %v1933 = vadd.f32 %v1789, %v1902
        %v1934 = vadd.f32 %v1790, %v1904
        %v1935 = vadd.f32 %v1791, %v1907
        %v1936 = vadd.f32 %v1792, %v1909
        %v1937 = vadd.f32 %v1793, %v1912
        %v1938 = vadd.f32 %v1794, %v1914
        %v1939 = vadd.f32 %v1795, %v1917
        %v1940 = vadd.f32 %v1796, %v1919
        %s1941 = scalar_lea.vmem [#allocation8], 512
        %v1942 = vld [vmem:[%s1941] sm:$0xf]
        %v1943 = vld [vmem:[%s1941 + $0x4] sm:$0xf]
        %v1944 = vld [vmem:[%s1941 + $0x8] sm:$0xf]
        %v1945 = vld [vmem:[%s1941 + $0xc] sm:$0xf]
        %v1946 = vld [vmem:[%s1941 + $0x10] sm:$0xf]
        %v1947 = vld [vmem:[%s1941 + $0x14] sm:$0xf]
        %v1948 = vld [vmem:[%s1941 + $0x18] sm:$0xf]
        %v1949 = vld [vmem:[%s1941 + $0x1c] sm:$0xf]
        %v1950 = vld [vmem:[%s1941 + $0x20] sm:$0xf]
        %v1951 = vld [vmem:[%s1941 + $0x24] sm:$0xf]
        %v1952 = vld [vmem:[%s1941 + $0x28] sm:$0xf]
        %v1953 = vld [vmem:[%s1941 + $0x2c] sm:$0xf]
        %v1954 = vld [vmem:[%s1941 + $0x30] sm:$0xf]
        %v1955 = vld [vmem:[%s1941 + $0x34] sm:$0xf]
        %v1956 = vld [vmem:[%s1941 + $0x38] sm:$0xf]
        %v1957 = vld [vmem:[%s1941 + $0x3c] sm:$0xf]
        %v1974 = vunpack.c.l.b16 %v1942
        %v1975 = vunpack.c.l.b16 %v1943
        %v1976 = vunpack.c.l.b16 %v1944
        %v1977 = vunpack.c.l.b16 %v1945
        %v1978 = vunpack.c.l.b16 %v1946
        %v1979 = vunpack.c.l.b16 %v1947
        %v1980 = vunpack.c.l.b16 %v1948
        %v1981 = vunpack.c.l.b16 %v1949
        %v1982 = vunpack.c.l.b16 %v1950
        %v1983 = vunpack.c.l.b16 %v1951
        %v1984 = vunpack.c.l.b16 %v1952
        %v1985 = vunpack.c.l.b16 %v1953
        %v1986 = vunpack.c.l.b16 %v1954
        %v1987 = vunpack.c.l.b16 %v1955
        %v1988 = vunpack.c.l.b16 %v1956
        %v1989 = vunpack.c.l.b16 %v1957
        %v1990 = vpack.c.b16 %v1975, %v1974
        %v1991 = vpack.c.b16 %v1977, %v1976
        %v1992 = vpack.c.b16 %v1979, %v1978
        %v1993 = vpack.c.b16 %v1981, %v1980
        %v1994 = vpack.c.b16 %v1983, %v1982
        %v1995 = vpack.c.b16 %v1985, %v1984
        %v1996 = vpack.c.b16 %v1987, %v1986
        %v1997 = vpack.c.b16 %v1989, %v1988
        %2006 = vmatpush.bf16.msra.mxu0 %v1997
        %2007 = vmatpush.bf16.msra.mxu0 %v1996
        %2008 = vmatpush.bf16.msra.mxu0 %v1995
        %2009 = vmatpush.bf16.msra.mxu0 %v1994
        %2010 = vmatpush.bf16.msra.mxu0 %v1993
        %2011 = vmatpush.bf16.msra.mxu0 %v1992
        %2012 = vmatpush.bf16.msra.mxu0 %v1991
        %2013 = vmatpush.bf16.msra.mxu0 %v1990
        %2014 = vmatmul.bf16.gmra.mxu0 %v1069
        %v2015 = vpop.f32.mrf.mxu0
        %v2016 = vadd.f32 0.0, %v2015
        %v2017 = vpop.f32.mrf.mxu0
        %v2018 = vadd.f32 0.0, %v2017
        %2019 = vmatmul.bf16.gmra.mxu0 %v1070
        %v2020 = vpop.f32.mrf.mxu0
        %v2021 = vadd.f32 0.0, %v2020
        %v2022 = vpop.f32.mrf.mxu0
        %v2023 = vadd.f32 0.0, %v2022
        %2024 = vmatmul.bf16.gmra.mxu0 %v1071
        %v2025 = vpop.f32.mrf.mxu0
        %v2026 = vadd.f32 0.0, %v2025
        %v2027 = vpop.f32.mrf.mxu0
        %v2028 = vadd.f32 0.0, %v2027
        %2029 = vmatmul.bf16.gmra.mxu0 %v1072
        %v2030 = vpop.f32.mrf.mxu0
        %v2031 = vadd.f32 0.0, %v2030
        %v2032 = vpop.f32.mrf.mxu0
        %v2033 = vadd.f32 0.0, %v2032
        %2034 = vmatmul.bf16.gmra.mxu0 %v1073
        %v2035 = vpop.f32.mrf.mxu0
        %v2036 = vadd.f32 0.0, %v2035
        %v2037 = vpop.f32.mrf.mxu0
        %v2038 = vadd.f32 0.0, %v2037
        %2039 = vmatmul.bf16.gmra.mxu0 %v1074
        %v2040 = vpop.f32.mrf.mxu0
        %v2041 = vadd.f32 0.0, %v2040
        %v2042 = vpop.f32.mrf.mxu0
        %v2043 = vadd.f32 0.0, %v2042
        %2044 = vmatmul.bf16.gmra.mxu0 %v1075
        %v2045 = vpop.f32.mrf.mxu0
        %v2046 = vadd.f32 0.0, %v2045
        %v2047 = vpop.f32.mrf.mxu0
        %v2048 = vadd.f32 0.0, %v2047
        %2049 = vmatmul.bf16.gmra.mxu0 %v1076
        %v2050 = vpop.f32.mrf.mxu0
        %v2051 = vadd.f32 0.0, %v2050
        %v2052 = vpop.f32.mrf.mxu0
        %v2053 = vadd.f32 0.0, %v2052
        %2054 = vmatmul.bf16.gmra.mxu0 %v1067
        %v2055 = vpop.f32.mrf.mxu0
        %v2056 = vadd.f32 0.0, %v2055
        %v2057 = vpop.f32.mrf.mxu0
        %v2058 = vadd.f32 0.0, %v2057
        %2059 = vmatmul.bf16.gmra.mxu0 %v1068
        %v2060 = vpop.f32.mrf.mxu0
        %v2061 = vadd.f32 0.0, %v2060
        %v2062 = vpop.f32.mrf.mxu0
        %v2063 = vadd.f32 0.0, %v2062
        %2064 = vdwg.mxu0
        %v2065 = vadd.f32 %v1921, %v2016
        %v2066 = vadd.f32 %v1922, %v2018
        %v2067 = vadd.f32 %v1923, %v2021
        %v2068 = vadd.f32 %v1924, %v2023
        %v2069 = vadd.f32 %v1925, %v2026
        %v2070 = vadd.f32 %v1926, %v2028
        %v2071 = vadd.f32 %v1927, %v2031
        %v2072 = vadd.f32 %v1928, %v2033
        %v2073 = vadd.f32 %v1929, %v2036
        %v2074 = vadd.f32 %v1930, %v2038
        %v2075 = vadd.f32 %v1931, %v2041
        %v2076 = vadd.f32 %v1932, %v2043
        %v2077 = vadd.f32 %v1933, %v2046
        %v2078 = vadd.f32 %v1934, %v2048
        %v2079 = vadd.f32 %v1935, %v2051
        %v2080 = vadd.f32 %v1936, %v2053
        %v2081 = vadd.f32 %v1937, %v2056
        %v2082 = vadd.f32 %v1938, %v2058
        %v2083 = vadd.f32 %v1939, %v2061
        %v2084 = vadd.f32 %v1940, %v2063
        %v2085 = vld [vmem:[%s5] sm:$0x1]
        %v2086 = vmul.f32 %v2065, %v698
        %v2087 = vmul.f32 %v2066, %v699
        %v2088 = vmul.f32 %v2067, %v700
        %v2089 = vmul.f32 %v2068, %v701
        %v2090 = vmul.f32 %v2069, %v702
        %v2091 = vmul.f32 %v2070, %v703
        %v2092 = vmul.f32 %v2071, %v704
        %v2093 = vmul.f32 %v2072, %v705
        %v2094 = vmul.f32 %v2073, %v706
        %v2095 = vmul.f32 %v2074, %v707
        %v2096 = vmul.f32 %v2075, %v708
        %v2097 = vmul.f32 %v2076, %v709
        %v2098 = vmul.f32 %v2077, %v710
        %v2099 = vmul.f32 %v2078, %v711
        %v2100 = vmul.f32 %v2079, %v712
        %v2101 = vmul.f32 %v2080, %v713
        %v2102 = vmul.f32 %v2081, %v714
        %v2103 = vmul.f32 %v2082, %v715
        %v2104 = vmul.f32 %v2083, %v716
        %v2105 = vmul.f32 %v2084, %v717
        %v2106 = vadd.f32 %v2086, %v2087
        %v2107 = vadd.f32 %v2106, %v2088
        %v2108 = vadd.f32 %v2107, %v2089
        %v2109 = vadd.f32 %v2108, %v2090
        %v2110 = vadd.f32 %v2109, %v2091
        %v2111 = vadd.f32 %v2110, %v2092
        %v2112 = vadd.f32 %v2111, %v2093
        %v2113 = vadd.f32 %v2112, %v2094
        %v2114 = vadd.f32 %v2113, %v2095
        %v2115 = vadd.f32 %v2114, %v2096
        %v2116 = vadd.f32 %v2115, %v2097
        %v2117 = vadd.f32 %v2116, %v2098
        %v2118 = vadd.f32 %v2117, %v2099
        %v2119 = vadd.f32 %v2118, %v2100
        %v2120 = vadd.f32 %v2119, %v2101
        %v2121 = vadd.f32 %v2120, %v2102
        %v2122 = vadd.f32 %v2121, %v2103
        %v2123 = vadd.f32 %v2122, %v2104
        %v2124 = vadd.f32 %v2123, %v2105
        %v2125 = vrot.slane %v2124, 4
        %v2126 = vadd.f32 %v2124, %v2125
        %v2127 = vrot.slane %v2126, 2
        %v2128 = vadd.f32 %v2126, %v2127
        %v2129 = vrot.slane %v2128, 1
        %v2130 = vadd.f32 %v2128, %v2129
        %v2131 = vmul.f32 %v2130, 0.015625
        %v2132 = vsub.f32 %v2065, %v2131
        %v2133 = vsub.f32 %v2066, %v2131
        %v2134 = vsub.f32 %v2067, %v2131
        %v2135 = vsub.f32 %v2068, %v2131
        %v2136 = vsub.f32 %v2069, %v2131
        %v2137 = vsub.f32 %v2070, %v2131
        %v2138 = vsub.f32 %v2071, %v2131
        %v2139 = vsub.f32 %v2072, %v2131
        %v2140 = vsub.f32 %v2073, %v2131
        %v2141 = vsub.f32 %v2074, %v2131
        %v2142 = vsub.f32 %v2075, %v2131
        %v2143 = vsub.f32 %v2076, %v2131
        %v2144 = vsub.f32 %v2077, %v2131
        %v2145 = vsub.f32 %v2078, %v2131
        %v2146 = vsub.f32 %v2079, %v2131
        %v2147 = vsub.f32 %v2080, %v2131
        %v2148 = vsub.f32 %v2081, %v2131
        %v2149 = vsub.f32 %v2082, %v2131
        %v2150 = vsub.f32 %v2083, %v2131
        %v2151 = vsub.f32 %v2084, %v2131
        %v2152 = vmul.f32 %v2132, %v698
        %v2153 = vmul.f32 %v2133, %v699
        %v2154 = vmul.f32 %v2134, %v700
        %v2155 = vmul.f32 %v2135, %v701
        %v2156 = vmul.f32 %v2136, %v702
        %v2157 = vmul.f32 %v2137, %v703
        %v2158 = vmul.f32 %v2138, %v704
        %v2159 = vmul.f32 %v2139, %v705
        %v2160 = vmul.f32 %v2140, %v706
        %v2161 = vmul.f32 %v2141, %v707
        %v2162 = vmul.f32 %v2142, %v708
        %v2163 = vmul.f32 %v2143, %v709
        %v2164 = vmul.f32 %v2144, %v710
        %v2165 = vmul.f32 %v2145, %v711
        %v2166 = vmul.f32 %v2146, %v712
        %v2167 = vmul.f32 %v2147, %v713
        %v2168 = vmul.f32 %v2148, %v714
        %v2169 = vmul.f32 %v2149, %v715
        %v2170 = vmul.f32 %v2150, %v716
        %v2171 = vmul.f32 %v2151, %v717
        %v2172 = vmul.f32 %v2152, %v2152
        %v2173 = vmul.f32 %v2153, %v2153
        %v2174 = vmul.f32 %v2154, %v2154
        %v2175 = vmul.f32 %v2155, %v2155
        %v2176 = vmul.f32 %v2156, %v2156
        %v2177 = vmul.f32 %v2157, %v2157
        %v2178 = vmul.f32 %v2158, %v2158
        %v2179 = vmul.f32 %v2159, %v2159
        %v2180 = vmul.f32 %v2160, %v2160
        %v2181 = vmul.f32 %v2161, %v2161
        %v2182 = vmul.f32 %v2162, %v2162
        %v2183 = vmul.f32 %v2163, %v2163
        %v2184 = vmul.f32 %v2164, %v2164
        %v2185 = vmul.f32 %v2165, %v2165
        %v2186 = vmul.f32 %v2166, %v2166
        %v2187 = vmul.f32 %v2167, %v2167
        %v2188 = vmul.f32 %v2168, %v2168
        %v2189 = vmul.f32 %v2169, %v2169
        %v2190 = vmul.f32 %v2170, %v2170
        %v2191 = vmul.f32 %v2171, %v2171
        %v2192 = vadd.f32 %v2172, %v2173
        %v2193 = vadd.f32 %v2192, %v2174
        %v2194 = vadd.f32 %v2193, %v2175
        %v2195 = vadd.f32 %v2194, %v2176
        %v2196 = vadd.f32 %v2195, %v2177
        %v2197 = vadd.f32 %v2196, %v2178
        %v2198 = vadd.f32 %v2197, %v2179
        %v2199 = vadd.f32 %v2198, %v2180
        %v2200 = vadd.f32 %v2199, %v2181
        %v2201 = vadd.f32 %v2200, %v2182
        %v2202 = vadd.f32 %v2201, %v2183
        %v2203 = vadd.f32 %v2202, %v2184
        %v2204 = vadd.f32 %v2203, %v2185
        %v2205 = vadd.f32 %v2204, %v2186
        %v2206 = vadd.f32 %v2205, %v2187
        %v2207 = vadd.f32 %v2206, %v2188
        %v2208 = vadd.f32 %v2207, %v2189
        %v2209 = vadd.f32 %v2208, %v2190
        %v2210 = vadd.f32 %v2209, %v2191
        %v2211 = vrot.slane %v2210, 4
        %v2212 = vadd.f32 %v2210, %v2211
        %v2213 = vrot.slane %v2212, 2
        %v2214 = vadd.f32 %v2212, %v2213
        %v2215 = vrot.slane %v2214, 1
        %v2216 = vadd.f32 %v2214, %v2215
        %v2217 = vadd.f32 %v2131, %v2085
        %v2218 = vmul.f32 %v2216, 0.015873017
        %vm2219 = vcmask 1040384
        %v2220 = vsel %vm2219, %v2217, 0.0
        %2221 = vadd.xlane.f32.xlu0 %v2220
        %v2222 = vpop.xlane.xlu0 %2221
        %v2223 = vmul.f32 %v2222, 0.0078125
        %v2224 = vsub.f32 %v2217, %v2223
        %2225 = vadd.xlane.f32.xlu0 %v2216
        %v2226 = vpop.xlane.xlu0 %2225
        %v2227 = vmul.f32 %v2224, %v2224
        %v2228 = vsel %vm2219, %v2227, 0.0
        %2229 = vadd.xlane.f32.xlu0 %v2228
        %v2230 = vpop.xlane.xlu0 %2229
        %v2231 = vmul.f32 %v2230, 64.0
        %v2232 = vadd.f32 %v2226, %v2231
        %v2233 = vmul.f32 %v2232, 0.00012208521
        %v2234 = vadd.f32 %v2218, 1e-05
        %v2235 = vrsqrt.pop %v2234
        %v2236 = vmul.f32 %v2235, %v2234
        %v2237 = vmul.f32 %v2236, %v2235
        %v2238 = vmul.f32 0.5, %v2237
        %v2239 = vsub.f32 1.5, %v2238
        %v2240 = vmul.f32 %v2235, %v2239
        %vm2241 = vweird.f32 %v2234
        %vm2242 = vweird.f32 %v2235
        %vm2243 = vmor %vm2241, %vm2242
        %v2244 = vsel %vm2243, %v2235, %v2240
        %v2245 = vadd.f32 %v2233, 1e-05
        %v2246 = vrsqrt.pop %v2245
        %v2247 = vmul.f32 %v2246, %v2245
        %v2248 = vmul.f32 %v2247, %v2246
        %v2249 = vmul.f32 0.5, %v2248
        %v2250 = vsub.f32 1.5, %v2249
        %v2251 = vmul.f32 %v2246, %v2250
        %vm2252 = vweird.f32 %v2245
        %vm2253 = vweird.f32 %v2246
        %vm2254 = vmor %vm2252, %vm2253
        %v2255 = vsel %vm2254, %v2246, %v2251
        %v2256 = vmul.f32 %v448, %v2244
        %v2257 = vmul.f32 %v449, %v2255
        %v2258 = vadd.f32 %v2256, %v2257
        %v2259 = vmul.f32 %v446, %v2258
        %v2260 = vsub.f32 %v2085, %v2223
        %v2261 = vmul.f32 %v449, %v2260
        %v2262 = vmul.f32 %v2261, %v2255
        %v2263 = vmul.f32 %v448, %v2131
        %v2264 = vmul.f32 %v2263, %v2244
        %v2265 = vsub.f32 %v2262, %v2264
        %v2266 = vmul.f32 %v446, %v2265
        %v2267 = vadd.f32 %v447, %v2266
        %v2269 = vperm.slane %v2259, 0
        %v2271 = vmul.f32 %v2065, %v2269
        %v2272 = vmul.f32 %v2066, %v2269
        %v2273 = vmul.f32 %v2067, %v2269
        %v2274 = vmul.f32 %v2068, %v2269
        %v2275 = vmul.f32 %v2069, %v2269
        %v2276 = vmul.f32 %v2070, %v2269
        %v2277 = vmul.f32 %v2071, %v2269
        %v2278 = vmul.f32 %v2072, %v2269
        %v2279 = vmul.f32 %v2073, %v2269
        %v2280 = vmul.f32 %v2074, %v2269
        %v2281 = vmul.f32 %v2075, %v2269
        %v2282 = vmul.f32 %v2076, %v2269
        %v2283 = vmul.f32 %v2077, %v2269
        %v2284 = vmul.f32 %v2078, %v2269
        %v2285 = vmul.f32 %v2079, %v2269
        %v2286 = vmul.f32 %v2080, %v2269
        %v2287 = vmul.f32 %v2081, %v2269
        %v2288 = vmul.f32 %v2082, %v2269
        %v2289 = vmul.f32 %v2083, %v2269
        %v2290 = vmul.f32 %v2084, %v2269
        %v2292 = vperm.slane %v2267, 0
        %v2294 = vadd.f32 %v2271, %v2292
        %v2295 = vadd.f32 %v2272, %v2292
        %v2296 = vadd.f32 %v2273, %v2292
        %v2297 = vadd.f32 %v2274, %v2292
        %v2298 = vadd.f32 %v2275, %v2292
        %v2299 = vadd.f32 %v2276, %v2292
        %v2300 = vadd.f32 %v2277, %v2292
        %v2301 = vadd.f32 %v2278, %v2292
        %v2302 = vadd.f32 %v2279, %v2292
        %v2303 = vadd.f32 %v2280, %v2292
        %v2304 = vadd.f32 %v2281, %v2292
        %v2305 = vadd.f32 %v2282, %v2292
        %v2306 = vadd.f32 %v2283, %v2292
        %v2307 = vadd.f32 %v2284, %v2292
        %v2308 = vadd.f32 %v2285, %v2292
        %v2309 = vadd.f32 %v2286, %v2292
        %v2310 = vadd.f32 %v2287, %v2292
        %v2311 = vadd.f32 %v2288, %v2292
        %v2312 = vadd.f32 %v2289, %v2292
        %v2313 = vadd.f32 %v2290, %v2292
        %v2314 = vmax.f32 %v2294, 0.0
        %v2315 = vmax.f32 %v2295, 0.0
        %v2316 = vmax.f32 %v2296, 0.0
        %v2317 = vmax.f32 %v2297, 0.0
        %v2318 = vmax.f32 %v2298, 0.0
        %v2319 = vmax.f32 %v2299, 0.0
        %v2320 = vmax.f32 %v2300, 0.0
        %v2321 = vmax.f32 %v2301, 0.0
        %v2322 = vmax.f32 %v2302, 0.0
        %v2323 = vmax.f32 %v2303, 0.0
        %v2324 = vmax.f32 %v2304, 0.0
        %v2325 = vmax.f32 %v2305, 0.0
        %v2326 = vmax.f32 %v2306, 0.0
        %v2327 = vmax.f32 %v2307, 0.0
        %v2328 = vmax.f32 %v2308, 0.0
        %v2329 = vmax.f32 %v2309, 0.0
        %v2330 = vmax.f32 %v2310, 0.0
        %v2331 = vmax.f32 %v2311, 0.0
        %v2332 = vmax.f32 %v2312, 0.0
        %v2333 = vmax.f32 %v2313, 0.0
        %vm2334 = vcmp.eq.s32.totalorder %v558, 0
        %vm2335 = vcmp.eq.s32.totalorder %v559, 0
        %vm2336 = vcmp.eq.s32.totalorder %v560, 0
        %vm2337 = vcmp.eq.s32.totalorder %v561, 0
        %vm2338 = vcmp.eq.s32.totalorder %v562, 0
        %vm2339 = vcmp.eq.s32.totalorder %v563, 0
        %vm2340 = vcmp.eq.s32.totalorder %v564, 0
        %vm2341 = vcmp.eq.s32.totalorder %v565, 0
        %vm2342 = vcmp.eq.s32.totalorder %v566, 0
        %vm2343 = vcmp.eq.s32.totalorder %v567, 0
        %vm2344 = vcmp.eq.s32.totalorder %v568, 0
        %vm2345 = vcmp.eq.s32.totalorder %v569, 0
        %vm2346 = vcmp.eq.s32.totalorder %v570, 0
        %vm2347 = vcmp.eq.s32.totalorder %v571, 0
        %vm2348 = vcmp.eq.s32.totalorder %v572, 0
        %vm2349 = vcmp.eq.s32.totalorder %v573, 0
        %vm2350 = vcmp.eq.s32.totalorder %v574, 0
        %vm2351 = vcmp.eq.s32.totalorder %v575, 0
        %vm2352 = vcmp.eq.s32.totalorder %v576, 0
        %vm2353 = vcmp.eq.s32.totalorder %v577, 0
        %vm2354 = vcmp.eq.s32.totalorder %v558, 9
        %vm2355 = vcmp.eq.s32.totalorder %v559, 9
        %vm2356 = vcmp.eq.s32.totalorder %v560, 9
        %vm2357 = vcmp.eq.s32.totalorder %v561, 9
        %vm2358 = vcmp.eq.s32.totalorder %v562, 9
        %vm2359 = vcmp.eq.s32.totalorder %v563, 9
        %vm2360 = vcmp.eq.s32.totalorder %v564, 9
        %vm2361 = vcmp.eq.s32.totalorder %v565, 9
        %vm2362 = vcmp.eq.s32.totalorder %v566, 9
        %vm2363 = vcmp.eq.s32.totalorder %v567, 9
        %vm2364 = vcmp.eq.s32.totalorder %v568, 9
        %vm2365 = vcmp.eq.s32.totalorder %v569, 9
        %vm2366 = vcmp.eq.s32.totalorder %v570, 9
        %vm2367 = vcmp.eq.s32.totalorder %v571, 9
        %vm2368 = vcmp.eq.s32.totalorder %v572, 9
        %vm2369 = vcmp.eq.s32.totalorder %v573, 9
        %vm2370 = vcmp.eq.s32.totalorder %v574, 9
        %vm2371 = vcmp.eq.s32.totalorder %v575, 9
        %vm2372 = vcmp.eq.s32.totalorder %v576, 9
        %vm2373 = vcmp.eq.s32.totalorder %v577, 9
        %vm2374 = vcmp.eq.s32.totalorder %v598, 0
        %vm2375 = vcmp.eq.s32.totalorder %v599, 0
        %vm2376 = vcmp.eq.s32.totalorder %v600, 0
        %vm2377 = vcmp.eq.s32.totalorder %v601, 0
        %vm2378 = vcmp.eq.s32.totalorder %v602, 0
        %vm2379 = vcmp.eq.s32.totalorder %v603, 0
        %vm2380 = vcmp.eq.s32.totalorder %v604, 0
        %vm2381 = vcmp.eq.s32.totalorder %v605, 0
        %vm2382 = vcmp.eq.s32.totalorder %v606, 0
        %vm2383 = vcmp.eq.s32.totalorder %v607, 0
        %vm2384 = vcmp.eq.s32.totalorder %v608, 0
        %vm2385 = vcmp.eq.s32.totalorder %v609, 0
        %vm2386 = vcmp.eq.s32.totalorder %v610, 0
        %vm2387 = vcmp.eq.s32.totalorder %v611, 0
        %vm2388 = vcmp.eq.s32.totalorder %v612, 0
        %vm2389 = vcmp.eq.s32.totalorder %v613, 0
        %vm2390 = vcmp.eq.s32.totalorder %v614, 0
        %vm2391 = vcmp.eq.s32.totalorder %v615, 0
        %vm2392 = vcmp.eq.s32.totalorder %v616, 0
        %vm2393 = vcmp.eq.s32.totalorder %v617, 0
        %vm2394 = vcmp.eq.s32.totalorder %v598, 9
        %vm2395 = vcmp.eq.s32.totalorder %v599, 9
        %vm2396 = vcmp.eq.s32.totalorder %v600, 9
        %vm2397 = vcmp.eq.s32.totalorder %v601, 9
        %vm2398 = vcmp.eq.s32.totalorder %v602, 9
        %vm2399 = vcmp.eq.s32.totalorder %v603, 9
        %vm2400 = vcmp.eq.s32.totalorder %v604, 9
        %vm2401 = vcmp.eq.s32.totalorder %v605, 9
        %vm2402 = vcmp.eq.s32.totalorder %v606, 9
        %vm2403 = vcmp.eq.s32.totalorder %v607, 9
        %vm2404 = vcmp.eq.s32.totalorder %v608, 9
        %vm2405 = vcmp.eq.s32.totalorder %v609, 9
        %vm2406 = vcmp.eq.s32.totalorder %v610, 9
        %vm2407 = vcmp.eq.s32.totalorder %v611, 9
        %vm2408 = vcmp.eq.s32.totalorder %v612, 9
        %vm2409 = vcmp.eq.s32.totalorder %v613, 9
        %vm2410 = vcmp.eq.s32.totalorder %v614, 9
        %vm2411 = vcmp.eq.s32.totalorder %v615, 9
        %vm2412 = vcmp.eq.s32.totalorder %v616, 9
        %vm2413 = vcmp.eq.s32.totalorder %v617, 9
        %v2414 = vrot.slane %v2314, 7
        %v2415 = vrot.slane %v2315, 7
        %v2416 = vrot.slane %v2316, 7
        %v2417 = vrot.slane %v2317, 7
        %v2418 = vrot.slane %v2318, 7
        %v2419 = vrot.slane %v2319, 7
        %v2420 = vrot.slane %v2320, 7
        %v2421 = vrot.slane %v2321, 7
        %v2422 = vrot.slane %v2322, 7
        %v2423 = vrot.slane %v2323, 7
        %v2424 = vrot.slane %v2324, 7
        %v2425 = vrot.slane %v2325, 7
        %v2426 = vrot.slane %v2326, 7
        %v2427 = vrot.slane %v2327, 7
        %v2428 = vrot.slane %v2328, 7
        %v2429 = vrot.slane %v2329, 7
        %v2430 = vrot.slane %v2330, 7
        %v2431 = vrot.slane %v2331, 7
        %v2432 = vrot.slane %v2332, 7
        %v2433 = vrot.slane %v2333, 7
        %vm2434 = vcmp.lt.s32.totalorder %v451, 1
        %v2435 = vsel %vm2434, %v2432, %v2433
        %v2436 = vsel %vm2434, %v2431, %v2432
        %v2437 = vsel %vm2434, %v2430, %v2431
        %v2438 = vsel %vm2434, %v2429, %v2430
        %v2439 = vsel %vm2434, %v2428, %v2429
        %v2440 = vsel %vm2434, %v2427, %v2428
        %v2441 = vsel %vm2434, %v2426, %v2427
        %v2442 = vsel %vm2434, %v2425, %v2426
        %v2443 = vsel %vm2434, %v2424, %v2425
        %v2444 = vsel %vm2434, %v2423, %v2424
        %v2445 = vsel %vm2434, %v2422, %v2423
        %v2446 = vsel %vm2434, %v2421, %v2422
        %v2447 = vsel %vm2434, %v2420, %v2421
        %v2448 = vsel %vm2434, %v2419, %v2420
        %v2449 = vsel %vm2434, %v2418, %v2419
        %v2450 = vsel %vm2434, %v2417, %v2418
        %v2451 = vsel %vm2434, %v2416, %v2417
        %v2452 = vsel %vm2434, %v2415, %v2416
        %v2453 = vsel %vm2434, %v2414, %v2415
        %v2454 = vsel %vm2434, %v2433, %v2414
        %v2455 = vsel %vm2334, 1, 0
        %v2456 = vsel %vm2335, 1, 0
        %v2457 = vsel %vm2336, 1, 0
        %v2458 = vsel %vm2337, 1, 0
        %v2459 = vsel %vm2338, 1, 0
        %v2460 = vsel %vm2339, 1, 0
        %v2461 = vsel %vm2340, 1, 0
        %v2462 = vsel %vm2341, 1, 0
        %v2463 = vsel %vm2342, 1, 0
        %v2464 = vsel %vm2343, 1, 0
        %v2465 = vsel %vm2344, 1, 0
        %v2466 = vsel %vm2345, 1, 0
        %v2467 = vsel %vm2346, 1, 0
        %v2468 = vsel %vm2347, 1, 0
        %v2469 = vsel %vm2348, 1, 0
        %v2470 = vsel %vm2349, 1, 0
        %v2471 = vsel %vm2350, 1, 0
        %v2472 = vsel %vm2351, 1, 0
        %v2473 = vsel %vm2352, 1, 0
        %v2474 = vsel %vm2353, 1, 0
        %vm2475 = vcmp.eq.s32.totalorder %v2455, 1
        %vm2476 = vcmp.eq.s32.totalorder %v2456, 1
        %vm2477 = vcmp.eq.s32.totalorder %v2457, 1
        %vm2478 = vcmp.eq.s32.totalorder %v2458, 1
        %vm2479 = vcmp.eq.s32.totalorder %v2459, 1
        %vm2480 = vcmp.eq.s32.totalorder %v2460, 1
        %vm2481 = vcmp.eq.s32.totalorder %v2461, 1
        %vm2482 = vcmp.eq.s32.totalorder %v2462, 1
        %vm2483 = vcmp.eq.s32.totalorder %v2463, 1
        %vm2484 = vcmp.eq.s32.totalorder %v2464, 1
        %vm2485 = vcmp.eq.s32.totalorder %v2465, 1
        %vm2486 = vcmp.eq.s32.totalorder %v2466, 1
        %vm2487 = vcmp.eq.s32.totalorder %v2467, 1
        %vm2488 = vcmp.eq.s32.totalorder %v2468, 1
        %vm2489 = vcmp.eq.s32.totalorder %v2469, 1
        %vm2490 = vcmp.eq.s32.totalorder %v2470, 1
        %vm2491 = vcmp.eq.s32.totalorder %v2471, 1
        %vm2492 = vcmp.eq.s32.totalorder %v2472, 1
        %vm2493 = vcmp.eq.s32.totalorder %v2473, 1
        %vm2494 = vcmp.eq.s32.totalorder %v2474, 1
        %v2495 = vsel %vm2475, %v2452, %v2436
        %v2496 = vsel %vm2476, %v2451, %v2435
        %v2497 = vsel %vm2477, %v2450, %v2454
        %v2498 = vsel %vm2478, %v2449, %v2453
        %v2499 = vsel %vm2479, %v2448, %v2452
        %v2500 = vsel %vm2480, %v2447, %v2451
        %v2501 = vsel %vm2481, %v2446, %v2450
        %v2502 = vsel %vm2482, %v2445, %v2449
        %v2503 = vsel %vm2483, %v2444, %v2448
        %v2504 = vsel %vm2484, %v2443, %v2447
        %v2505 = vsel %vm2485, %v2442, %v2446
        %v2506 = vsel %vm2486, %v2441, %v2445
        %v2507 = vsel %vm2487, %v2440, %v2444
        %v2508 = vsel %vm2488, %v2439, %v2443
        %v2509 = vsel %vm2489, %v2438, %v2442
        %v2510 = vsel %vm2490, %v2437, %v2441
        %v2511 = vsel %vm2491, %v2436, %v2440
        %v2512 = vsel %vm2492, %v2435, %v2439
        %v2513 = vsel %vm2493, %v2454, %v2438
        %v2514 = vsel %vm2494, %v2453, %v2437
        %v2515 = vsel %vm2354, 1, 0
        %v2516 = vsel %vm2355, 1, 0
        %v2517 = vsel %vm2356, 1, 0
        %v2518 = vsel %vm2357, 1, 0
        %v2519 = vsel %vm2358, 1, 0
        %v2520 = vsel %vm2359, 1, 0
        %v2521 = vsel %vm2360, 1, 0
        %v2522 = vsel %vm2361, 1, 0
        %v2523 = vsel %vm2362, 1, 0
        %v2524 = vsel %vm2363, 1, 0
        %v2525 = vsel %vm2364, 1, 0
        %v2526 = vsel %vm2365, 1, 0
        %v2527 = vsel %vm2366, 1, 0
        %v2528 = vsel %vm2367, 1, 0
        %v2529 = vsel %vm2368, 1, 0
        %v2530 = vsel %vm2369, 1, 0
        %v2531 = vsel %vm2370, 1, 0
        %v2532 = vsel %vm2371, 1, 0
        %v2533 = vsel %vm2372, 1, 0
        %v2534 = vsel %vm2373, 1, 0
        %vm2535 = vcmp.eq.s32.totalorder %v2515, 1
        %vm2536 = vcmp.eq.s32.totalorder %v2516, 1
        %vm2537 = vcmp.eq.s32.totalorder %v2517, 1
        %vm2538 = vcmp.eq.s32.totalorder %v2518, 1
        %vm2539 = vcmp.eq.s32.totalorder %v2519, 1
        %vm2540 = vcmp.eq.s32.totalorder %v2520, 1
        %vm2541 = vcmp.eq.s32.totalorder %v2521, 1
        %vm2542 = vcmp.eq.s32.totalorder %v2522, 1
        %vm2543 = vcmp.eq.s32.totalorder %v2523, 1
        %vm2544 = vcmp.eq.s32.totalorder %v2524, 1
        %vm2545 = vcmp.eq.s32.totalorder %v2525, 1
        %vm2546 = vcmp.eq.s32.totalorder %v2526, 1
        %vm2547 = vcmp.eq.s32.totalorder %v2527, 1
        %vm2548 = vcmp.eq.s32.totalorder %v2528, 1
        %vm2549 = vcmp.eq.s32.totalorder %v2529, 1
        %vm2550 = vcmp.eq.s32.totalorder %v2530, 1
        %vm2551 = vcmp.eq.s32.totalorder %v2531, 1
        %vm2552 = vcmp.eq.s32.totalorder %v2532, 1
        %vm2553 = vcmp.eq.s32.totalorder %v2533, 1
        %vm2554 = vcmp.eq.s32.totalorder %v2534, 1
        %v2555 = vsel %vm2535, %v2440, %v2495
        %v2556 = vsel %vm2536, %v2439, %v2496
        %v2557 = vsel %vm2537, %v2438, %v2497
        %v2558 = vsel %vm2538, %v2437, %v2498
        %v2559 = vsel %vm2539, %v2436, %v2499
        %v2560 = vsel %vm2540, %v2435, %v2500
        %v2561 = vsel %vm2541, %v2454, %v2501
        %v2562 = vsel %vm2542, %v2453, %v2502
        %v2563 = vsel %vm2543, %v2452, %v2503
        %v2564 = vsel %vm2544, %v2451, %v2504
        %v2565 = vsel %vm2545, %v2450, %v2505
        %v2566 = vsel %vm2546, %v2449, %v2506
        %v2567 = vsel %vm2547, %v2448, %v2507
        %v2568 = vsel %vm2548, %v2447, %v2508
        %v2569 = vsel %vm2549, %v2446, %v2509
        %v2570 = vsel %vm2550, %v2445, %v2510
        %v2571 = vsel %vm2551, %v2444, %v2511
        %v2572 = vsel %vm2552, %v2443, %v2512
        %v2573 = vsel %vm2553, %v2442, %v2513
        %v2574 = vsel %vm2554, %v2441, %v2514
        %v2575 = vrot.slane %v2555, 2
        %v2576 = vrot.slane %v2556, 2
        %v2577 = vrot.slane %v2557, 2
        %v2578 = vrot.slane %v2558, 2
        %v2579 = vrot.slane %v2559, 2
        %v2580 = vrot.slane %v2560, 2
        %v2581 = vrot.slane %v2561, 2
        %v2582 = vrot.slane %v2562, 2
        %v2583 = vrot.slane %v2563, 2
        %v2584 = vrot.slane %v2564, 2
        %v2585 = vrot.slane %v2565, 2
        %v2586 = vrot.slane %v2566, 2
        %v2587 = vrot.slane %v2567, 2
        %v2588 = vrot.slane %v2568, 2
        %v2589 = vrot.slane %v2569, 2
        %v2590 = vrot.slane %v2570, 2
        %v2591 = vrot.slane %v2571, 2
        %v2592 = vrot.slane %v2572, 2
        %v2593 = vrot.slane %v2573, 2
        %v2594 = vrot.slane %v2574, 2
        %v2595 = vsel %vm1046, %v2593, %v2594
        %v2596 = vsel %vm1046, %v2592, %v2593
        %v2597 = vsel %vm1046, %v2591, %v2592
        %v2598 = vsel %vm1046, %v2590, %v2591
        %v2599 = vsel %vm1046, %v2589, %v2590
        %v2600 = vsel %vm1046, %v2588, %v2589
        %v2601 = vsel %vm1046, %v2587, %v2588
        %v2602 = vsel %vm1046, %v2586, %v2587
        %v2603 = vsel %vm1046, %v2585, %v2586
        %v2604 = vsel %vm1046, %v2584, %v2585
        %v2605 = vsel %vm1046, %v2583, %v2584
        %v2606 = vsel %vm1046, %v2582, %v2583
        %v2607 = vsel %vm1046, %v2581, %v2582
        %v2608 = vsel %vm1046, %v2580, %v2581
        %v2609 = vsel %vm1046, %v2579, %v2580
        %v2610 = vsel %vm1046, %v2578, %v2579
        %v2611 = vsel %vm1046, %v2577, %v2578
        %v2612 = vsel %vm1046, %v2576, %v2577
        %v2613 = vsel %vm1046, %v2575, %v2576
        %v2614 = vsel %vm1046, %v2594, %v2575
        %v2615 = vsel %vm2374, 1, 0
        %v2616 = vsel %vm2375, 1, 0
        %v2617 = vsel %vm2376, 1, 0
        %v2618 = vsel %vm2377, 1, 0
        %v2619 = vsel %vm2378, 1, 0
        %v2620 = vsel %vm2379, 1, 0
        %v2621 = vsel %vm2380, 1, 0
        %v2622 = vsel %vm2381, 1, 0
        %v2623 = vsel %vm2382, 1, 0
        %v2624 = vsel %vm2383, 1, 0
        %v2625 = vsel %vm2384, 1, 0
        %v2626 = vsel %vm2385, 1, 0
        %v2627 = vsel %vm2386, 1, 0
        %v2628 = vsel %vm2387, 1, 0
        %v2629 = vsel %vm2388, 1, 0
        %v2630 = vsel %vm2389, 1, 0
        %v2631 = vsel %vm2390, 1, 0
        %v2632 = vsel %vm2391, 1, 0
        %v2633 = vsel %vm2392, 1, 0
        %v2634 = vsel %vm2393, 1, 0
        %vm2635 = vcmp.eq.s32.totalorder %v2615, 1
        %vm2636 = vcmp.eq.s32.totalorder %v2616, 1
        %vm2637 = vcmp.eq.s32.totalorder %v2617, 1
        %vm2638 = vcmp.eq.s32.totalorder %v2618, 1
        %vm2639 = vcmp.eq.s32.totalorder %v2619, 1
        %vm2640 = vcmp.eq.s32.totalorder %v2620, 1
        %vm2641 = vcmp.eq.s32.totalorder %v2621, 1
        %vm2642 = vcmp.eq.s32.totalorder %v2622, 1
        %vm2643 = vcmp.eq.s32.totalorder %v2623, 1
        %vm2644 = vcmp.eq.s32.totalorder %v2624, 1
        %vm2645 = vcmp.eq.s32.totalorder %v2625, 1
        %vm2646 = vcmp.eq.s32.totalorder %v2626, 1
        %vm2647 = vcmp.eq.s32.totalorder %v2627, 1
        %vm2648 = vcmp.eq.s32.totalorder %v2628, 1
        %vm2649 = vcmp.eq.s32.totalorder %v2629, 1
        %vm2650 = vcmp.eq.s32.totalorder %v2630, 1
        %vm2651 = vcmp.eq.s32.totalorder %v2631, 1
        %vm2652 = vcmp.eq.s32.totalorder %v2632, 1
        %vm2653 = vcmp.eq.s32.totalorder %v2633, 1
        %vm2654 = vcmp.eq.s32.totalorder %v2634, 1
        %v2655 = vsel %vm2635, %v2613, %v2555
        %v2656 = vsel %vm2636, %v2612, %v2556
        %v2657 = vsel %vm2637, %v2611, %v2557
        %v2658 = vsel %vm2638, %v2610, %v2558
        %v2659 = vsel %vm2639, %v2609, %v2559
        %v2660 = vsel %vm2640, %v2608, %v2560
        %v2661 = vsel %vm2641, %v2607, %v2561
        %v2662 = vsel %vm2642, %v2606, %v2562
        %v2663 = vsel %vm2643, %v2605, %v2563
        %v2664 = vsel %vm2644, %v2604, %v2564
        %v2665 = vsel %vm2645, %v2603, %v2565
        %v2666 = vsel %vm2646, %v2602, %v2566
        %v2667 = vsel %vm2647, %v2601, %v2567
        %v2668 = vsel %vm2648, %v2600, %v2568
        %v2669 = vsel %vm2649, %v2599, %v2569
        %v2670 = vsel %vm2650, %v2598, %v2570
        %v2671 = vsel %vm2651, %v2597, %v2571
        %v2672 = vsel %vm2652, %v2596, %v2572
        %v2673 = vsel %vm2653, %v2595, %v2573
        %v2674 = vsel %vm2654, %v2614, %v2574
        %v2675 = vrot.slane %v2655, 6
        %v2676 = vrot.slane %v2656, 6
        %v2677 = vrot.slane %v2657, 6
        %v2678 = vrot.slane %v2658, 6
        %v2679 = vrot.slane %v2659, 6
        %v2680 = vrot.slane %v2660, 6
        %v2681 = vrot.slane %v2661, 6
        %v2682 = vrot.slane %v2662, 6
        %v2683 = vrot.slane %v2663, 6
        %v2684 = vrot.slane %v2664, 6
        %v2685 = vrot.slane %v2665, 6
        %v2686 = vrot.slane %v2666, 6
        %v2687 = vrot.slane %v2667, 6
        %v2688 = vrot.slane %v2668, 6
        %v2689 = vrot.slane %v2669, 6
        %v2690 = vrot.slane %v2670, 6
        %v2691 = vrot.slane %v2671, 6
        %v2692 = vrot.slane %v2672, 6
        %v2693 = vrot.slane %v2673, 6
        %v2694 = vrot.slane %v2674, 6
        %vm2695 = vcmp.lt.s32.totalorder %v451, 2
        %v2696 = vsel %vm2695, %v2693, %v2694
        %v2697 = vsel %vm2695, %v2692, %v2693
        %v2698 = vsel %vm2695, %v2691, %v2692
        %v2699 = vsel %vm2695, %v2690, %v2691
        %v2700 = vsel %vm2695, %v2689, %v2690
        %v2701 = vsel %vm2695, %v2688, %v2689
        %v2702 = vsel %vm2695, %v2687, %v2688
        %v2703 = vsel %vm2695, %v2686, %v2687
        %v2704 = vsel %vm2695, %v2685, %v2686
        %v2705 = vsel %vm2695, %v2684, %v2685
        %v2706 = vsel %vm2695, %v2683, %v2684
        %v2707 = vsel %vm2695, %v2682, %v2683
        %v2708 = vsel %vm2695, %v2681, %v2682
        %v2709 = vsel %vm2695, %v2680, %v2681
        %v2710 = vsel %vm2695, %v2679, %v2680
        %v2711 = vsel %vm2695, %v2678, %v2679
        %v2712 = vsel %vm2695, %v2677, %v2678
        %v2713 = vsel %vm2695, %v2676, %v2677
        %v2714 = vsel %vm2695, %v2675, %v2676
        %v2715 = vsel %vm2695, %v2694, %v2675
        %v2716 = vsel %vm2394, 1, 0
        %v2717 = vsel %vm2395, 1, 0
        %v2718 = vsel %vm2396, 1, 0
        %v2719 = vsel %vm2397, 1, 0
        %v2720 = vsel %vm2398, 1, 0
        %v2721 = vsel %vm2399, 1, 0
        %v2722 = vsel %vm2400, 1, 0
        %v2723 = vsel %vm2401, 1, 0
        %v2724 = vsel %vm2402, 1, 0
        %v2725 = vsel %vm2403, 1, 0
        %v2726 = vsel %vm2404, 1, 0
        %v2727 = vsel %vm2405, 1, 0
        %v2728 = vsel %vm2406, 1, 0
        %v2729 = vsel %vm2407, 1, 0
        %v2730 = vsel %vm2408, 1, 0
        %v2731 = vsel %vm2409, 1, 0
        %v2732 = vsel %vm2410, 1, 0
        %v2733 = vsel %vm2411, 1, 0
        %v2734 = vsel %vm2412, 1, 0
        %v2735 = vsel %vm2413, 1, 0
        %vm2736 = vcmp.eq.s32.totalorder %v2716, 1
        %vm2737 = vcmp.eq.s32.totalorder %v2717, 1
        %vm2738 = vcmp.eq.s32.totalorder %v2718, 1
        %vm2739 = vcmp.eq.s32.totalorder %v2719, 1
        %vm2740 = vcmp.eq.s32.totalorder %v2720, 1
        %vm2741 = vcmp.eq.s32.totalorder %v2721, 1
        %vm2742 = vcmp.eq.s32.totalorder %v2722, 1
        %vm2743 = vcmp.eq.s32.totalorder %v2723, 1
        %vm2744 = vcmp.eq.s32.totalorder %v2724, 1
        %vm2745 = vcmp.eq.s32.totalorder %v2725, 1
        %vm2746 = vcmp.eq.s32.totalorder %v2726, 1
        %vm2747 = vcmp.eq.s32.totalorder %v2727, 1
        %vm2748 = vcmp.eq.s32.totalorder %v2728, 1
        %vm2749 = vcmp.eq.s32.totalorder %v2729, 1
        %vm2750 = vcmp.eq.s32.totalorder %v2730, 1
        %vm2751 = vcmp.eq.s32.totalorder %v2731, 1
        %vm2752 = vcmp.eq.s32.totalorder %v2732, 1
        %vm2753 = vcmp.eq.s32.totalorder %v2733, 1
        %vm2754 = vcmp.eq.s32.totalorder %v2734, 1
        %vm2755 = vcmp.eq.s32.totalorder %v2735, 1
        %v2756 = vsel %vm2736, %v2715, %v2655
        %v2757 = vsel %vm2737, %v2714, %v2656
        %v2758 = vsel %vm2738, %v2713, %v2657
        %v2759 = vsel %vm2739, %v2712, %v2658
        %v2760 = vsel %vm2740, %v2711, %v2659
        %v2761 = vsel %vm2741, %v2710, %v2660
        %v2762 = vsel %vm2742, %v2709, %v2661
        %v2763 = vsel %vm2743, %v2708, %v2662
        %v2764 = vsel %vm2744, %v2707, %v2663
        %v2765 = vsel %vm2745, %v2706, %v2664
        %v2766 = vsel %vm2746, %v2705, %v2665
        %v2767 = vsel %vm2747, %v2704, %v2666
        %v2768 = vsel %vm2748, %v2703, %v2667
        %v2769 = vsel %vm2749, %v2702, %v2668
        %v2770 = vsel %vm2750, %v2701, %v2669
        %v2771 = vsel %vm2751, %v2700, %v2670
        %v2772 = vsel %vm2752, %v2699, %v2671
        %v2773 = vsel %vm2753, %v2698, %v2672
        %v2774 = vsel %vm2754, %v2697, %v2673
        %v2775 = vsel %vm2755, %v2696, %v2674
        %v2776 = vpack.c.bf16 %v2757, %v2756
        %v2777 = vpack.c.bf16 %v2759, %v2758
        %v2778 = vpack.c.bf16 %v2761, %v2760
        %v2779 = vpack.c.bf16 %v2763, %v2762
        %v2780 = vpack.c.bf16 %v2765, %v2764
        %v2781 = vpack.c.bf16 %v2767, %v2766
        %v2782 = vpack.c.bf16 %v2769, %v2768
        %v2783 = vpack.c.bf16 %v2771, %v2770
        %v2784 = vpack.c.bf16 %v2773, %v2772
        %v2785 = vpack.c.bf16 %v2775, %v2774
        %v2786 = vld [vmem:[#allocation10] sm:$0xf]
        %v2787 = vld [vmem:[#allocation10 + $0x4] sm:$0xf]
        %v2788 = vld [vmem:[#allocation10 + $0x8] sm:$0xf]
        %v2789 = vld [vmem:[#allocation10 + $0xc] sm:$0xf]
        %v2790 = vld [vmem:[#allocation10 + $0x10] sm:$0xf]
        %v2791 = vld [vmem:[#allocation10 + $0x14] sm:$0xf]
        %v2792 = vld [vmem:[#allocation10 + $0x18] sm:$0xf]
        %v2793 = vld [vmem:[#allocation10 + $0x1c] sm:$0xf]
        %v2794 = vld [vmem:[#allocation10 + $0x20] sm:$0xf]
        %v2795 = vld [vmem:[#allocation10 + $0x24] sm:$0xf]
        %v2796 = vld [vmem:[#allocation10 + $0x28] sm:$0xf]
        %v2797 = vld [vmem:[#allocation10 + $0x2c] sm:$0xf]
        %v2798 = vld [vmem:[#allocation10 + $0x30] sm:$0xf]
        %v2799 = vld [vmem:[#allocation10 + $0x34] sm:$0xf]
        %v2800 = vld [vmem:[#allocation10 + $0x38] sm:$0xf]
        %v2801 = vld [vmem:[#allocation10 + $0x3c] sm:$0xf]
        %v2802 = vrot.slane %v2756, 1
        %v2803 = vrot.slane %v2757, 1
        %v2804 = vrot.slane %v2758, 1
        %v2805 = vrot.slane %v2759, 1
        %v2806 = vrot.slane %v2760, 1
        %v2807 = vrot.slane %v2761, 1
        %v2808 = vrot.slane %v2762, 1
        %v2809 = vrot.slane %v2763, 1
        %v2810 = vrot.slane %v2764, 1
        %v2811 = vrot.slane %v2765, 1
        %v2812 = vrot.slane %v2766, 1
        %v2813 = vrot.slane %v2767, 1
        %v2814 = vrot.slane %v2768, 1
        %v2815 = vrot.slane %v2769, 1
        %v2816 = vrot.slane %v2770, 1
        %v2817 = vrot.slane %v2771, 1
        %v2818 = vrot.slane %v2772, 1
        %v2819 = vrot.slane %v2773, 1
        %v2820 = vrot.slane %v2774, 1
        %v2821 = vrot.slane %v2775, 1
        %v2822 = vsel %vm764, %v2820, %v2821
        %v2823 = vsel %vm764, %v2819, %v2820
        %v2824 = vsel %vm764, %v2818, %v2819
        %v2825 = vsel %vm764, %v2817, %v2818
        %v2826 = vsel %vm764, %v2816, %v2817
        %v2827 = vsel %vm764, %v2815, %v2816
        %v2828 = vsel %vm764, %v2814, %v2815
        %v2829 = vsel %vm764, %v2813, %v2814
        %v2830 = vsel %vm764, %v2812, %v2813
        %v2831 = vsel %vm764, %v2811, %v2812
        %v2832 = vsel %vm764, %v2810, %v2811
        %v2833 = vsel %vm764, %v2809, %v2810
        %v2834 = vsel %vm764, %v2808, %v2809
        %v2835 = vsel %vm764, %v2807, %v2808
        %v2836 = vsel %vm764, %v2806, %v2807
        %v2837 = vsel %vm764, %v2805, %v2806
        %v2838 = vsel %vm764, %v2804, %v2805
        %v2839 = vsel %vm764, %v2803, %v2804
        %v2840 = vsel %vm764, %v2802, %v2803
        %v2841 = vsel %vm764, %v2821, %v2802
        %v2842 = vpack.c.bf16 %v2839, %v2840
        %v2843 = vpack.c.bf16 %v2837, %v2838
        %v2844 = vpack.c.bf16 %v2835, %v2836
        %v2845 = vpack.c.bf16 %v2833, %v2834
        %v2846 = vpack.c.bf16 %v2831, %v2832
        %v2847 = vpack.c.bf16 %v2829, %v2830
        %v2848 = vpack.c.bf16 %v2827, %v2828
        %v2849 = vpack.c.bf16 %v2825, %v2826
        %v2850 = vpack.c.bf16 %v2823, %v2824
        %v2851 = vpack.c.bf16 %v2841, %v2822
        %s2852 = scalar_lea.vmem [#allocation10], 64
        %v2853 = vld [vmem:[%s2852] sm:$0xf]
        %v2854 = vld [vmem:[%s2852 + $0x4] sm:$0xf]
        %v2855 = vld [vmem:[%s2852 + $0x8] sm:$0xf]
        %v2856 = vld [vmem:[%s2852 + $0xc] sm:$0xf]
        %v2857 = vld [vmem:[%s2852 + $0x10] sm:$0xf]
        %v2858 = vld [vmem:[%s2852 + $0x14] sm:$0xf]
        %v2859 = vld [vmem:[%s2852 + $0x18] sm:$0xf]
        %v2860 = vld [vmem:[%s2852 + $0x1c] sm:$0xf]
        %v2861 = vld [vmem:[%s2852 + $0x20] sm:$0xf]
        %v2862 = vld [vmem:[%s2852 + $0x24] sm:$0xf]
        %v2863 = vld [vmem:[%s2852 + $0x28] sm:$0xf]
        %v2864 = vld [vmem:[%s2852 + $0x2c] sm:$0xf]
        %v2865 = vld [vmem:[%s2852 + $0x30] sm:$0xf]
        %v2866 = vld [vmem:[%s2852 + $0x34] sm:$0xf]
        %v2867 = vld [vmem:[%s2852 + $0x38] sm:$0xf]
        %v2868 = vld [vmem:[%s2852 + $0x3c] sm:$0xf]
        %v2885 = vunpack.c.l.b16 %v2853
        %v2886 = vunpack.c.l.b16 %v2854
        %v2887 = vunpack.c.l.b16 %v2855
        %v2888 = vunpack.c.l.b16 %v2856
        %v2889 = vunpack.c.l.b16 %v2857
        %v2890 = vunpack.c.l.b16 %v2858
        %v2891 = vunpack.c.l.b16 %v2859
        %v2892 = vunpack.c.l.b16 %v2860
        %v2893 = vunpack.c.l.b16 %v2861
        %v2894 = vunpack.c.l.b16 %v2862
        %v2895 = vunpack.c.l.b16 %v2863
        %v2896 = vunpack.c.l.b16 %v2864
        %v2897 = vunpack.c.l.b16 %v2865
        %v2898 = vunpack.c.l.b16 %v2866
        %v2899 = vunpack.c.l.b16 %v2867
        %v2900 = vunpack.c.l.b16 %v2868
        %v2901 = vpack.c.b16 %v2886, %v2885
        %v2902 = vpack.c.b16 %v2888, %v2887
        %v2903 = vpack.c.b16 %v2890, %v2889
        %v2904 = vpack.c.b16 %v2892, %v2891
        %v2905 = vpack.c.b16 %v2894, %v2893
        %v2906 = vpack.c.b16 %v2896, %v2895
        %v2907 = vpack.c.b16 %v2898, %v2897
        %v2908 = vpack.c.b16 %v2900, %v2899
        %2917 = vmatpush.bf16.msra.mxu0 %v2908
        %2918 = vmatpush.bf16.msra.mxu0 %v2907
        %2919 = vmatpush.bf16.msra.mxu0 %v2906
        %2920 = vmatpush.bf16.msra.mxu0 %v2905
        %2921 = vmatpush.bf16.msra.mxu0 %v2904
        %2922 = vmatpush.bf16.msra.mxu0 %v2903
        %2923 = vmatpush.bf16.msra.mxu0 %v2902
        %2924 = vmatpush.bf16.msra.mxu0 %v2901
        %2925 = vmatmul.bf16.gmra.mxu0 %v2842
        %v2926 = vpop.f32.mrf.mxu0
        %v2927 = vadd.f32 0.0, %v2926
        %v2928 = vpop.f32.mrf.mxu0
        %v2929 = vadd.f32 0.0, %v2928
        %2930 = vmatmul.bf16.gmra.mxu0 %v2843
        %v2931 = vpop.f32.mrf.mxu0
        %v2932 = vadd.f32 0.0, %v2931
        %v2933 = vpop.f32.mrf.mxu0
        %v2934 = vadd.f32 0.0, %v2933
        %2935 = vmatmul.bf16.gmra.mxu0 %v2844
        %v2936 = vpop.f32.mrf.mxu0
        %v2937 = vadd.f32 0.0, %v2936
        %v2938 = vpop.f32.mrf.mxu0
        %v2939 = vadd.f32 0.0, %v2938
        %2940 = vmatmul.bf16.gmra.mxu0 %v2845
        %v2941 = vpop.f32.mrf.mxu0
        %v2942 = vadd.f32 0.0, %v2941
        %v2943 = vpop.f32.mrf.mxu0
        %v2944 = vadd.f32 0.0, %v2943
        %2945 = vmatmul.bf16.gmra.mxu0 %v2846
        %v2946 = vpop.f32.mrf.mxu0
        %v2947 = vadd.f32 0.0, %v2946
        %v2948 = vpop.f32.mrf.mxu0
        %v2949 = vadd.f32 0.0, %v2948
        %2950 = vmatmul.bf16.gmra.mxu0 %v2847
        %v2951 = vpop.f32.mrf.mxu0
        %v2952 = vadd.f32 0.0, %v2951
        %v2953 = vpop.f32.mrf.mxu0
        %v2954 = vadd.f32 0.0, %v2953
        %2955 = vmatmul.bf16.gmra.mxu0 %v2848
        %v2956 = vpop.f32.mrf.mxu0
        %v2957 = vadd.f32 0.0, %v2956
        %v2958 = vpop.f32.mrf.mxu0
        %v2959 = vadd.f32 0.0, %v2958
        %2960 = vmatmul.bf16.gmra.mxu0 %v2849
        %v2961 = vpop.f32.mrf.mxu0
        %v2962 = vadd.f32 0.0, %v2961
        %v2963 = vpop.f32.mrf.mxu0
        %v2964 = vadd.f32 0.0, %v2963
        %2965 = vmatmul.bf16.gmra.mxu0 %v2850
        %v2966 = vpop.f32.mrf.mxu0
        %v2967 = vadd.f32 0.0, %v2966
        %v2968 = vpop.f32.mrf.mxu0
        %v2969 = vadd.f32 0.0, %v2968
        %2970 = vmatmul.bf16.gmra.mxu0 %v2851
        %v2971 = vpop.f32.mrf.mxu0
        %v2972 = vadd.f32 0.0, %v2971
        %v2973 = vpop.f32.mrf.mxu0
        %v2974 = vadd.f32 0.0, %v2973
        %2975 = vdwg.mxu0
        %v2992 = vunpack.c.l.b16 %v2786
        %v2993 = vunpack.c.l.b16 %v2787
        %v2994 = vunpack.c.l.b16 %v2788
        %v2995 = vunpack.c.l.b16 %v2789
        %v2996 = vunpack.c.l.b16 %v2790
        %v2997 = vunpack.c.l.b16 %v2791
        %v2998 = vunpack.c.l.b16 %v2792
        %v2999 = vunpack.c.l.b16 %v2793
        %v3000 = vunpack.c.l.b16 %v2794
        %v3001 = vunpack.c.l.b16 %v2795
        %v3002 = vunpack.c.l.b16 %v2796
        %v3003 = vunpack.c.l.b16 %v2797
        %v3004 = vunpack.c.l.b16 %v2798
        %v3005 = vunpack.c.l.b16 %v2799
        %v3006 = vunpack.c.l.b16 %v2800
        %v3007 = vunpack.c.l.b16 %v2801
        %v3008 = vpack.c.b16 %v2993, %v2992
        %v3009 = vpack.c.b16 %v2995, %v2994
        %v3010 = vpack.c.b16 %v2997, %v2996
        %v3011 = vpack.c.b16 %v2999, %v2998
        %v3012 = vpack.c.b16 %v3001, %v3000
        %v3013 = vpack.c.b16 %v3003, %v3002
        %v3014 = vpack.c.b16 %v3005, %v3004
        %v3015 = vpack.c.b16 %v3007, %v3006
        %3024 = vmatpush.bf16.msra.mxu0 %v3015
        %3025 = vmatpush.bf16.msra.mxu0 %v3014
        %3026 = vmatpush.bf16.msra.mxu0 %v3013
        %3027 = vmatpush.bf16.msra.mxu0 %v3012
        %3028 = vmatpush.bf16.msra.mxu0 %v3011
        %3029 = vmatpush.bf16.msra.mxu0 %v3010
        %3030 = vmatpush.bf16.msra.mxu0 %v3009
        %3031 = vmatpush.bf16.msra.mxu0 %v3008
        %3032 = vmatmul.bf16.gmra.mxu0 %v2776
        %v3033 = vpop.f32.mrf.mxu0
        %v3034 = vadd.f32 %v2927, %v3033
        %v3035 = vpop.f32.mrf.mxu0
        %v3036 = vadd.f32 %v2929, %v3035
        %3037 = vmatmul.bf16.gmra.mxu0 %v2777
        %v3038 = vpop.f32.mrf.mxu0
        %v3039 = vadd.f32 %v2932, %v3038
        %v3040 = vpop.f32.mrf.mxu0
        %v3041 = vadd.f32 %v2934, %v3040
        %3042 = vmatmul.bf16.gmra.mxu0 %v2778
        %v3043 = vpop.f32.mrf.mxu0
        %v3044 = vadd.f32 %v2937, %v3043
        %v3045 = vpop.f32.mrf.mxu0
        %v3046 = vadd.f32 %v2939, %v3045
        %3047 = vmatmul.bf16.gmra.mxu0 %v2779
        %v3048 = vpop.f32.mrf.mxu0
        %v3049 = vadd.f32 %v2942, %v3048
        %v3050 = vpop.f32.mrf.mxu0
        %v3051 = vadd.f32 %v2944, %v3050
        %3052 = vmatmul.bf16.gmra.mxu0 %v2780
        %v3053 = vpop.f32.mrf.mxu0
        %v3054 = vadd.f32 %v2947, %v3053
        %v3055 = vpop.f32.mrf.mxu0
        %v3056 = vadd.f32 %v2949, %v3055
        %3057 = vmatmul.bf16.gmra.mxu0 %v2781
        %v3058 = vpop.f32.mrf.mxu0
        %v3059 = vadd.f32 %v2952, %v3058
        %v3060 = vpop.f32.mrf.mxu0
        %v3061 = vadd.f32 %v2954, %v3060
        %3062 = vmatmul.bf16.gmra.mxu0 %v2782
        %v3063 = vpop.f32.mrf.mxu0
        %v3064 = vadd.f32 %v2957, %v3063
        %v3065 = vpop.f32.mrf.mxu0
        %v3066 = vadd.f32 %v2959, %v3065
        %3067 = vmatmul.bf16.gmra.mxu0 %v2783
        %v3068 = vpop.f32.mrf.mxu0
        %v3069 = vadd.f32 %v2962, %v3068
        %v3070 = vpop.f32.mrf.mxu0
        %v3071 = vadd.f32 %v2964, %v3070
        %3072 = vmatmul.bf16.gmra.mxu0 %v2784
        %v3073 = vpop.f32.mrf.mxu0
        %v3074 = vadd.f32 %v2967, %v3073
        %v3075 = vpop.f32.mrf.mxu0
        %v3076 = vadd.f32 %v2969, %v3075
        %3077 = vmatmul.bf16.gmra.mxu0 %v2785
        %v3078 = vpop.f32.mrf.mxu0
        %v3079 = vadd.f32 %v2972, %v3078
        %v3080 = vpop.f32.mrf.mxu0
        %v3081 = vadd.f32 %v2974, %v3080
        %3082 = vdwg.mxu0
        %v3083 = vrot.slane %v2756, 2
        %v3084 = vrot.slane %v2757, 2
        %v3085 = vrot.slane %v2758, 2
        %v3086 = vrot.slane %v2759, 2
        %v3087 = vrot.slane %v2760, 2
        %v3088 = vrot.slane %v2761, 2
        %v3089 = vrot.slane %v2762, 2
        %v3090 = vrot.slane %v2763, 2
        %v3091 = vrot.slane %v2764, 2
        %v3092 = vrot.slane %v2765, 2
        %v3093 = vrot.slane %v2766, 2
        %v3094 = vrot.slane %v2767, 2
        %v3095 = vrot.slane %v2768, 2
        %v3096 = vrot.slane %v2769, 2
        %v3097 = vrot.slane %v2770, 2
        %v3098 = vrot.slane %v2771, 2
        %v3099 = vrot.slane %v2772, 2
        %v3100 = vrot.slane %v2773, 2
        %v3101 = vrot.slane %v2774, 2
        %v3102 = vrot.slane %v2775, 2
        %v3103 = vsel %vm1046, %v3101, %v3102
        %v3104 = vsel %vm1046, %v3100, %v3101
        %v3105 = vsel %vm1046, %v3099, %v3100
        %v3106 = vsel %vm1046, %v3098, %v3099
        %v3107 = vsel %vm1046, %v3097, %v3098
        %v3108 = vsel %vm1046, %v3096, %v3097
        %v3109 = vsel %vm1046, %v3095, %v3096
        %v3110 = vsel %vm1046, %v3094, %v3095
        %v3111 = vsel %vm1046, %v3093, %v3094
        %v3112 = vsel %vm1046, %v3092, %v3093
        %v3113 = vsel %vm1046, %v3091, %v3092
        %v3114 = vsel %vm1046, %v3090, %v3091
        %v3115 = vsel %vm1046, %v3089, %v3090
        %v3116 = vsel %vm1046, %v3088, %v3089
        %v3117 = vsel %vm1046, %v3087, %v3088
        %v3118 = vsel %vm1046, %v3086, %v3087
        %v3119 = vsel %vm1046, %v3085, %v3086
        %v3120 = vsel %vm1046, %v3084, %v3085
        %v3121 = vsel %vm1046, %v3083, %v3084
        %v3122 = vsel %vm1046, %v3102, %v3083
        %v3123 = vpack.c.bf16 %v3120, %v3121
        %v3124 = vpack.c.bf16 %v3118, %v3119
        %v3125 = vpack.c.bf16 %v3116, %v3117
        %v3126 = vpack.c.bf16 %v3114, %v3115
        %v3127 = vpack.c.bf16 %v3112, %v3113
        %v3128 = vpack.c.bf16 %v3110, %v3111
        %v3129 = vpack.c.bf16 %v3108, %v3109
        %v3130 = vpack.c.bf16 %v3106, %v3107
        %v3131 = vpack.c.bf16 %v3104, %v3105
        %v3132 = vpack.c.bf16 %v3122, %v3103
        %s3133 = scalar_lea.vmem [#allocation10], 128
        %v3134 = vld [vmem:[%s3133] sm:$0xf]
        %v3135 = vld [vmem:[%s3133 + $0x4] sm:$0xf]
        %v3136 = vld [vmem:[%s3133 + $0x8] sm:$0xf]
        %v3137 = vld [vmem:[%s3133 + $0xc] sm:$0xf]
        %v3138 = vld [vmem:[%s3133 + $0x10] sm:$0xf]
        %v3139 = vld [vmem:[%s3133 + $0x14] sm:$0xf]
        %v3140 = vld [vmem:[%s3133 + $0x18] sm:$0xf]
        %v3141 = vld [vmem:[%s3133 + $0x1c] sm:$0xf]
        %v3142 = vld [vmem:[%s3133 + $0x20] sm:$0xf]
        %v3143 = vld [vmem:[%s3133 + $0x24] sm:$0xf]
        %v3144 = vld [vmem:[%s3133 + $0x28] sm:$0xf]
        %v3145 = vld [vmem:[%s3133 + $0x2c] sm:$0xf]
        %v3146 = vld [vmem:[%s3133 + $0x30] sm:$0xf]
        %v3147 = vld [vmem:[%s3133 + $0x34] sm:$0xf]
        %v3148 = vld [vmem:[%s3133 + $0x38] sm:$0xf]
        %v3149 = vld [vmem:[%s3133 + $0x3c] sm:$0xf]
        %v3166 = vunpack.c.l.b16 %v3134
        %v3167 = vunpack.c.l.b16 %v3135
        %v3168 = vunpack.c.l.b16 %v3136
        %v3169 = vunpack.c.l.b16 %v3137
        %v3170 = vunpack.c.l.b16 %v3138
        %v3171 = vunpack.c.l.b16 %v3139
        %v3172 = vunpack.c.l.b16 %v3140
        %v3173 = vunpack.c.l.b16 %v3141
        %v3174 = vunpack.c.l.b16 %v3142
        %v3175 = vunpack.c.l.b16 %v3143
        %v3176 = vunpack.c.l.b16 %v3144
        %v3177 = vunpack.c.l.b16 %v3145
        %v3178 = vunpack.c.l.b16 %v3146
        %v3179 = vunpack.c.l.b16 %v3147
        %v3180 = vunpack.c.l.b16 %v3148
        %v3181 = vunpack.c.l.b16 %v3149
        %v3182 = vpack.c.b16 %v3167, %v3166
        %v3183 = vpack.c.b16 %v3169, %v3168
        %v3184 = vpack.c.b16 %v3171, %v3170
        %v3185 = vpack.c.b16 %v3173, %v3172
        %v3186 = vpack.c.b16 %v3175, %v3174
        %v3187 = vpack.c.b16 %v3177, %v3176
        %v3188 = vpack.c.b16 %v3179, %v3178
        %v3189 = vpack.c.b16 %v3181, %v3180
        %3198 = vmatpush.bf16.msra.mxu0 %v3189
        %3199 = vmatpush.bf16.msra.mxu0 %v3188
        %3200 = vmatpush.bf16.msra.mxu0 %v3187
        %3201 = vmatpush.bf16.msra.mxu0 %v3186
        %3202 = vmatpush.bf16.msra.mxu0 %v3185
        %3203 = vmatpush.bf16.msra.mxu0 %v3184
        %3204 = vmatpush.bf16.msra.mxu0 %v3183
        %3205 = vmatpush.bf16.msra.mxu0 %v3182
        %3206 = vmatmul.bf16.gmra.mxu0 %v3123
        %v3207 = vpop.f32.mrf.mxu0
        %v3208 = vadd.f32 0.0, %v3207
        %v3209 = vpop.f32.mrf.mxu0
        %v3210 = vadd.f32 0.0, %v3209
        %3211 = vmatmul.bf16.gmra.mxu0 %v3124
        %v3212 = vpop.f32.mrf.mxu0
        %v3213 = vadd.f32 0.0, %v3212
        %v3214 = vpop.f32.mrf.mxu0
        %v3215 = vadd.f32 0.0, %v3214
        %3216 = vmatmul.bf16.gmra.mxu0 %v3125
        %v3217 = vpop.f32.mrf.mxu0
        %v3218 = vadd.f32 0.0, %v3217
        %v3219 = vpop.f32.mrf.mxu0
        %v3220 = vadd.f32 0.0, %v3219
        %3221 = vmatmul.bf16.gmra.mxu0 %v3126
        %v3222 = vpop.f32.mrf.mxu0
        %v3223 = vadd.f32 0.0, %v3222
        %v3224 = vpop.f32.mrf.mxu0
        %v3225 = vadd.f32 0.0, %v3224
        %3226 = vmatmul.bf16.gmra.mxu0 %v3127
        %v3227 = vpop.f32.mrf.mxu0
        %v3228 = vadd.f32 0.0, %v3227
        %v3229 = vpop.f32.mrf.mxu0
        %v3230 = vadd.f32 0.0, %v3229
        %3231 = vmatmul.bf16.gmra.mxu0 %v3128
        %v3232 = vpop.f32.mrf.mxu0
        %v3233 = vadd.f32 0.0, %v3232
        %v3234 = vpop.f32.mrf.mxu0
        %v3235 = vadd.f32 0.0, %v3234
        %3236 = vmatmul.bf16.gmra.mxu0 %v3129
        %v3237 = vpop.f32.mrf.mxu0
        %v3238 = vadd.f32 0.0, %v3237
        %v3239 = vpop.f32.mrf.mxu0
        %v3240 = vadd.f32 0.0, %v3239
        %3241 = vmatmul.bf16.gmra.mxu0 %v3130
        %v3242 = vpop.f32.mrf.mxu0
        %v3243 = vadd.f32 0.0, %v3242
        %v3244 = vpop.f32.mrf.mxu0
        %v3245 = vadd.f32 0.0, %v3244
        %3246 = vmatmul.bf16.gmra.mxu0 %v3131
        %v3247 = vpop.f32.mrf.mxu0
        %v3248 = vadd.f32 0.0, %v3247
        %v3249 = vpop.f32.mrf.mxu0
        %v3250 = vadd.f32 0.0, %v3249
        %3251 = vmatmul.bf16.gmra.mxu0 %v3132
        %v3252 = vpop.f32.mrf.mxu0
        %v3253 = vadd.f32 0.0, %v3252
        %v3254 = vpop.f32.mrf.mxu0
        %v3255 = vadd.f32 0.0, %v3254
        %3256 = vdwg.mxu0
        %v3257 = vadd.f32 %v3034, %v3208
        %v3258 = vadd.f32 %v3036, %v3210
        %v3259 = vadd.f32 %v3039, %v3213
        %v3260 = vadd.f32 %v3041, %v3215
        %v3261 = vadd.f32 %v3044, %v3218
        %v3262 = vadd.f32 %v3046, %v3220
        %v3263 = vadd.f32 %v3049, %v3223
        %v3264 = vadd.f32 %v3051, %v3225
        %v3265 = vadd.f32 %v3054, %v3228
        %v3266 = vadd.f32 %v3056, %v3230
        %v3267 = vadd.f32 %v3059, %v3233
        %v3268 = vadd.f32 %v3061, %v3235
        %v3269 = vadd.f32 %v3064, %v3238
        %v3270 = vadd.f32 %v3066, %v3240
        %v3271 = vadd.f32 %v3069, %v3243
        %v3272 = vadd.f32 %v3071, %v3245
        %v3273 = vadd.f32 %v3074, %v3248
        %v3274 = vadd.f32 %v3076, %v3250
        %v3275 = vadd.f32 %v3079, %v3253
        %v3276 = vadd.f32 %v3081, %v3255
        %s3277 = scalar_lea.vmem [#allocation10], 192
        %v3278 = vld [vmem:[%s3277] sm:$0xf]
        %v3279 = vld [vmem:[%s3277 + $0x4] sm:$0xf]
        %v3280 = vld [vmem:[%s3277 + $0x8] sm:$0xf]
        %v3281 = vld [vmem:[%s3277 + $0xc] sm:$0xf]
        %v3282 = vld [vmem:[%s3277 + $0x10] sm:$0xf]
        %v3283 = vld [vmem:[%s3277 + $0x14] sm:$0xf]
        %v3284 = vld [vmem:[%s3277 + $0x18] sm:$0xf]
        %v3285 = vld [vmem:[%s3277 + $0x1c] sm:$0xf]
        %v3286 = vld [vmem:[%s3277 + $0x20] sm:$0xf]
        %v3287 = vld [vmem:[%s3277 + $0x24] sm:$0xf]
        %v3288 = vld [vmem:[%s3277 + $0x28] sm:$0xf]
        %v3289 = vld [vmem:[%s3277 + $0x2c] sm:$0xf]
        %v3290 = vld [vmem:[%s3277 + $0x30] sm:$0xf]
        %v3291 = vld [vmem:[%s3277 + $0x34] sm:$0xf]
        %v3292 = vld [vmem:[%s3277 + $0x38] sm:$0xf]
        %v3293 = vld [vmem:[%s3277 + $0x3c] sm:$0xf]
        %v3310 = vunpack.c.l.b16 %v3278
        %v3311 = vunpack.c.l.b16 %v3279
        %v3312 = vunpack.c.l.b16 %v3280
        %v3313 = vunpack.c.l.b16 %v3281
        %v3314 = vunpack.c.l.b16 %v3282
        %v3315 = vunpack.c.l.b16 %v3283
        %v3316 = vunpack.c.l.b16 %v3284
        %v3317 = vunpack.c.l.b16 %v3285
        %v3318 = vunpack.c.l.b16 %v3286
        %v3319 = vunpack.c.l.b16 %v3287
        %v3320 = vunpack.c.l.b16 %v3288
        %v3321 = vunpack.c.l.b16 %v3289
        %v3322 = vunpack.c.l.b16 %v3290
        %v3323 = vunpack.c.l.b16 %v3291
        %v3324 = vunpack.c.l.b16 %v3292
        %v3325 = vunpack.c.l.b16 %v3293
        %v3326 = vpack.c.b16 %v3311, %v3310
        %v3327 = vpack.c.b16 %v3313, %v3312
        %v3328 = vpack.c.b16 %v3315, %v3314
        %v3329 = vpack.c.b16 %v3317, %v3316
        %v3330 = vpack.c.b16 %v3319, %v3318
        %v3331 = vpack.c.b16 %v3321, %v3320
        %v3332 = vpack.c.b16 %v3323, %v3322
        %v3333 = vpack.c.b16 %v3325, %v3324
        %3342 = vmatpush.bf16.msra.mxu0 %v3333
        %3343 = vmatpush.bf16.msra.mxu0 %v3332
        %3344 = vmatpush.bf16.msra.mxu0 %v3331
        %3345 = vmatpush.bf16.msra.mxu0 %v3330
        %3346 = vmatpush.bf16.msra.mxu0 %v3329
        %3347 = vmatpush.bf16.msra.mxu0 %v3328
        %3348 = vmatpush.bf16.msra.mxu0 %v3327
        %3349 = vmatpush.bf16.msra.mxu0 %v3326
        %3350 = vmatmul.bf16.gmra.mxu0 %v2777
        %v3351 = vpop.f32.mrf.mxu0
        %v3352 = vadd.f32 0.0, %v3351
        %v3353 = vpop.f32.mrf.mxu0
        %v3354 = vadd.f32 0.0, %v3353
        %3355 = vmatmul.bf16.gmra.mxu0 %v2778
        %v3356 = vpop.f32.mrf.mxu0
        %v3357 = vadd.f32 0.0, %v3356
        %v3358 = vpop.f32.mrf.mxu0
        %v3359 = vadd.f32 0.0, %v3358
        %3360 = vmatmul.bf16.gmra.mxu0 %v2779
        %v3361 = vpop.f32.mrf.mxu0
        %v3362 = vadd.f32 0.0, %v3361
        %v3363 = vpop.f32.mrf.mxu0
        %v3364 = vadd.f32 0.0, %v3363
        %3365 = vmatmul.bf16.gmra.mxu0 %v2780
        %v3366 = vpop.f32.mrf.mxu0
        %v3367 = vadd.f32 0.0, %v3366
        %v3368 = vpop.f32.mrf.mxu0
        %v3369 = vadd.f32 0.0, %v3368
        %3370 = vmatmul.bf16.gmra.mxu0 %v2781
        %v3371 = vpop.f32.mrf.mxu0
        %v3372 = vadd.f32 0.0, %v3371
        %v3373 = vpop.f32.mrf.mxu0
        %v3374 = vadd.f32 0.0, %v3373
        %3375 = vmatmul.bf16.gmra.mxu0 %v2782
        %v3376 = vpop.f32.mrf.mxu0
        %v3377 = vadd.f32 0.0, %v3376
        %v3378 = vpop.f32.mrf.mxu0
        %v3379 = vadd.f32 0.0, %v3378
        %3380 = vmatmul.bf16.gmra.mxu0 %v2783
        %v3381 = vpop.f32.mrf.mxu0
        %v3382 = vadd.f32 0.0, %v3381
        %v3383 = vpop.f32.mrf.mxu0
        %v3384 = vadd.f32 0.0, %v3383
        %3385 = vmatmul.bf16.gmra.mxu0 %v2784
        %v3386 = vpop.f32.mrf.mxu0
        %v3387 = vadd.f32 0.0, %v3386
        %v3388 = vpop.f32.mrf.mxu0
        %v3389 = vadd.f32 0.0, %v3388
        %3390 = vmatmul.bf16.gmra.mxu0 %v2785
        %v3391 = vpop.f32.mrf.mxu0
        %v3392 = vadd.f32 0.0, %v3391
        %v3393 = vpop.f32.mrf.mxu0
        %v3394 = vadd.f32 0.0, %v3393
        %3395 = vmatmul.bf16.gmra.mxu0 %v2776
        %v3396 = vpop.f32.mrf.mxu0
        %v3397 = vadd.f32 0.0, %v3396
        %v3398 = vpop.f32.mrf.mxu0
        %v3399 = vadd.f32 0.0, %v3398
        %3400 = vdwg.mxu0
        %v3401 = vadd.f32 %v3257, %v3352
        %v3402 = vadd.f32 %v3258, %v3354
        %v3403 = vadd.f32 %v3259, %v3357
        %v3404 = vadd.f32 %v3260, %v3359
        %v3405 = vadd.f32 %v3261, %v3362
        %v3406 = vadd.f32 %v3262, %v3364
        %v3407 = vadd.f32 %v3263, %v3367
        %v3408 = vadd.f32 %v3264, %v3369
        %v3409 = vadd.f32 %v3265, %v3372
        %v3410 = vadd.f32 %v3266, %v3374
        %v3411 = vadd.f32 %v3267, %v3377
        %v3412 = vadd.f32 %v3268, %v3379
        %v3413 = vadd.f32 %v3269, %v3382
        %v3414 = vadd.f32 %v3270, %v3384
        %v3415 = vadd.f32 %v3271, %v3387
        %v3416 = vadd.f32 %v3272, %v3389
        %v3417 = vadd.f32 %v3273, %v3392
        %v3418 = vadd.f32 %v3274, %v3394
        %v3419 = vadd.f32 %v3275, %v3397
        %v3420 = vadd.f32 %v3276, %v3399
        %s3421 = scalar_lea.vmem [#allocation10], 256
        %v3422 = vld [vmem:[%s3421] sm:$0xf]
        %v3423 = vld [vmem:[%s3421 + $0x4] sm:$0xf]
        %v3424 = vld [vmem:[%s3421 + $0x8] sm:$0xf]
        %v3425 = vld [vmem:[%s3421 + $0xc] sm:$0xf]
        %v3426 = vld [vmem:[%s3421 + $0x10] sm:$0xf]
        %v3427 = vld [vmem:[%s3421 + $0x14] sm:$0xf]
        %v3428 = vld [vmem:[%s3421 + $0x18] sm:$0xf]
        %v3429 = vld [vmem:[%s3421 + $0x1c] sm:$0xf]
        %v3430 = vld [vmem:[%s3421 + $0x20] sm:$0xf]
        %v3431 = vld [vmem:[%s3421 + $0x24] sm:$0xf]
        %v3432 = vld [vmem:[%s3421 + $0x28] sm:$0xf]
        %v3433 = vld [vmem:[%s3421 + $0x2c] sm:$0xf]
        %v3434 = vld [vmem:[%s3421 + $0x30] sm:$0xf]
        %v3435 = vld [vmem:[%s3421 + $0x34] sm:$0xf]
        %v3436 = vld [vmem:[%s3421 + $0x38] sm:$0xf]
        %v3437 = vld [vmem:[%s3421 + $0x3c] sm:$0xf]
        %v3454 = vunpack.c.l.b16 %v3422
        %v3455 = vunpack.c.l.b16 %v3423
        %v3456 = vunpack.c.l.b16 %v3424
        %v3457 = vunpack.c.l.b16 %v3425
        %v3458 = vunpack.c.l.b16 %v3426
        %v3459 = vunpack.c.l.b16 %v3427
        %v3460 = vunpack.c.l.b16 %v3428
        %v3461 = vunpack.c.l.b16 %v3429
        %v3462 = vunpack.c.l.b16 %v3430
        %v3463 = vunpack.c.l.b16 %v3431
        %v3464 = vunpack.c.l.b16 %v3432
        %v3465 = vunpack.c.l.b16 %v3433
        %v3466 = vunpack.c.l.b16 %v3434
        %v3467 = vunpack.c.l.b16 %v3435
        %v3468 = vunpack.c.l.b16 %v3436
        %v3469 = vunpack.c.l.b16 %v3437
        %v3470 = vpack.c.b16 %v3455, %v3454
        %v3471 = vpack.c.b16 %v3457, %v3456
        %v3472 = vpack.c.b16 %v3459, %v3458
        %v3473 = vpack.c.b16 %v3461, %v3460
        %v3474 = vpack.c.b16 %v3463, %v3462
        %v3475 = vpack.c.b16 %v3465, %v3464
        %v3476 = vpack.c.b16 %v3467, %v3466
        %v3477 = vpack.c.b16 %v3469, %v3468
        %3486 = vmatpush.bf16.msra.mxu0 %v3477
        %3487 = vmatpush.bf16.msra.mxu0 %v3476
        %3488 = vmatpush.bf16.msra.mxu0 %v3475
        %3489 = vmatpush.bf16.msra.mxu0 %v3474
        %3490 = vmatpush.bf16.msra.mxu0 %v3473
        %3491 = vmatpush.bf16.msra.mxu0 %v3472
        %3492 = vmatpush.bf16.msra.mxu0 %v3471
        %3493 = vmatpush.bf16.msra.mxu0 %v3470
        %3494 = vmatmul.bf16.gmra.mxu0 %v2843
        %v3495 = vpop.f32.mrf.mxu0
        %v3496 = vadd.f32 0.0, %v3495
        %v3497 = vpop.f32.mrf.mxu0
        %v3498 = vadd.f32 0.0, %v3497
        %3499 = vmatmul.bf16.gmra.mxu0 %v2844
        %v3500 = vpop.f32.mrf.mxu0
        %v3501 = vadd.f32 0.0, %v3500
        %v3502 = vpop.f32.mrf.mxu0
        %v3503 = vadd.f32 0.0, %v3502
        %3504 = vmatmul.bf16.gmra.mxu0 %v2845
        %v3505 = vpop.f32.mrf.mxu0
        %v3506 = vadd.f32 0.0, %v3505
        %v3507 = vpop.f32.mrf.mxu0
        %v3508 = vadd.f32 0.0, %v3507
        %3509 = vmatmul.bf16.gmra.mxu0 %v2846
        %v3510 = vpop.f32.mrf.mxu0
        %v3511 = vadd.f32 0.0, %v3510
        %v3512 = vpop.f32.mrf.mxu0
        %v3513 = vadd.f32 0.0, %v3512
        %3514 = vmatmul.bf16.gmra.mxu0 %v2847
        %v3515 = vpop.f32.mrf.mxu0
        %v3516 = vadd.f32 0.0, %v3515
        %v3517 = vpop.f32.mrf.mxu0
        %v3518 = vadd.f32 0.0, %v3517
        %3519 = vmatmul.bf16.gmra.mxu0 %v2848
        %v3520 = vpop.f32.mrf.mxu0
        %v3521 = vadd.f32 0.0, %v3520
        %v3522 = vpop.f32.mrf.mxu0
        %v3523 = vadd.f32 0.0, %v3522
        %3524 = vmatmul.bf16.gmra.mxu0 %v2849
        %v3525 = vpop.f32.mrf.mxu0
        %v3526 = vadd.f32 0.0, %v3525
        %v3527 = vpop.f32.mrf.mxu0
        %v3528 = vadd.f32 0.0, %v3527
        %3529 = vmatmul.bf16.gmra.mxu0 %v2850
        %v3530 = vpop.f32.mrf.mxu0
        %v3531 = vadd.f32 0.0, %v3530
        %v3532 = vpop.f32.mrf.mxu0
        %v3533 = vadd.f32 0.0, %v3532
        %3534 = vmatmul.bf16.gmra.mxu0 %v2851
        %v3535 = vpop.f32.mrf.mxu0
        %v3536 = vadd.f32 0.0, %v3535
        %v3537 = vpop.f32.mrf.mxu0
        %v3538 = vadd.f32 0.0, %v3537
        %3539 = vmatmul.bf16.gmra.mxu0 %v2842
        %v3540 = vpop.f32.mrf.mxu0
        %v3541 = vadd.f32 0.0, %v3540
        %v3542 = vpop.f32.mrf.mxu0
        %v3543 = vadd.f32 0.0, %v3542
        %3544 = vdwg.mxu0
        %v3545 = vadd.f32 %v3401, %v3496
        %v3546 = vadd.f32 %v3402, %v3498
        %v3547 = vadd.f32 %v3403, %v3501
        %v3548 = vadd.f32 %v3404, %v3503
        %v3549 = vadd.f32 %v3405, %v3506
        %v3550 = vadd.f32 %v3406, %v3508
        %v3551 = vadd.f32 %v3407, %v3511
        %v3552 = vadd.f32 %v3408, %v3513
        %v3553 = vadd.f32 %v3409, %v3516
        %v3554 = vadd.f32 %v3410, %v3518
        %v3555 = vadd.f32 %v3411, %v3521
        %v3556 = vadd.f32 %v3412, %v3523
        %v3557 = vadd.f32 %v3413, %v3526
        %v3558 = vadd.f32 %v3414, %v3528
        %v3559 = vadd.f32 %v3415, %v3531
        %v3560 = vadd.f32 %v3416, %v3533
        %v3561 = vadd.f32 %v3417, %v3536
        %v3562 = vadd.f32 %v3418, %v3538
        %v3563 = vadd.f32 %v3419, %v3541
        %v3564 = vadd.f32 %v3420, %v3543
        %s3565 = scalar_lea.vmem [#allocation10], 320
        %v3566 = vld [vmem:[%s3565] sm:$0xf]
        %v3567 = vld [vmem:[%s3565 + $0x4] sm:$0xf]
        %v3568 = vld [vmem:[%s3565 + $0x8] sm:$0xf]
        %v3569 = vld [vmem:[%s3565 + $0xc] sm:$0xf]
        %v3570 = vld [vmem:[%s3565 + $0x10] sm:$0xf]
        %v3571 = vld [vmem:[%s3565 + $0x14] sm:$0xf]
        %v3572 = vld [vmem:[%s3565 + $0x18] sm:$0xf]
        %v3573 = vld [vmem:[%s3565 + $0x1c] sm:$0xf]
        %v3574 = vld [vmem:[%s3565 + $0x20] sm:$0xf]
        %v3575 = vld [vmem:[%s3565 + $0x24] sm:$0xf]
        %v3576 = vld [vmem:[%s3565 + $0x28] sm:$0xf]
        %v3577 = vld [vmem:[%s3565 + $0x2c] sm:$0xf]
        %v3578 = vld [vmem:[%s3565 + $0x30] sm:$0xf]
        %v3579 = vld [vmem:[%s3565 + $0x34] sm:$0xf]
        %v3580 = vld [vmem:[%s3565 + $0x38] sm:$0xf]
        %v3581 = vld [vmem:[%s3565 + $0x3c] sm:$0xf]
        %v3598 = vunpack.c.l.b16 %v3566
        %v3599 = vunpack.c.l.b16 %v3567
        %v3600 = vunpack.c.l.b16 %v3568
        %v3601 = vunpack.c.l.b16 %v3569
        %v3602 = vunpack.c.l.b16 %v3570
        %v3603 = vunpack.c.l.b16 %v3571
        %v3604 = vunpack.c.l.b16 %v3572
        %v3605 = vunpack.c.l.b16 %v3573
        %v3606 = vunpack.c.l.b16 %v3574
        %v3607 = vunpack.c.l.b16 %v3575
        %v3608 = vunpack.c.l.b16 %v3576
        %v3609 = vunpack.c.l.b16 %v3577
        %v3610 = vunpack.c.l.b16 %v3578
        %v3611 = vunpack.c.l.b16 %v3579
        %v3612 = vunpack.c.l.b16 %v3580
        %v3613 = vunpack.c.l.b16 %v3581
        %v3614 = vpack.c.b16 %v3599, %v3598
        %v3615 = vpack.c.b16 %v3601, %v3600
        %v3616 = vpack.c.b16 %v3603, %v3602
        %v3617 = vpack.c.b16 %v3605, %v3604
        %v3618 = vpack.c.b16 %v3607, %v3606
        %v3619 = vpack.c.b16 %v3609, %v3608
        %v3620 = vpack.c.b16 %v3611, %v3610
        %v3621 = vpack.c.b16 %v3613, %v3612
        %3630 = vmatpush.bf16.msra.mxu0 %v3621
        %3631 = vmatpush.bf16.msra.mxu0 %v3620
        %3632 = vmatpush.bf16.msra.mxu0 %v3619
        %3633 = vmatpush.bf16.msra.mxu0 %v3618
        %3634 = vmatpush.bf16.msra.mxu0 %v3617
        %3635 = vmatpush.bf16.msra.mxu0 %v3616
        %3636 = vmatpush.bf16.msra.mxu0 %v3615
        %3637 = vmatpush.bf16.msra.mxu0 %v3614
        %3638 = vmatmul.bf16.gmra.mxu0 %v3124
        %v3639 = vpop.f32.mrf.mxu0
        %v3640 = vadd.f32 0.0, %v3639
        %v3641 = vpop.f32.mrf.mxu0
        %v3642 = vadd.f32 0.0, %v3641
        %3643 = vmatmul.bf16.gmra.mxu0 %v3125
        %v3644 = vpop.f32.mrf.mxu0
        %v3645 = vadd.f32 0.0, %v3644
        %v3646 = vpop.f32.mrf.mxu0
        %v3647 = vadd.f32 0.0, %v3646
        %3648 = vmatmul.bf16.gmra.mxu0 %v3126
        %v3649 = vpop.f32.mrf.mxu0
        %v3650 = vadd.f32 0.0, %v3649
        %v3651 = vpop.f32.mrf.mxu0
        %v3652 = vadd.f32 0.0, %v3651
        %3653 = vmatmul.bf16.gmra.mxu0 %v3127
        %v3654 = vpop.f32.mrf.mxu0
        %v3655 = vadd.f32 0.0, %v3654
        %v3656 = vpop.f32.mrf.mxu0
        %v3657 = vadd.f32 0.0, %v3656
        %3658 = vmatmul.bf16.gmra.mxu0 %v3128
        %v3659 = vpop.f32.mrf.mxu0
        %v3660 = vadd.f32 0.0, %v3659
        %v3661 = vpop.f32.mrf.mxu0
        %v3662 = vadd.f32 0.0, %v3661
        %3663 = vmatmul.bf16.gmra.mxu0 %v3129
        %v3664 = vpop.f32.mrf.mxu0
        %v3665 = vadd.f32 0.0, %v3664
        %v3666 = vpop.f32.mrf.mxu0
        %v3667 = vadd.f32 0.0, %v3666
        %3668 = vmatmul.bf16.gmra.mxu0 %v3130
        %v3669 = vpop.f32.mrf.mxu0
        %v3670 = vadd.f32 0.0, %v3669
        %v3671 = vpop.f32.mrf.mxu0
        %v3672 = vadd.f32 0.0, %v3671
        %3673 = vmatmul.bf16.gmra.mxu0 %v3131
        %v3674 = vpop.f32.mrf.mxu0
        %v3675 = vadd.f32 0.0, %v3674
        %v3676 = vpop.f32.mrf.mxu0
        %v3677 = vadd.f32 0.0, %v3676
        %3678 = vmatmul.bf16.gmra.mxu0 %v3132
        %v3679 = vpop.f32.mrf.mxu0
        %v3680 = vadd.f32 0.0, %v3679
        %v3681 = vpop.f32.mrf.mxu0
        %v3682 = vadd.f32 0.0, %v3681
        %3683 = vmatmul.bf16.gmra.mxu0 %v3123
        %v3684 = vpop.f32.mrf.mxu0
        %v3685 = vadd.f32 0.0, %v3684
        %v3686 = vpop.f32.mrf.mxu0
        %v3687 = vadd.f32 0.0, %v3686
        %3688 = vdwg.mxu0
        %v3689 = vadd.f32 %v3545, %v3640
        %v3690 = vadd.f32 %v3546, %v3642
        %v3691 = vadd.f32 %v3547, %v3645
        %v3692 = vadd.f32 %v3548, %v3647
        %v3693 = vadd.f32 %v3549, %v3650
        %v3694 = vadd.f32 %v3550, %v3652
        %v3695 = vadd.f32 %v3551, %v3655
        %v3696 = vadd.f32 %v3552, %v3657
        %v3697 = vadd.f32 %v3553, %v3660
        %v3698 = vadd.f32 %v3554, %v3662
        %v3699 = vadd.f32 %v3555, %v3665
        %v3700 = vadd.f32 %v3556, %v3667
        %v3701 = vadd.f32 %v3557, %v3670
        %v3702 = vadd.f32 %v3558, %v3672
        %v3703 = vadd.f32 %v3559, %v3675
        %v3704 = vadd.f32 %v3560, %v3677
        %v3705 = vadd.f32 %v3561, %v3680
        %v3706 = vadd.f32 %v3562, %v3682
        %v3707 = vadd.f32 %v3563, %v3685
        %v3708 = vadd.f32 %v3564, %v3687
        %s3709 = scalar_lea.vmem [#allocation10], 384
        %v3710 = vld [vmem:[%s3709] sm:$0xf]
        %v3711 = vld [vmem:[%s3709 + $0x4] sm:$0xf]
        %v3712 = vld [vmem:[%s3709 + $0x8] sm:$0xf]
        %v3713 = vld [vmem:[%s3709 + $0xc] sm:$0xf]
        %v3714 = vld [vmem:[%s3709 + $0x10] sm:$0xf]
        %v3715 = vld [vmem:[%s3709 + $0x14] sm:$0xf]
        %v3716 = vld [vmem:[%s3709 + $0x18] sm:$0xf]
        %v3717 = vld [vmem:[%s3709 + $0x1c] sm:$0xf]
        %v3718 = vld [vmem:[%s3709 + $0x20] sm:$0xf]
        %v3719 = vld [vmem:[%s3709 + $0x24] sm:$0xf]
        %v3720 = vld [vmem:[%s3709 + $0x28] sm:$0xf]
        %v3721 = vld [vmem:[%s3709 + $0x2c] sm:$0xf]
        %v3722 = vld [vmem:[%s3709 + $0x30] sm:$0xf]
        %v3723 = vld [vmem:[%s3709 + $0x34] sm:$0xf]
        %v3724 = vld [vmem:[%s3709 + $0x38] sm:$0xf]
        %v3725 = vld [vmem:[%s3709 + $0x3c] sm:$0xf]
        %v3742 = vunpack.c.l.b16 %v3710
        %v3743 = vunpack.c.l.b16 %v3711
        %v3744 = vunpack.c.l.b16 %v3712
        %v3745 = vunpack.c.l.b16 %v3713
        %v3746 = vunpack.c.l.b16 %v3714
        %v3747 = vunpack.c.l.b16 %v3715
        %v3748 = vunpack.c.l.b16 %v3716
        %v3749 = vunpack.c.l.b16 %v3717
        %v3750 = vunpack.c.l.b16 %v3718
        %v3751 = vunpack.c.l.b16 %v3719
        %v3752 = vunpack.c.l.b16 %v3720
        %v3753 = vunpack.c.l.b16 %v3721
        %v3754 = vunpack.c.l.b16 %v3722
        %v3755 = vunpack.c.l.b16 %v3723
        %v3756 = vunpack.c.l.b16 %v3724
        %v3757 = vunpack.c.l.b16 %v3725
        %v3758 = vpack.c.b16 %v3743, %v3742
        %v3759 = vpack.c.b16 %v3745, %v3744
        %v3760 = vpack.c.b16 %v3747, %v3746
        %v3761 = vpack.c.b16 %v3749, %v3748
        %v3762 = vpack.c.b16 %v3751, %v3750
        %v3763 = vpack.c.b16 %v3753, %v3752
        %v3764 = vpack.c.b16 %v3755, %v3754
        %v3765 = vpack.c.b16 %v3757, %v3756
        %3774 = vmatpush.bf16.msra.mxu0 %v3765
        %3775 = vmatpush.bf16.msra.mxu0 %v3764
        %3776 = vmatpush.bf16.msra.mxu0 %v3763
        %3777 = vmatpush.bf16.msra.mxu0 %v3762
        %3778 = vmatpush.bf16.msra.mxu0 %v3761
        %3779 = vmatpush.bf16.msra.mxu0 %v3760
        %3780 = vmatpush.bf16.msra.mxu0 %v3759
        %3781 = vmatpush.bf16.msra.mxu0 %v3758
        %3782 = vmatmul.bf16.gmra.mxu0 %v2778
        %v3783 = vpop.f32.mrf.mxu0
        %v3784 = vadd.f32 0.0, %v3783
        %v3785 = vpop.f32.mrf.mxu0
        %v3786 = vadd.f32 0.0, %v3785
        %3787 = vmatmul.bf16.gmra.mxu0 %v2779
        %v3788 = vpop.f32.mrf.mxu0
        %v3789 = vadd.f32 0.0, %v3788
        %v3790 = vpop.f32.mrf.mxu0
        %v3791 = vadd.f32 0.0, %v3790
        %3792 = vmatmul.bf16.gmra.mxu0 %v2780
        %v3793 = vpop.f32.mrf.mxu0
        %v3794 = vadd.f32 0.0, %v3793
        %v3795 = vpop.f32.mrf.mxu0
        %v3796 = vadd.f32 0.0, %v3795
        %3797 = vmatmul.bf16.gmra.mxu0 %v2781
        %v3798 = vpop.f32.mrf.mxu0
        %v3799 = vadd.f32 0.0, %v3798
        %v3800 = vpop.f32.mrf.mxu0
        %v3801 = vadd.f32 0.0, %v3800
        %3802 = vmatmul.bf16.gmra.mxu0 %v2782
        %v3803 = vpop.f32.mrf.mxu0
        %v3804 = vadd.f32 0.0, %v3803
        %v3805 = vpop.f32.mrf.mxu0
        %v3806 = vadd.f32 0.0, %v3805
        %3807 = vmatmul.bf16.gmra.mxu0 %v2783
        %v3808 = vpop.f32.mrf.mxu0
        %v3809 = vadd.f32 0.0, %v3808
        %v3810 = vpop.f32.mrf.mxu0
        %v3811 = vadd.f32 0.0, %v3810
        %3812 = vmatmul.bf16.gmra.mxu0 %v2784
        %v3813 = vpop.f32.mrf.mxu0
        %v3814 = vadd.f32 0.0, %v3813
        %v3815 = vpop.f32.mrf.mxu0
        %v3816 = vadd.f32 0.0, %v3815
        %3817 = vmatmul.bf16.gmra.mxu0 %v2785
        %v3818 = vpop.f32.mrf.mxu0
        %v3819 = vadd.f32 0.0, %v3818
        %v3820 = vpop.f32.mrf.mxu0
        %v3821 = vadd.f32 0.0, %v3820
        %3822 = vmatmul.bf16.gmra.mxu0 %v2776
        %v3823 = vpop.f32.mrf.mxu0
        %v3824 = vadd.f32 0.0, %v3823
        %v3825 = vpop.f32.mrf.mxu0
        %v3826 = vadd.f32 0.0, %v3825
        %3827 = vmatmul.bf16.gmra.mxu0 %v2777
        %v3828 = vpop.f32.mrf.mxu0
        %v3829 = vadd.f32 0.0, %v3828
        %v3830 = vpop.f32.mrf.mxu0
        %v3831 = vadd.f32 0.0, %v3830
        %3832 = vdwg.mxu0
        %v3833 = vadd.f32 %v3689, %v3784
        %v3834 = vadd.f32 %v3690, %v3786
        %v3835 = vadd.f32 %v3691, %v3789
        %v3836 = vadd.f32 %v3692, %v3791
        %v3837 = vadd.f32 %v3693, %v3794
        %v3838 = vadd.f32 %v3694, %v3796
        %v3839 = vadd.f32 %v3695, %v3799
        %v3840 = vadd.f32 %v3696, %v3801
        %v3841 = vadd.f32 %v3697, %v3804
        %v3842 = vadd.f32 %v3698, %v3806
        %v3843 = vadd.f32 %v3699, %v3809
        %v3844 = vadd.f32 %v3700, %v3811
        %v3845 = vadd.f32 %v3701, %v3814
        %v3846 = vadd.f32 %v3702, %v3816
        %v3847 = vadd.f32 %v3703, %v3819
        %v3848 = vadd.f32 %v3704, %v3821
        %v3849 = vadd.f32 %v3705, %v3824
        %v3850 = vadd.f32 %v3706, %v3826
        %v3851 = vadd.f32 %v3707, %v3829
        %v3852 = vadd.f32 %v3708, %v3831
        %s3853 = scalar_lea.vmem [#allocation10], 448
        %v3854 = vld [vmem:[%s3853] sm:$0xf]
        %v3855 = vld [vmem:[%s3853 + $0x4] sm:$0xf]
        %v3856 = vld [vmem:[%s3853 + $0x8] sm:$0xf]
        %v3857 = vld [vmem:[%s3853 + $0xc] sm:$0xf]
        %v3858 = vld [vmem:[%s3853 + $0x10] sm:$0xf]
        %v3859 = vld [vmem:[%s3853 + $0x14] sm:$0xf]
        %v3860 = vld [vmem:[%s3853 + $0x18] sm:$0xf]
        %v3861 = vld [vmem:[%s3853 + $0x1c] sm:$0xf]
        %v3862 = vld [vmem:[%s3853 + $0x20] sm:$0xf]
        %v3863 = vld [vmem:[%s3853 + $0x24] sm:$0xf]
        %v3864 = vld [vmem:[%s3853 + $0x28] sm:$0xf]
        %v3865 = vld [vmem:[%s3853 + $0x2c] sm:$0xf]
        %v3866 = vld [vmem:[%s3853 + $0x30] sm:$0xf]
        %v3867 = vld [vmem:[%s3853 + $0x34] sm:$0xf]
        %v3868 = vld [vmem:[%s3853 + $0x38] sm:$0xf]
        %v3869 = vld [vmem:[%s3853 + $0x3c] sm:$0xf]
        %v3886 = vunpack.c.l.b16 %v3854
        %v3887 = vunpack.c.l.b16 %v3855
        %v3888 = vunpack.c.l.b16 %v3856
        %v3889 = vunpack.c.l.b16 %v3857
        %v3890 = vunpack.c.l.b16 %v3858
        %v3891 = vunpack.c.l.b16 %v3859
        %v3892 = vunpack.c.l.b16 %v3860
        %v3893 = vunpack.c.l.b16 %v3861
        %v3894 = vunpack.c.l.b16 %v3862
        %v3895 = vunpack.c.l.b16 %v3863
        %v3896 = vunpack.c.l.b16 %v3864
        %v3897 = vunpack.c.l.b16 %v3865
        %v3898 = vunpack.c.l.b16 %v3866
        %v3899 = vunpack.c.l.b16 %v3867
        %v3900 = vunpack.c.l.b16 %v3868
        %v3901 = vunpack.c.l.b16 %v3869
        %v3902 = vpack.c.b16 %v3887, %v3886
        %v3903 = vpack.c.b16 %v3889, %v3888
        %v3904 = vpack.c.b16 %v3891, %v3890
        %v3905 = vpack.c.b16 %v3893, %v3892
        %v3906 = vpack.c.b16 %v3895, %v3894
        %v3907 = vpack.c.b16 %v3897, %v3896
        %v3908 = vpack.c.b16 %v3899, %v3898
        %v3909 = vpack.c.b16 %v3901, %v3900
        %3918 = vmatpush.bf16.msra.mxu0 %v3909
        %3919 = vmatpush.bf16.msra.mxu0 %v3908
        %3920 = vmatpush.bf16.msra.mxu0 %v3907
        %3921 = vmatpush.bf16.msra.mxu0 %v3906
        %3922 = vmatpush.bf16.msra.mxu0 %v3905
        %3923 = vmatpush.bf16.msra.mxu0 %v3904
        %3924 = vmatpush.bf16.msra.mxu0 %v3903
        %3925 = vmatpush.bf16.msra.mxu0 %v3902
        %3926 = vmatmul.bf16.gmra.mxu0 %v2844
        %v3927 = vpop.f32.mrf.mxu0
        %v3928 = vadd.f32 0.0, %v3927
        %v3929 = vpop.f32.mrf.mxu0
        %v3930 = vadd.f32 0.0, %v3929
        %3931 = vmatmul.bf16.gmra.mxu0 %v2845
        %v3932 = vpop.f32.mrf.mxu0
        %v3933 = vadd.f32 0.0, %v3932
        %v3934 = vpop.f32.mrf.mxu0
        %v3935 = vadd.f32 0.0, %v3934
        %3936 = vmatmul.bf16.gmra.mxu0 %v2846
        %v3937 = vpop.f32.mrf.mxu0
        %v3938 = vadd.f32 0.0, %v3937
        %v3939 = vpop.f32.mrf.mxu0
        %v3940 = vadd.f32 0.0, %v3939
        %3941 = vmatmul.bf16.gmra.mxu0 %v2847
        %v3942 = vpop.f32.mrf.mxu0
        %v3943 = vadd.f32 0.0, %v3942
        %v3944 = vpop.f32.mrf.mxu0
        %v3945 = vadd.f32 0.0, %v3944
        %3946 = vmatmul.bf16.gmra.mxu0 %v2848
        %v3947 = vpop.f32.mrf.mxu0
        %v3948 = vadd.f32 0.0, %v3947
        %v3949 = vpop.f32.mrf.mxu0
        %v3950 = vadd.f32 0.0, %v3949
        %3951 = vmatmul.bf16.gmra.mxu0 %v2849
        %v3952 = vpop.f32.mrf.mxu0
        %v3953 = vadd.f32 0.0, %v3952
        %v3954 = vpop.f32.mrf.mxu0
        %v3955 = vadd.f32 0.0, %v3954
        %3956 = vmatmul.bf16.gmra.mxu0 %v2850
        %v3957 = vpop.f32.mrf.mxu0
        %v3958 = vadd.f32 0.0, %v3957
        %v3959 = vpop.f32.mrf.mxu0
        %v3960 = vadd.f32 0.0, %v3959
        %3961 = vmatmul.bf16.gmra.mxu0 %v2851
        %v3962 = vpop.f32.mrf.mxu0
        %v3963 = vadd.f32 0.0, %v3962
        %v3964 = vpop.f32.mrf.mxu0
        %v3965 = vadd.f32 0.0, %v3964
        %3966 = vmatmul.bf16.gmra.mxu0 %v2842
        %v3967 = vpop.f32.mrf.mxu0
        %v3968 = vadd.f32 0.0, %v3967
        %v3969 = vpop.f32.mrf.mxu0
        %v3970 = vadd.f32 0.0, %v3969
        %3971 = vmatmul.bf16.gmra.mxu0 %v2843
        %v3972 = vpop.f32.mrf.mxu0
        %v3973 = vadd.f32 0.0, %v3972
        %v3974 = vpop.f32.mrf.mxu0
        %v3975 = vadd.f32 0.0, %v3974
        %3976 = vdwg.mxu0
        %v3977 = vadd.f32 %v3833, %v3928
        %v3978 = vadd.f32 %v3834, %v3930
        %v3979 = vadd.f32 %v3835, %v3933
        %v3980 = vadd.f32 %v3836, %v3935
        %v3981 = vadd.f32 %v3837, %v3938
        %v3982 = vadd.f32 %v3838, %v3940
        %v3983 = vadd.f32 %v3839, %v3943
        %v3984 = vadd.f32 %v3840, %v3945
        %v3985 = vadd.f32 %v3841, %v3948
        %v3986 = vadd.f32 %v3842, %v3950
        %v3987 = vadd.f32 %v3843, %v3953
        %v3988 = vadd.f32 %v3844, %v3955
        %v3989 = vadd.f32 %v3845, %v3958
        %v3990 = vadd.f32 %v3846, %v3960
        %v3991 = vadd.f32 %v3847, %v3963
        %v3992 = vadd.f32 %v3848, %v3965
        %v3993 = vadd.f32 %v3849, %v3968
        %v3994 = vadd.f32 %v3850, %v3970
        %v3995 = vadd.f32 %v3851, %v3973
        %v3996 = vadd.f32 %v3852, %v3975
        %s3997 = scalar_lea.vmem [#allocation10], 512
        %v3998 = vld [vmem:[%s3997] sm:$0xf]
        %v3999 = vld [vmem:[%s3997 + $0x4] sm:$0xf]
        %v4000 = vld [vmem:[%s3997 + $0x8] sm:$0xf]
        %v4001 = vld [vmem:[%s3997 + $0xc] sm:$0xf]
        %v4002 = vld [vmem:[%s3997 + $0x10] sm:$0xf]
        %v4003 = vld [vmem:[%s3997 + $0x14] sm:$0xf]
        %v4004 = vld [vmem:[%s3997 + $0x18] sm:$0xf]
        %v4005 = vld [vmem:[%s3997 + $0x1c] sm:$0xf]
        %v4006 = vld [vmem:[%s3997 + $0x20] sm:$0xf]
        %v4007 = vld [vmem:[%s3997 + $0x24] sm:$0xf]
        %v4008 = vld [vmem:[%s3997 + $0x28] sm:$0xf]
        %v4009 = vld [vmem:[%s3997 + $0x2c] sm:$0xf]
        %v4010 = vld [vmem:[%s3997 + $0x30] sm:$0xf]
        %v4011 = vld [vmem:[%s3997 + $0x34] sm:$0xf]
        %v4012 = vld [vmem:[%s3997 + $0x38] sm:$0xf]
        %v4013 = vld [vmem:[%s3997 + $0x3c] sm:$0xf]
        %v4030 = vunpack.c.l.b16 %v3998
        %v4031 = vunpack.c.l.b16 %v3999
        %v4032 = vunpack.c.l.b16 %v4000
        %v4033 = vunpack.c.l.b16 %v4001
        %v4034 = vunpack.c.l.b16 %v4002
        %v4035 = vunpack.c.l.b16 %v4003
        %v4036 = vunpack.c.l.b16 %v4004
        %v4037 = vunpack.c.l.b16 %v4005
        %v4038 = vunpack.c.l.b16 %v4006
        %v4039 = vunpack.c.l.b16 %v4007
        %v4040 = vunpack.c.l.b16 %v4008
        %v4041 = vunpack.c.l.b16 %v4009
        %v4042 = vunpack.c.l.b16 %v4010
        %v4043 = vunpack.c.l.b16 %v4011
        %v4044 = vunpack.c.l.b16 %v4012
        %v4045 = vunpack.c.l.b16 %v4013
        %v4046 = vpack.c.b16 %v4031, %v4030
        %v4047 = vpack.c.b16 %v4033, %v4032
        %v4048 = vpack.c.b16 %v4035, %v4034
        %v4049 = vpack.c.b16 %v4037, %v4036
        %v4050 = vpack.c.b16 %v4039, %v4038
        %v4051 = vpack.c.b16 %v4041, %v4040
        %v4052 = vpack.c.b16 %v4043, %v4042
        %v4053 = vpack.c.b16 %v4045, %v4044
        %4062 = vmatpush.bf16.msra.mxu0 %v4053
        %4063 = vmatpush.bf16.msra.mxu0 %v4052
        %4064 = vmatpush.bf16.msra.mxu0 %v4051
        %4065 = vmatpush.bf16.msra.mxu0 %v4050
        %4066 = vmatpush.bf16.msra.mxu0 %v4049
        %4067 = vmatpush.bf16.msra.mxu0 %v4048
        %4068 = vmatpush.bf16.msra.mxu0 %v4047
        %4069 = vmatpush.bf16.msra.mxu0 %v4046
        %4070 = vmatmul.bf16.gmra.mxu0 %v3125
        %v4071 = vpop.f32.mrf.mxu0
        %v4072 = vadd.f32 0.0, %v4071
        %v4073 = vpop.f32.mrf.mxu0
        %v4074 = vadd.f32 0.0, %v4073
        %4075 = vmatmul.bf16.gmra.mxu0 %v3126
        %v4076 = vpop.f32.mrf.mxu0
        %v4077 = vadd.f32 0.0, %v4076
        %v4078 = vpop.f32.mrf.mxu0
        %v4079 = vadd.f32 0.0, %v4078
        %4080 = vmatmul.bf16.gmra.mxu0 %v3127
        %v4081 = vpop.f32.mrf.mxu0
        %v4082 = vadd.f32 0.0, %v4081
        %v4083 = vpop.f32.mrf.mxu0
        %v4084 = vadd.f32 0.0, %v4083
        %4085 = vmatmul.bf16.gmra.mxu0 %v3128
        %v4086 = vpop.f32.mrf.mxu0
        %v4087 = vadd.f32 0.0, %v4086
        %v4088 = vpop.f32.mrf.mxu0
        %v4089 = vadd.f32 0.0, %v4088
        %4090 = vmatmul.bf16.gmra.mxu0 %v3129
        %v4091 = vpop.f32.mrf.mxu0
        %v4092 = vadd.f32 0.0, %v4091
        %v4093 = vpop.f32.mrf.mxu0
        %v4094 = vadd.f32 0.0, %v4093
        %4095 = vmatmul.bf16.gmra.mxu0 %v3130
        %v4096 = vpop.f32.mrf.mxu0
        %v4097 = vadd.f32 0.0, %v4096
        %v4098 = vpop.f32.mrf.mxu0
        %v4099 = vadd.f32 0.0, %v4098
        %4100 = vmatmul.bf16.gmra.mxu0 %v3131
        %v4101 = vpop.f32.mrf.mxu0
        %v4102 = vadd.f32 0.0, %v4101
        %v4103 = vpop.f32.mrf.mxu0
        %v4104 = vadd.f32 0.0, %v4103
        %4105 = vmatmul.bf16.gmra.mxu0 %v3132
        %v4106 = vpop.f32.mrf.mxu0
        %v4107 = vadd.f32 0.0, %v4106
        %v4108 = vpop.f32.mrf.mxu0
        %v4109 = vadd.f32 0.0, %v4108
        %4110 = vmatmul.bf16.gmra.mxu0 %v3123
        %v4111 = vpop.f32.mrf.mxu0
        %v4112 = vadd.f32 0.0, %v4111
        %v4113 = vpop.f32.mrf.mxu0
        %v4114 = vadd.f32 0.0, %v4113
        %4115 = vmatmul.bf16.gmra.mxu0 %v3124
        %v4116 = vpop.f32.mrf.mxu0
        %v4117 = vadd.f32 0.0, %v4116
        %v4118 = vpop.f32.mrf.mxu0
        %v4119 = vadd.f32 0.0, %v4118
        %4120 = vdwg.mxu0
        %v4121 = vadd.f32 %v3977, %v4072
        %v4122 = vadd.f32 %v3978, %v4074
        %v4123 = vadd.f32 %v3979, %v4077
        %v4124 = vadd.f32 %v3980, %v4079
        %v4125 = vadd.f32 %v3981, %v4082
        %v4126 = vadd.f32 %v3982, %v4084
        %v4127 = vadd.f32 %v3983, %v4087
        %v4128 = vadd.f32 %v3984, %v4089
        %v4129 = vadd.f32 %v3985, %v4092
        %v4130 = vadd.f32 %v3986, %v4094
        %v4131 = vadd.f32 %v3987, %v4097
        %v4132 = vadd.f32 %v3988, %v4099
        %v4133 = vadd.f32 %v3989, %v4102
        %v4134 = vadd.f32 %v3990, %v4104
        %v4135 = vadd.f32 %v3991, %v4107
        %v4136 = vadd.f32 %v3992, %v4109
        %v4137 = vadd.f32 %v3993, %v4112
        %v4138 = vadd.f32 %v3994, %v4114
        %v4139 = vadd.f32 %v3995, %v4117
        %v4140 = vadd.f32 %v3996, %v4119
        %v4141 = vld [vmem:[%s7] sm:$0x1]
        %v4142 = vmul.f32 %v4121, %v698
        %v4143 = vmul.f32 %v4122, %v699
        %v4144 = vmul.f32 %v4123, %v700
        %v4145 = vmul.f32 %v4124, %v701
        %v4146 = vmul.f32 %v4125, %v702
        %v4147 = vmul.f32 %v4126, %v703
        %v4148 = vmul.f32 %v4127, %v704
        %v4149 = vmul.f32 %v4128, %v705
        %v4150 = vmul.f32 %v4129, %v706
        %v4151 = vmul.f32 %v4130, %v707
        %v4152 = vmul.f32 %v4131, %v708
        %v4153 = vmul.f32 %v4132, %v709
        %v4154 = vmul.f32 %v4133, %v710
        %v4155 = vmul.f32 %v4134, %v711
        %v4156 = vmul.f32 %v4135, %v712
        %v4157 = vmul.f32 %v4136, %v713
        %v4158 = vmul.f32 %v4137, %v714
        %v4159 = vmul.f32 %v4138, %v715
        %v4160 = vmul.f32 %v4139, %v716
        %v4161 = vmul.f32 %v4140, %v717
        %v4162 = vadd.f32 %v4142, %v4143
        %v4163 = vadd.f32 %v4162, %v4144
        %v4164 = vadd.f32 %v4163, %v4145
        %v4165 = vadd.f32 %v4164, %v4146
        %v4166 = vadd.f32 %v4165, %v4147
        %v4167 = vadd.f32 %v4166, %v4148
        %v4168 = vadd.f32 %v4167, %v4149
        %v4169 = vadd.f32 %v4168, %v4150
        %v4170 = vadd.f32 %v4169, %v4151
        %v4171 = vadd.f32 %v4170, %v4152
        %v4172 = vadd.f32 %v4171, %v4153
        %v4173 = vadd.f32 %v4172, %v4154
        %v4174 = vadd.f32 %v4173, %v4155
        %v4175 = vadd.f32 %v4174, %v4156
        %v4176 = vadd.f32 %v4175, %v4157
        %v4177 = vadd.f32 %v4176, %v4158
        %v4178 = vadd.f32 %v4177, %v4159
        %v4179 = vadd.f32 %v4178, %v4160
        %v4180 = vadd.f32 %v4179, %v4161
        %v4181 = vrot.slane %v4180, 4
        %v4182 = vadd.f32 %v4180, %v4181
        %v4183 = vrot.slane %v4182, 2
        %v4184 = vadd.f32 %v4182, %v4183
        %v4185 = vrot.slane %v4184, 1
        %v4186 = vadd.f32 %v4184, %v4185
        %v4187 = vmul.f32 %v4186, 0.015625
        %v4188 = vsub.f32 %v4121, %v4187
        %v4189 = vsub.f32 %v4122, %v4187
        %v4190 = vsub.f32 %v4123, %v4187
        %v4191 = vsub.f32 %v4124, %v4187
        %v4192 = vsub.f32 %v4125, %v4187
        %v4193 = vsub.f32 %v4126, %v4187
        %v4194 = vsub.f32 %v4127, %v4187
        %v4195 = vsub.f32 %v4128, %v4187
        %v4196 = vsub.f32 %v4129, %v4187
        %v4197 = vsub.f32 %v4130, %v4187
        %v4198 = vsub.f32 %v4131, %v4187
        %v4199 = vsub.f32 %v4132, %v4187
        %v4200 = vsub.f32 %v4133, %v4187
        %v4201 = vsub.f32 %v4134, %v4187
        %v4202 = vsub.f32 %v4135, %v4187
        %v4203 = vsub.f32 %v4136, %v4187
        %v4204 = vsub.f32 %v4137, %v4187
        %v4205 = vsub.f32 %v4138, %v4187
        %v4206 = vsub.f32 %v4139, %v4187
        %v4207 = vsub.f32 %v4140, %v4187
        %v4208 = vmul.f32 %v4188, %v698
        %v4209 = vmul.f32 %v4189, %v699
        %v4210 = vmul.f32 %v4190, %v700
        %v4211 = vmul.f32 %v4191, %v701
        %v4212 = vmul.f32 %v4192, %v702
        %v4213 = vmul.f32 %v4193, %v703
        %v4214 = vmul.f32 %v4194, %v704
        %v4215 = vmul.f32 %v4195, %v705
        %v4216 = vmul.f32 %v4196, %v706
        %v4217 = vmul.f32 %v4197, %v707
        %v4218 = vmul.f32 %v4198, %v708
        %v4219 = vmul.f32 %v4199, %v709
        %v4220 = vmul.f32 %v4200, %v710
        %v4221 = vmul.f32 %v4201, %v711
        %v4222 = vmul.f32 %v4202, %v712
        %v4223 = vmul.f32 %v4203, %v713
        %v4224 = vmul.f32 %v4204, %v714
        %v4225 = vmul.f32 %v4205, %v715
        %v4226 = vmul.f32 %v4206, %v716
        %v4227 = vmul.f32 %v4207, %v717
        %v4228 = vmul.f32 %v4208, %v4208
        %v4229 = vmul.f32 %v4209, %v4209
        %v4230 = vmul.f32 %v4210, %v4210
        %v4231 = vmul.f32 %v4211, %v4211
        %v4232 = vmul.f32 %v4212, %v4212
        %v4233 = vmul.f32 %v4213, %v4213
        %v4234 = vmul.f32 %v4214, %v4214
        %v4235 = vmul.f32 %v4215, %v4215
        %v4236 = vmul.f32 %v4216, %v4216
        %v4237 = vmul.f32 %v4217, %v4217
        %v4238 = vmul.f32 %v4218, %v4218
        %v4239 = vmul.f32 %v4219, %v4219
        %v4240 = vmul.f32 %v4220, %v4220
        %v4241 = vmul.f32 %v4221, %v4221
        %v4242 = vmul.f32 %v4222, %v4222
        %v4243 = vmul.f32 %v4223, %v4223
        %v4244 = vmul.f32 %v4224, %v4224
        %v4245 = vmul.f32 %v4225, %v4225
        %v4246 = vmul.f32 %v4226, %v4226
        %v4247 = vmul.f32 %v4227, %v4227
        %v4248 = vadd.f32 %v4228, %v4229
        %v4249 = vadd.f32 %v4248, %v4230
        %v4250 = vadd.f32 %v4249, %v4231
        %v4251 = vadd.f32 %v4250, %v4232
        %v4252 = vadd.f32 %v4251, %v4233
        %v4253 = vadd.f32 %v4252, %v4234
        %v4254 = vadd.f32 %v4253, %v4235
        %v4255 = vadd.f32 %v4254, %v4236
        %v4256 = vadd.f32 %v4255, %v4237
        %v4257 = vadd.f32 %v4256, %v4238
        %v4258 = vadd.f32 %v4257, %v4239
        %v4259 = vadd.f32 %v4258, %v4240
        %v4260 = vadd.f32 %v4259, %v4241
        %v4261 = vadd.f32 %v4260, %v4242
        %v4262 = vadd.f32 %v4261, %v4243
        %v4263 = vadd.f32 %v4262, %v4244
        %v4264 = vadd.f32 %v4263, %v4245
        %v4265 = vadd.f32 %v4264, %v4246
        %v4266 = vadd.f32 %v4265, %v4247
        %v4267 = vrot.slane %v4266, 4
        %v4268 = vadd.f32 %v4266, %v4267
        %v4269 = vrot.slane %v4268, 2
        %v4270 = vadd.f32 %v4268, %v4269
        %v4271 = vrot.slane %v4270, 1
        %v4272 = vadd.f32 %v4270, %v4271
        %v4273 = vadd.f32 %v4187, %v4141
        %v4274 = vmul.f32 %v4272, 0.015873017
        %v4275 = vsel %vm2219, %v4273, 0.0
        %4276 = vadd.xlane.f32.xlu0 %v4275
        %v4277 = vpop.xlane.xlu0 %4276
        %v4278 = vmul.f32 %v4277, 0.0078125
        %v4279 = vsub.f32 %v4273, %v4278
        %4280 = vadd.xlane.f32.xlu0 %v4272
        %v4281 = vpop.xlane.xlu0 %4280
        %v4282 = vmul.f32 %v4279, %v4279
        %v4283 = vsel %vm2219, %v4282, 0.0
        %4284 = vadd.xlane.f32.xlu0 %v4283
        %v4285 = vpop.xlane.xlu0 %4284
        %v4286 = vmul.f32 %v4285, 64.0
        %v4287 = vadd.f32 %v4281, %v4286
        %v4288 = vmul.f32 %v4287, 0.00012208521
        %v4289 = vadd.f32 %v4274, 1e-05
        %v4290 = vrsqrt.pop %v4289
        %v4291 = vmul.f32 %v4290, %v4289
        %v4292 = vmul.f32 %v4291, %v4290
        %v4293 = vmul.f32 0.5, %v4292
        %v4294 = vsub.f32 1.5, %v4293
        %v4295 = vmul.f32 %v4290, %v4294
        %vm4296 = vweird.f32 %v4289
        %vm4297 = vweird.f32 %v4290
        %vm4298 = vmor %vm4296, %vm4297
        %v4299 = vsel %vm4298, %v4290, %v4295
        %v4300 = vadd.f32 %v4288, 1e-05
        %v4301 = vrsqrt.pop %v4300
        %v4302 = vmul.f32 %v4301, %v4300
        %v4303 = vmul.f32 %v4302, %v4301
        %v4304 = vmul.f32 0.5, %v4303
        %v4305 = vsub.f32 1.5, %v4304
        %v4306 = vmul.f32 %v4301, %v4305
        %vm4307 = vweird.f32 %v4300
        %vm4308 = vweird.f32 %v4301
        %vm4309 = vmor %vm4307, %vm4308
        %v4310 = vsel %vm4309, %v4301, %v4306
        %v4311 = vmul.f32 %v448, %v4299
        %v4312 = vmul.f32 %v449, %v4310
        %v4313 = vadd.f32 %v4311, %v4312
        %v4314 = vmul.f32 %v446, %v4313
        %v4315 = vsub.f32 %v4141, %v4278
        %v4316 = vmul.f32 %v449, %v4315
        %v4317 = vmul.f32 %v4316, %v4310
        %v4318 = vmul.f32 %v448, %v4187
        %v4319 = vmul.f32 %v4318, %v4299
        %v4320 = vsub.f32 %v4317, %v4319
        %v4321 = vmul.f32 %v446, %v4320
        %v4322 = vadd.f32 %v447, %v4321
        %v4324 = vperm.slane %v4314, 0
        %v4326 = vmul.f32 %v4121, %v4324
        %v4327 = vmul.f32 %v4122, %v4324
        %v4328 = vmul.f32 %v4123, %v4324
        %v4329 = vmul.f32 %v4124, %v4324
        %v4330 = vmul.f32 %v4125, %v4324
        %v4331 = vmul.f32 %v4126, %v4324
        %v4332 = vmul.f32 %v4127, %v4324
        %v4333 = vmul.f32 %v4128, %v4324
        %v4334 = vmul.f32 %v4129, %v4324
        %v4335 = vmul.f32 %v4130, %v4324
        %v4336 = vmul.f32 %v4131, %v4324
        %v4337 = vmul.f32 %v4132, %v4324
        %v4338 = vmul.f32 %v4133, %v4324
        %v4339 = vmul.f32 %v4134, %v4324
        %v4340 = vmul.f32 %v4135, %v4324
        %v4341 = vmul.f32 %v4136, %v4324
        %v4342 = vmul.f32 %v4137, %v4324
        %v4343 = vmul.f32 %v4138, %v4324
        %v4344 = vmul.f32 %v4139, %v4324
        %v4345 = vmul.f32 %v4140, %v4324
        %v4347 = vperm.slane %v4322, 0
        %v4349 = vadd.f32 %v4326, %v4347
        %v4350 = vadd.f32 %v4327, %v4347
        %v4351 = vadd.f32 %v4328, %v4347
        %v4352 = vadd.f32 %v4329, %v4347
        %v4353 = vadd.f32 %v4330, %v4347
        %v4354 = vadd.f32 %v4331, %v4347
        %v4355 = vadd.f32 %v4332, %v4347
        %v4356 = vadd.f32 %v4333, %v4347
        %v4357 = vadd.f32 %v4334, %v4347
        %v4358 = vadd.f32 %v4335, %v4347
        %v4359 = vadd.f32 %v4336, %v4347
        %v4360 = vadd.f32 %v4337, %v4347
        %v4361 = vadd.f32 %v4338, %v4347
        %v4362 = vadd.f32 %v4339, %v4347
        %v4363 = vadd.f32 %v4340, %v4347
        %v4364 = vadd.f32 %v4341, %v4347
        %v4365 = vadd.f32 %v4342, %v4347
        %v4366 = vadd.f32 %v4343, %v4347
        %v4367 = vadd.f32 %v4344, %v4347
        %v4368 = vadd.f32 %v4345, %v4347
        %v4369 = vadd.f32 %v4349, %v781
        %v4370 = vadd.f32 %v4350, %v780
        %v4371 = vadd.f32 %v4351, %v779
        %v4372 = vadd.f32 %v4352, %v778
        %v4373 = vadd.f32 %v4353, %v777
        %v4374 = vadd.f32 %v4354, %v776
        %v4375 = vadd.f32 %v4355, %v775
        %v4376 = vadd.f32 %v4356, %v774
        %v4377 = vadd.f32 %v4357, %v773
        %v4378 = vadd.f32 %v4358, %v772
        %v4379 = vadd.f32 %v4359, %v771
        %v4380 = vadd.f32 %v4360, %v770
        %v4381 = vadd.f32 %v4361, %v769
        %v4382 = vadd.f32 %v4362, %v768
        %v4383 = vadd.f32 %v4363, %v767
        %v4384 = vadd.f32 %v4364, %v766
        %v4385 = vadd.f32 %v4365, %v765
        %v4386 = vadd.f32 %v4366, %v784
        %v4387 = vadd.f32 %v4367, %v783
        %v4388 = vadd.f32 %v4368, %v782
        %4389 = vst [vmem:[%s425] sm:$0xff] %v4369
        %4390 = vst [vmem:[%s425 + $0x8] sm:$0xff] %v4370
        %4391 = vst [vmem:[%s425 + $0x10] sm:$0xff] %v4371
        %4392 = vst [vmem:[%s425 + $0x18] sm:$0xff] %v4372
        %4393 = vst [vmem:[%s425 + $0x20] sm:$0xff] %v4373
        %4394 = vst [vmem:[%s425 + $0x28] sm:$0xff] %v4374
        %4395 = vst [vmem:[%s425 + $0x30] sm:$0xff] %v4375
        %4396 = vst [vmem:[%s425 + $0x38] sm:$0xff] %v4376
        %4397 = vst [vmem:[%s425 + $0x40] sm:$0xff] %v4377
        %4398 = vst [vmem:[%s425 + $0x48] sm:$0xff] %v4378
        %4399 = vst [vmem:[%s425 + $0x50] sm:$0xff] %v4379
        %4400 = vst [vmem:[%s425 + $0x58] sm:$0xff] %v4380
        %4401 = vst [vmem:[%s425 + $0x60] sm:$0xff] %v4381
        %4402 = vst [vmem:[%s425 + $0x68] sm:$0xff] %v4382
        %4403 = vst [vmem:[%s425 + $0x70] sm:$0xff] %v4383
        %4404 = vst [vmem:[%s425 + $0x78] sm:$0xff] %v4384
        %4405 = vst [vmem:[%s425 + $0x80] sm:$0xff] %v4385
        %4406 = vst [vmem:[%s425 + $0x88] sm:$0xff] %v4386
        %4407 = vst [vmem:[%s425 + $0x90] sm:$0xff] %v4387
        %4408 = vst [vmem:[%s425 + $0x98] sm:$0xff] %v4388
        %s4409 = sand.u32 %s220, 1
        %s4410 = scalar_lea.sflag [#allocation4], %s4409
        %s4411 = sand.u32 %s220, 1
        %s4412 = smul.addr %s4411, 160
        %s4413 = scalar_lea.vmem [#allocation11], %s4412
        // Predicated region
        $region73: #{tpu_custom_call.1} parent=51 // pred_check
          %p4414 = pneg %p230
        $region74: #{tpu_custom_call.1} parent=51 // pred_check_branch
          %4416 = sbr.rel (%p4414) target = $region76
        $region75: #{tpu_custom_call.1} parent=51 // pred_region
          %4418 = vsyncadd %s4410, 0
          %s4419 = smul.addr %s29, 20
          %s4420 = smul.addr %s4419, 8
          %s4421 = scalar_lea.hbm %s8, %s4420
          %s4422 = sshll.u32 %s4413, 4
          %s4423 = int_to_ptr.vmem [resolvable:$true] %s4422
          %s4424 = sshll.u32 %s4421, 4
          %s4425 = int_to_ptr.hbm [resolvable:$true] %s4424
          %4430 = dma.vmem_to_hbm [thread:$0]  %s4423, 2560, %s4425, %s4410, 128, 128, 8
        $region76: #{tpu_custom_call.1} parent=51 // pred_fallthru
          _
      $region52: #{tpu_custom_call.1} parent=5 // pred_fallthru
        _
      %p4431 = scmp.le.s32.totalorder 2, %s24
      // Predicated region
      $region77: #{tpu_custom_call.1} parent=5 // pred_check
        %p4432 = pneg %p4431
      $region78: #{tpu_custom_call.1} parent=5 // pred_check_branch
        %4434 = sbr.rel (%p4432) target = $region80
      $region79: #{tpu_custom_call.1} parent=5 // pred_region
        %s4435 = ssub.s32 %s24, 2
        // Predicated region
        $region81: #{tpu_custom_call.1} parent=79 // pred_check
          %p4436 = pneg %p236
        $region82: #{tpu_custom_call.1} parent=79 // pred_check_branch
          %4438 = sbr.rel (%p4436) target = $region84
        $region83: #{tpu_custom_call.1} parent=79 // pred_region
          %s4439 = sand.u32 %s221, 1
          %s4440 = scalar_lea.sflag [#allocation4], %s4439
          %s4441 = sand.u32 %s221, 1
          %s4442 = smul.addr %s4441, 160
          %s4443 = scalar_lea.vmem [#allocation11], %s4442
          %4445 = dma.done %s4440, 2560
        $region84: #{tpu_custom_call.1} parent=79 // pred_fallthru
          _
      $region80: #{tpu_custom_call.1} parent=5 // pred_fallthru
        _
    $region6: #{tpu_custom_call.1} parent=1 // loop_footer
      %s28 = sadd.s32 1, %s24
    $region7: #{tpu_custom_call.1} parent=1 // loop_footer_branch
      %23 = sbr.rel target = $region3
    $region8: #{tpu_custom_call.1} parent=1 // loop_exit
      _
    %4446 = vsyncpa [#allocation3], 1
    %s4447 = scalar_lea.sflag [#allocation3], 1
    %4448 = vsyncpa %s4447, 1
    %4449 = vsyncpa [#allocation6], 1
    %s4450 = scalar_lea.sflag [#allocation6], 1
    %4451 = vsyncpa %s4450, 1
    %4452 = vsyncpa [#allocation9], 1
    %4453 = vsyncpa [#allocation4], 1
    %s4454 = scalar_lea.sflag [#allocation4], 1
    %4455 = vsyncpa %s4454, 1

</llo_original>
